<compile_context>
chip_gen: v6e
topology: v6e:2x2x1
jax: 0.10.0
libtpu: 0.0.40
codegen_flags: <defaults>
</compile_context>

<pallas_src>
import functools

import jax
import jax.numpy as jnp
from jax.experimental import pallas as pl
from jax.experimental.pallas import tpu as pltpu

K1, C1 = 8, 32     # conv1: kernel 8, stride 2, out 32
K2, C2 = 16, 32    # conv2: kernel 16, out 32
K3, C3 = 8, 16     # conv3: kernel 8, out 16
POOL = 8
EPS = 1e-5
NEG_SLOPE = 0.2
LANE = 128


def _tensorcores_per_chip():
    """2 TensorCores on v7x, 1 on v5e/v6e; safe fallback is 1 (fully folded)."""
    try:
        kind = jax.devices()[0].device_kind.lower()
    except Exception:
        return 1
    return 2 if "7" in kind else 1


def _tap_shift(x, t):
    """out[..., i] = x[..., i + t]  (lane rotation; wrapped lanes land only in
    the padded tail of a region segment, which is never read for valid
    outputs — enforced by static asserts in the wrapper)."""
    if t == 0:
        return x
    return jnp.roll(x, -t, axis=-1)


def make_feature_kernel(d, bb, lseg):
    """InstanceNorm -> conv1+bn1 -> conv2+bn2 -> conv3+bn3 -> maxpool tree.

    One batch-block (bb batches) per grid step.  Activations are
    (C, d*bb*lseg) slabs: channels on sublanes; lanes ordered region-major /
    batch-minor / position, each (region, batch) pair owning a 128-aligned
    lseg-lane segment.
    """
    sseg = bb * lseg                     # lane stride between region segments
    inv_d = 1.0 / d

    def region_sum(v):
        # Sum across the d regions of the SAME batch for every (row, batch,
        # position).  Region-major / batch-minor lane order means a cyclic
        # roll by any multiple of sseg maps region m of batch q onto region
        # (m+n) mod d of the SAME batch q, so the full-axis wrap never mixes
        # batches.  log2(d) doubling tree (review item 5); result is the
        # per-(batch, position) total replicated into every region segment.
        tot = v
        if d & (d - 1) == 0:
            s = 1
            while s < d:
                tot = tot + pltpu.roll(tot, s * sseg, axis=1)
                s *= 2
        else:                                      # general d: plain roll chain
            for n in range(1, d):
                tot = tot + pltpu.roll(v, n * sseg, axis=1)
        return tot

    def feature_kernel(x_ref, w1_ref, a1_ref, c1_ref, w2_ref, a2_ref, c2_ref,
                       w3_ref, a3_ref, c3_ref, o_ref):
        x = x_ref[0]                               # (2, N) even/odd rows, f32

        # ---- InstanceNorm1d(time_series): normalize over the d regions per
        # time step (biased variance, eps=1e-5, no affine).  All math f32.
        mean = region_sum(x) * inv_d
        cx = x - mean                              # pad lanes stay exactly 0
        var = region_sum(cx * cx) * inv_d
        xn = (cx * jax.lax.rsqrt(var + EPS)).astype(jnp.bfloat16)

        # ---- conv1 (1->32, K=8, stride 2): ONE im2col matmul (bf16 operands,
        # f32 accumulate).  Shifting the (even, odd) row pair by s gives taps
        # (2s, 2s+1), so concatenated rows are tap-ordered 0..7 = w1 columns.
        p1 = jnp.concatenate([_tap_shift(xn, s) for s in range(K1 // 2)],
                             axis=0)                              # (8, N) bf16
        y1 = jnp.dot(w1_ref[...], p1, preferred_element_type=jnp.float32)
        y1 = y1 * a1_ref[...] + c1_ref[...]        # conv bias + BN1 folded, f32

        # ---- conv2 (32->32, K=16): im2col slab (K2*C1, N) bf16, one MXU call.
        y1b = y1.astype(jnp.bfloat16)
        p2 = jnp.concatenate([_tap_shift(y1b, t) for t in range(K2)], axis=0)
        y2 = jnp.dot(w2_ref[...], p2, preferred_element_type=jnp.float32)
        y2 = y2 * a2_ref[...] + c2_ref[...]

        # ---- conv3 (32->16, K=8): im2col slab (K3*C2, N) bf16, one MXU call.
        y2b = y2.astype(jnp.bfloat16)
        p3 = jnp.concatenate([_tap_shift(y2b, t) for t in range(K3)], axis=0)
        y3 = jnp.dot(w3_ref[...], p3, preferred_element_type=jnp.float32)
        y3 = y3 * a3_ref[...] + c3_ref[...]

        # ---- MaxPool1d(8): log2(POOL)-pass shifted-max tree on the lane axis.
        # Valid pooled windows only read lanes < L3 of a segment, so pad lanes
        # and cross-segment wrap never contaminate a valid window.
        m = y3
        s = 1
        while s < POOL:
            m = jnp.maximum(m, _tap_shift(m, s))
            s *= 2

        # One lane-dense, unmasked (C3, N) f32 store per grid step; the
        # wrapper picks the stride-POOL pooled columns (review item 8: the
        # write amplification is noise at these sizes).
        o_ref[0] = m

    return feature_kernel


def init_params(key, out_size, time_series):
    L1 = (time_series - K1) // 2 + 1
    L2 = L1 - K2 + 1
    L3 = L2 - K3 + 1
    L4 = L3 // POOL
    F = C3 * L4
    ks = jax.random.split(key, 22)
    nrm = lambda k, s, sc=0.1: sc * jax.random.normal(k, s, jnp.float32)
    pos = lambda k, s: 0.5 + jax.random.uniform(k, s, dtype=jnp.float32)
    return {
        'conv1_w': nrm(ks[0], (C1, 1, K1)),  'conv1_b': nrm(ks[1], (C1,)),
        'conv2_w': nrm(ks[2], (C2, C1, K2)), 'conv2_b': nrm(ks[3], (C2,)),
        'conv3_w': nrm(ks[4], (C3, C2, K3)), 'conv3_b': nrm(ks[5], (C3,)),
        'bn1_g': pos(ks[6], (C1,)),  'bn1_b': nrm(ks[7], (C1,)),
        'bn1_m': nrm(ks[8], (C1,)),  'bn1_v': pos(ks[9], (C1,)),
        'bn2_g': pos(ks[10], (C2,)), 'bn2_b': nrm(ks[11], (C2,)),
        'bn2_m': nrm(ks[12], (C2,)), 'bn2_v': pos(ks[13], (C2,)),
        'bn3_g': pos(ks[14], (C3,)), 'bn3_b': nrm(ks[15], (C3,)),
        'bn3_m': nrm(ks[16], (C3,)), 'bn3_v': pos(ks[17], (C3,)),
        'lin1_w': nrm(ks[18], (32, F)),        'lin1_b': nrm(ks[19], (32,)),
        'lin2_w': nrm(ks[20], (out_size, 32)), 'lin2_b': nrm(ks[21], (out_size,)),
    }


def conv_k_region_forward(x, p, out_size, batch_block=None):
    b, T, d = x.shape
    assert T % 2 == 0, "stride-2 even/odd split assumes an even time_series"
    Th = T // 2
    L1 = (T - K1) // 2 + 1
    L2 = L1 - K2 + 1
    L3 = L2 - K3 + 1
    L4 = L3 // POOL
    F = C3 * L4
    Lseg = LANE * ((Th + LANE - 1) // LANE)    # 128-lane-aligned region segment

    # Static layout-safety asserts (review correctness note): every lane roll's
    # wrap-around lands only in a segment's pad tail, never in a valid output,
    # and every valid tap/pool read stays inside its own segment.
    assert Th <= Lseg and L1 + K1 // 2 - 1 <= Lseg
    assert L2 + K2 - 1 <= Lseg and L3 + K3 - 1 <= Lseg
    assert L4 * POOL <= L3 and POOL & (POOL - 1) == 0

    # Batch fold: one grid step per TensorCore (v7x -> 2 "parallel" steps,
    # v5e/v6e -> 1 step with the whole batch folded into the lane axis).
    if batch_block is None:
        batch_block = max(1, -(-b // _tensorcores_per_chip()))
    Bb = batch_block
    G = -(-b // Bb)
    b_pad = G * Bb
    Sseg = Bb * Lseg
    n_lanes = d * Sseg

    # -- glue: x -> even/odd de-interleave, region-major / batch-minor lanes --
    # xeo[g, parity, (m*Bb + q)*Lseg + pos] = x[g*Bb + q, 2*pos + parity, m]
    xt = jnp.transpose(x, (0, 2, 1))                       # (b, d, T)
    xr = xt.reshape(b, d, Th, 2)                           # [..., pos, parity]
    xp = jnp.transpose(xr, (0, 3, 1, 2))                   # (b, 2, d, Th)
    xp = jnp.pad(xp, ((0, b_pad - b), (0, 0), (0, 0), (0, Lseg - Th)))
    xeo = jnp.transpose(xp.reshape(G, Bb, 2, d, Lseg),
                        (0, 2, 3, 1, 4)).reshape(G, 2, n_lanes)

    # -- glue: fold eval-mode BatchNorm + conv bias into per-channel affine ---
    def fold(conv_b, g, beta, mu, v):
        a = g * jax.lax.rsqrt(v + EPS)
        return a, beta + (conv_b - mu) * a

    a1, c1 = fold(p['conv1_b'], p['bn1_g'], p['bn1_b'], p['bn1_m'], p['bn1_v'])
    a2, c2 = fold(p['conv2_b'], p['bn2_g'], p['bn2_b'], p['bn2_m'], p['bn2_v'])
    a3, c3 = fold(p['conv3_b'], p['bn3_g'], p['bn3_b'], p['bn3_m'], p['bn3_v'])

    # -- glue: lane-dense bf16 weight slabs in im2col row order (tap-major) ---
    w1m = p['conv1_w'][:, 0, :].astype(jnp.bfloat16)                 # (C1, K1)
    w2m = jnp.transpose(p['conv2_w'], (0, 2, 1)).reshape(
        C2, K2 * C1).astype(jnp.bfloat16)                            # (32, 512)
    w3m = jnp.transpose(p['conv3_w'], (0, 2, 1)).reshape(
        C3, K3 * C2).astype(jnp.bfloat16)                            # (16, 256)

    full = lambda shape: pl.BlockSpec(shape, lambda i, _n=len(shape): (0,) * _n)
    m4 = pl.pallas_call(
        make_feature_kernel(d, Bb, Lseg),
        out_shape=jax.ShapeDtypeStruct((G, C3, n_lanes), jnp.float32),
        grid=(G,),
        in_specs=[
            pl.BlockSpec((1, 2, n_lanes), lambda i: (i, 0, 0)),
            full((C1, K1)), full((C1, 1)), full((C1, 1)),
            full((C2, K2 * C1)), full((C2, 1)), full((C2, 1)),
            full((C3, K3 * C2)), full((C3, 1)), full((C3, 1)),
        ],
        out_specs=pl.BlockSpec((1, C3, n_lanes), lambda i: (i, 0, 0)),
        compiler_params=pltpu.CompilerParams(
            dimension_semantics=("parallel",),     # grid steps split across TCs
            vmem_limit_bytes=32 * 1024 * 1024),    # im2col slabs + activations
    )(xeo, w1m, a1.reshape(C1, 1), c1.reshape(C1, 1),
      w2m, a2.reshape(C2, 1), c2.reshape(C2, 1),
      w3m, a3.reshape(C3, 1), c3.reshape(C3, 1))

    # -- glue: pick pooled columns (stride POOL) and flatten channel-major ----
    pooled = m4.reshape(G, C3, d, Bb, Lseg)[..., :L4 * POOL:POOL]  # (G,C3,d,Bb,L4)
    feats = jnp.transpose(pooled, (0, 3, 2, 1, 4)).reshape(b_pad, d, F)[:b]
    # feats flat index = c*L4 + q  ==  PyTorch x.view((b, d, -1)) ordering

    # data-dependent global zero-out of duplicates of feats[0, 0, -1] (kept in
    # f32 exactly as produced, so the float-equality gate semantics match).
    ref_val = feats[0, 0, -1]
    eq = feats == ref_val
    feats = jnp.where(jnp.sum(eq) > d, jnp.where(eq, 0.0, feats), feats)

    # Head kept in plain XLA per perf review: the zero-out gate above depends
    # on all-batch feats (cannot fuse into the per-block feature kernel), and a
    # second pallas_call for a (b*d, out_size) masked-store output is pure
    # launch overhead at this size.
    h = feats @ p['lin1_w'].T + p['lin1_b']
    h = jnp.where(h >= 0, h, NEG_SLOPE * h)
    return h @ p['lin2_w'].T + p['lin2_b']


def reference_forward(x, p, out_size):
    """Pure-JAX (XLA, all-f32) reference of the same forward, for verification."""
    b, T, d = x.shape
    m = jnp.mean(x, axis=2, keepdims=True)
    v = jnp.mean((x - m) ** 2, axis=2, keepdims=True)
    xn = (x - m) / jnp.sqrt(v + EPS)
    xt = jnp.transpose(xn, (0, 2, 1)).reshape(b * d, 1, T)

    def conv1d(z, w, bias, stride):
        y = jax.lax.conv_general_dilated(z, w, (stride,), 'VALID',
                                         dimension_numbers=('NCH', 'OIH', 'NCH'))
        return y + bias[None, :, None]

    def bn(z, g, beta, mu, var):
        return (g[None, :, None] * (z - mu[None, :, None])
                * jax.lax.rsqrt(var[None, :, None] + EPS) + beta[None, :, None])

    y = bn(conv1d(xt, p['conv1_w'], p['conv1_b'], 2),
           p['bn1_g'], p['bn1_b'], p['bn1_m'], p['bn1_v'])
    y = bn(conv1d(y, p['conv2_w'], p['conv2_b'], 1),
           p['bn2_g'], p['bn2_b'], p['bn2_m'], p['bn2_v'])
    y = bn(conv1d(y, p['conv3_w'], p['conv3_b'], 1),
           p['bn3_g'], p['bn3_b'], p['bn3_m'], p['bn3_v'])
    N, C, L = y.shape
    L4 = L // POOL
    y = jnp.max(y[:, :, :L4 * POOL].reshape(N, C, L4, POOL), axis=3)
    feats = y.reshape(b, d, C * L4)
    ref_val = feats[0, 0, -1]
    eq = feats == ref_val
    feats = jnp.where(jnp.sum(eq) > d, jnp.where(eq, 0.0, feats), feats)
    h = feats @ p['lin1_w'].T + p['lin1_b']
    h = jnp.where(h >= 0, h, NEG_SLOPE * h)
    return h @ p['lin2_w'].T + p['lin2_b']


if __name__ == "__main__":
    b, d, T, out_size = 2, 8, 180, 8          # x: (b, time_series=180, d regions)
    key = jax.random.PRNGKey(0)
    kx, kp = jax.random.split(key)
    x = jax.random.normal(kx, (b, T, d), jnp.float32)
    params = init_params(kp, out_size=out_size, time_series=T)

    fwd = jax.jit(functools.partial(conv_k_region_forward, out_size=out_size))
    out = jax.block_until_ready(fwd(x, params))
    ref = jax.block_until_ready(reference_forward(x, params, out_size))

    err = float(jnp.max(jnp.abs(out - ref)))
    scale = float(jnp.max(jnp.abs(ref)))
    assert out.shape == (b, d, out_size)
    # Tolerance accounts for bf16 MXU operands in the three conv matmuls
    # (per perf review); InstanceNorm, affines and the head stay f32.
    assert err <= 3e-2 * scale + 3e-2, f"mismatch vs reference: max abs err {err}"
    print("KERNEL_OK")
</pallas_src>

<mosaic_0001>
module attributes {stable_mosaic.version = 11 : i64} {
  func.func @feature_kernel(%arg0: i32, %arg1: memref<1x2x2048xf32, #tpu.memory_space<vmem>>, %arg2: memref<32x8xbf16, #tpu.memory_space<vmem>>, %arg3: memref<32x1xf32, #tpu.memory_space<vmem>>, %arg4: memref<32x1xf32, #tpu.memory_space<vmem>>, %arg5: memref<32x512xbf16, #tpu.memory_space<vmem>>, %arg6: memref<32x1xf32, #tpu.memory_space<vmem>>, %arg7: memref<32x1xf32, #tpu.memory_space<vmem>>, %arg8: memref<16x256xbf16, #tpu.memory_space<vmem>>, %arg9: memref<16x1xf32, #tpu.memory_space<vmem>>, %arg10: memref<16x1xf32, #tpu.memory_space<vmem>>, %arg11: memref<1x16x2048xf32, #tpu.memory_space<vmem>>) attributes {dimension_semantics = [#tpu.dimension_semantics<parallel>], iteration_bounds = array<i64: 1>, scalar_prefetch = 0 : i64, scratch_operands = 0 : i64, tpu.core_type = #tpu.core_type<tc>, window_params = [{transform_indices = @transform_0, window_bounds = array<i64: 1, 2, 2048>}, {pipeline_mode = #tpu.pipeline_mode<synchronous>, transform_indices = @transform_1, window_bounds = array<i64: 32, 8>}, {pipeline_mode = #tpu.pipeline_mode<synchronous>, transform_indices = @transform_2, window_bounds = array<i64: 32, 1>}, {pipeline_mode = #tpu.pipeline_mode<synchronous>, transform_indices = @transform_3, window_bounds = array<i64: 32, 1>}, {pipeline_mode = #tpu.pipeline_mode<synchronous>, transform_indices = @transform_4, window_bounds = array<i64: 32, 512>}, {pipeline_mode = #tpu.pipeline_mode<synchronous>, transform_indices = @transform_5, window_bounds = array<i64: 32, 1>}, {pipeline_mode = #tpu.pipeline_mode<synchronous>, transform_indices = @transform_6, window_bounds = array<i64: 32, 1>}, {pipeline_mode = #tpu.pipeline_mode<synchronous>, transform_indices = @transform_7, window_bounds = array<i64: 16, 256>}, {pipeline_mode = #tpu.pipeline_mode<synchronous>, transform_indices = @transform_8, window_bounds = array<i64: 16, 1>}, {pipeline_mode = #tpu.pipeline_mode<synchronous>, transform_indices = @transform_9, window_bounds = array<i64: 16, 1>}, {transform_indices = @transform_10, window_bounds = array<i64: 1, 16, 2048>}]} {
    %c0 = arith.constant 0 : index
    %c0_0 = arith.constant 0 : index
    %c0_1 = arith.constant 0 : index
    %0 = vector.load %arg1[%c0, %c0_0, %c0_1] : memref<1x2x2048xf32, #tpu.memory_space<vmem>>, vector<1x2x2048xf32>
    %1 = vector.shape_cast %0 : vector<1x2x2048xf32> to vector<2x2048xf32>
    %c256_i32 = arith.constant 256 : i32
    %2 = tpu.dynamic_rotate %1 by %c256_i32 dim 1 : vector<2x2048xf32>, i32 -> vector<2x2048xf32>
    %3 = arith.addf %1, %2 : vector<2x2048xf32>
    %c512_i32 = arith.constant 512 : i32
    %4 = tpu.dynamic_rotate %3 by %c512_i32 dim 1 : vector<2x2048xf32>, i32 -> vector<2x2048xf32>
    %5 = arith.addf %3, %4 : vector<2x2048xf32>
    %c1024_i32 = arith.constant 1024 : i32
    %6 = tpu.dynamic_rotate %5 by %c1024_i32 dim 1 : vector<2x2048xf32>, i32 -> vector<2x2048xf32>
    %7 = arith.addf %5, %6 : vector<2x2048xf32>
    %cst = arith.constant 1.250000e-01 : f32
    %8 = vector.broadcast %cst : f32 to vector<2x2048xf32>
    %9 = arith.mulf %7, %8 : vector<2x2048xf32>
    %10 = arith.subf %1, %9 : vector<2x2048xf32>
    %11 = arith.mulf %10, %10 : vector<2x2048xf32>
    %c256_i32_2 = arith.constant 256 : i32
    %12 = tpu.dynamic_rotate %11 by %c256_i32_2 dim 1 : vector<2x2048xf32>, i32 -> vector<2x2048xf32>
    %13 = arith.addf %11, %12 : vector<2x2048xf32>
    %c512_i32_3 = arith.constant 512 : i32
    %14 = tpu.dynamic_rotate %13 by %c512_i32_3 dim 1 : vector<2x2048xf32>, i32 -> vector<2x2048xf32>
    %15 = arith.addf %13, %14 : vector<2x2048xf32>
    %c1024_i32_4 = arith.constant 1024 : i32
    %16 = tpu.dynamic_rotate %15 by %c1024_i32_4 dim 1 : vector<2x2048xf32>, i32 -> vector<2x2048xf32>
    %17 = arith.addf %15, %16 : vector<2x2048xf32>
    %cst_5 = arith.constant 1.250000e-01 : f32
    %18 = vector.broadcast %cst_5 : f32 to vector<2x2048xf32>
    %19 = arith.mulf %17, %18 : vector<2x2048xf32>
    %cst_6 = arith.constant 9.99999974E-6 : f32
    %20 = vector.broadcast %cst_6 : f32 to vector<2x2048xf32>
    %21 = arith.addf %19, %20 : vector<2x2048xf32>
    %22 = math.rsqrt %21 : vector<2x2048xf32>
    %23 = arith.mulf %10, %22 : vector<2x2048xf32>
    %24 = arith.truncf %23 : vector<2x2048xf32> to vector<2x2048xbf16>
    %25 = vector.extract_strided_slice %24 {offsets = [0, 1], sizes = [2, 2047], strides = [1, 1]} : vector<2x2048xbf16> to vector<2x2047xbf16>
    %26 = vector.extract_strided_slice %24 {offsets = [0, 0], sizes = [2, 1], strides = [1, 1]} : vector<2x2048xbf16> to vector<2x1xbf16>
    %27 = tpu.concatenate %25, %26 in 1 : vector<2x2047xbf16>, vector<2x1xbf16> -> vector<2x2048xbf16>
    %28 = vector.extract_strided_slice %24 {offsets = [0, 2], sizes = [2, 2046], strides = [1, 1]} : vector<2x2048xbf16> to vector<2x2046xbf16>
    %29 = vector.extract_strided_slice %24 {offsets = [0, 0], sizes = [2, 2], strides = [1, 1]} : vector<2x2048xbf16> to vector<2x2xbf16>
    %30 = tpu.concatenate %28, %29 in 1 : vector<2x2046xbf16>, vector<2x2xbf16> -> vector<2x2048xbf16>
    %31 = vector.extract_strided_slice %24 {offsets = [0, 3], sizes = [2, 2045], strides = [1, 1]} : vector<2x2048xbf16> to vector<2x2045xbf16>
    %32 = vector.extract_strided_slice %24 {offsets = [0, 0], sizes = [2, 3], strides = [1, 1]} : vector<2x2048xbf16> to vector<2x3xbf16>
    %33 = tpu.concatenate %31, %32 in 1 : vector<2x2045xbf16>, vector<2x3xbf16> -> vector<2x2048xbf16>
    %34 = tpu.concatenate %24, %27, %30, %33 in 0 : vector<2x2048xbf16>, vector<2x2048xbf16>, vector<2x2048xbf16>, vector<2x2048xbf16> -> vector<8x2048xbf16>
    %c0_7 = arith.constant 0 : index
    %c0_8 = arith.constant 0 : index
    %35 = vector.load %arg2[%c0_7, %c0_8] : memref<32x8xbf16, #tpu.memory_space<vmem>>, vector<32x8xbf16>
    %cst_9 = arith.constant dense<0.000000e+00> : vector<32x2048xf32>
    %36 = tpu.matmul %35, %34, %cst_9 {dimension_numbers = #tpu.dot_dimension_numbers<[1], [0], [0], [1], [0, 0, 1, 1], [], []>} : vector<32x8xbf16>, vector<8x2048xbf16>, vector<32x2048xf32> -> vector<32x2048xf32>
    %c0_10 = arith.constant 0 : index
    %c0_11 = arith.constant 0 : index
    %37 = vector.load %arg3[%c0_10, %c0_11] : memref<32x1xf32, #tpu.memory_space<vmem>>, vector<32x1xf32>
    %38 = vector.broadcast %37 : vector<32x1xf32> to vector<32x2048xf32>
    %39 = arith.mulf %36, %38 : vector<32x2048xf32>
    %c0_12 = arith.constant 0 : index
    %c0_13 = arith.constant 0 : index
    %40 = vector.load %arg4[%c0_12, %c0_13] : memref<32x1xf32, #tpu.memory_space<vmem>>, vector<32x1xf32>
    %41 = vector.broadcast %40 : vector<32x1xf32> to vector<32x2048xf32>
    %42 = arith.addf %39, %41 : vector<32x2048xf32>
    %43 = arith.truncf %42 : vector<32x2048xf32> to vector<32x2048xbf16>
    %44 = vector.extract_strided_slice %43 {offsets = [0, 1], sizes = [32, 2047], strides = [1, 1]} : vector<32x2048xbf16> to vector<32x2047xbf16>
    %45 = vector.extract_strided_slice %43 {offsets = [0, 0], sizes = [32, 1], strides = [1, 1]} : vector<32x2048xbf16> to vector<32x1xbf16>
    %46 = tpu.concatenate %44, %45 in 1 : vector<32x2047xbf16>, vector<32x1xbf16> -> vector<32x2048xbf16>
    %47 = vector.extract_strided_slice %43 {offsets = [0, 2], sizes = [32, 2046], strides = [1, 1]} : vector<32x2048xbf16> to vector<32x2046xbf16>
    %48 = vector.extract_strided_slice %43 {offsets = [0, 0], sizes = [32, 2], strides = [1, 1]} : vector<32x2048xbf16> to vector<32x2xbf16>
    %49 = tpu.concatenate %47, %48 in 1 : vector<32x2046xbf16>, vector<32x2xbf16> -> vector<32x2048xbf16>
    %50 = vector.extract_strided_slice %43 {offsets = [0, 3], sizes = [32, 2045], strides = [1, 1]} : vector<32x2048xbf16> to vector<32x2045xbf16>
    %51 = vector.extract_strided_slice %43 {offsets = [0, 0], sizes = [32, 3], strides = [1, 1]} : vector<32x2048xbf16> to vector<32x3xbf16>
    %52 = tpu.concatenate %50, %51 in 1 : vector<32x2045xbf16>, vector<32x3xbf16> -> vector<32x2048xbf16>
    %53 = vector.extract_strided_slice %43 {offsets = [0, 4], sizes = [32, 2044], strides = [1, 1]} : vector<32x2048xbf16> to vector<32x2044xbf16>
    %54 = vector.extract_strided_slice %43 {offsets = [0, 0], sizes = [32, 4], strides = [1, 1]} : vector<32x2048xbf16> to vector<32x4xbf16>
    %55 = tpu.concatenate %53, %54 in 1 : vector<32x2044xbf16>, vector<32x4xbf16> -> vector<32x2048xbf16>
    %56 = vector.extract_strided_slice %43 {offsets = [0, 5], sizes = [32, 2043], strides = [1, 1]} : vector<32x2048xbf16> to vector<32x2043xbf16>
    %57 = vector.extract_strided_slice %43 {offsets = [0, 0], sizes = [32, 5], strides = [1, 1]} : vector<32x2048xbf16> to vector<32x5xbf16>
    %58 = tpu.concatenate %56, %57 in 1 : vector<32x2043xbf16>, vector<32x5xbf16> -> vector<32x2048xbf16>
    %59 = vector.extract_strided_slice %43 {offsets = [0, 6], sizes = [32, 2042], strides = [1, 1]} : vector<32x2048xbf16> to vector<32x2042xbf16>
    %60 = vector.extract_strided_slice %43 {offsets = [0, 0], sizes = [32, 6], strides = [1, 1]} : vector<32x2048xbf16> to vector<32x6xbf16>
    %61 = tpu.concatenate %59, %60 in 1 : vector<32x2042xbf16>, vector<32x6xbf16> -> vector<32x2048xbf16>
    %62 = vector.extract_strided_slice %43 {offsets = [0, 7], sizes = [32, 2041], strides = [1, 1]} : vector<32x2048xbf16> to vector<32x2041xbf16>
    %63 = vector.extract_strided_slice %43 {offsets = [0, 0], sizes = [32, 7], strides = [1, 1]} : vector<32x2048xbf16> to vector<32x7xbf16>
    %64 = tpu.concatenate %62, %63 in 1 : vector<32x2041xbf16>, vector<32x7xbf16> -> vector<32x2048xbf16>
    %65 = vector.extract_strided_slice %43 {offsets = [0, 8], sizes = [32, 2040], strides = [1, 1]} : vector<32x2048xbf16> to vector<32x2040xbf16>
    %66 = vector.extract_strided_slice %43 {offsets = [0, 0], sizes = [32, 8], strides = [1, 1]} : vector<32x2048xbf16> to vector<32x8xbf16>
    %67 = tpu.concatenate %65, %66 in 1 : vector<32x2040xbf16>, vector<32x8xbf16> -> vector<32x2048xbf16>
    %68 = vector.extract_strided_slice %43 {offsets = [0, 9], sizes = [32, 2039], strides = [1, 1]} : vector<32x2048xbf16> to vector<32x2039xbf16>
    %69 = vector.extract_strided_slice %43 {offsets = [0, 0], sizes = [32, 9], strides = [1, 1]} : vector<32x2048xbf16> to vector<32x9xbf16>
    %70 = tpu.concatenate %68, %69 in 1 : vector<32x2039xbf16>, vector<32x9xbf16> -> vector<32x2048xbf16>
    %71 = vector.extract_strided_slice %43 {offsets = [0, 10], sizes = [32, 2038], strides = [1, 1]} : vector<32x2048xbf16> to vector<32x2038xbf16>
    %72 = vector.extract_strided_slice %43 {offsets = [0, 0], sizes = [32, 10], strides = [1, 1]} : vector<32x2048xbf16> to vector<32x10xbf16>
    %73 = tpu.concatenate %71, %72 in 1 : vector<32x2038xbf16>, vector<32x10xbf16> -> vector<32x2048xbf16>
    %74 = vector.extract_strided_slice %43 {offsets = [0, 11], sizes = [32, 2037], strides = [1, 1]} : vector<32x2048xbf16> to vector<32x2037xbf16>
    %75 = vector.extract_strided_slice %43 {offsets = [0, 0], sizes = [32, 11], strides = [1, 1]} : vector<32x2048xbf16> to vector<32x11xbf16>
    %76 = tpu.concatenate %74, %75 in 1 : vector<32x2037xbf16>, vector<32x11xbf16> -> vector<32x2048xbf16>
    %77 = vector.extract_strided_slice %43 {offsets = [0, 12], sizes = [32, 2036], strides = [1, 1]} : vector<32x2048xbf16> to vector<32x2036xbf16>
    %78 = vector.extract_strided_slice %43 {offsets = [0, 0], sizes = [32, 12], strides = [1, 1]} : vector<32x2048xbf16> to vector<32x12xbf16>
    %79 = tpu.concatenate %77, %78 in 1 : vector<32x2036xbf16>, vector<32x12xbf16> -> vector<32x2048xbf16>
    %80 = vector.extract_strided_slice %43 {offsets = [0, 13], sizes = [32, 2035], strides = [1, 1]} : vector<32x2048xbf16> to vector<32x2035xbf16>
    %81 = vector.extract_strided_slice %43 {offsets = [0, 0], sizes = [32, 13], strides = [1, 1]} : vector<32x2048xbf16> to vector<32x13xbf16>
    %82 = tpu.concatenate %80, %81 in 1 : vector<32x2035xbf16>, vector<32x13xbf16> -> vector<32x2048xbf16>
    %83 = vector.extract_strided_slice %43 {offsets = [0, 14], sizes = [32, 2034], strides = [1, 1]} : vector<32x2048xbf16> to vector<32x2034xbf16>
    %84 = vector.extract_strided_slice %43 {offsets = [0, 0], sizes = [32, 14], strides = [1, 1]} : vector<32x2048xbf16> to vector<32x14xbf16>
    %85 = tpu.concatenate %83, %84 in 1 : vector<32x2034xbf16>, vector<32x14xbf16> -> vector<32x2048xbf16>
    %86 = vector.extract_strided_slice %43 {offsets = [0, 15], sizes = [32, 2033], strides = [1, 1]} : vector<32x2048xbf16> to vector<32x2033xbf16>
    %87 = vector.extract_strided_slice %43 {offsets = [0, 0], sizes = [32, 15], strides = [1, 1]} : vector<32x2048xbf16> to vector<32x15xbf16>
    %88 = tpu.concatenate %86, %87 in 1 : vector<32x2033xbf16>, vector<32x15xbf16> -> vector<32x2048xbf16>
    %89 = tpu.concatenate %43, %46, %49, %52, %55, %58, %61, %64, %67, %70, %73, %76, %79, %82, %85, %88 in 0 : vector<32x2048xbf16>, vector<32x2048xbf16>, vector<32x2048xbf16>, vector<32x2048xbf16>, vector<32x2048xbf16>, vector<32x2048xbf16>, vector<32x2048xbf16>, vector<32x2048xbf16>, vector<32x2048xbf16>, vector<32x2048xbf16>, vector<32x2048xbf16>, vector<32x2048xbf16>, vector<32x2048xbf16>, vector<32x2048xbf16>, vector<32x2048xbf16>, vector<32x2048xbf16> -> vector<512x2048xbf16>
    %c0_14 = arith.constant 0 : index
    %c0_15 = arith.constant 0 : index
    %90 = vector.load %arg5[%c0_14, %c0_15] : memref<32x512xbf16, #tpu.memory_space<vmem>>, vector<32x512xbf16>
    %cst_16 = arith.constant dense<0.000000e+00> : vector<32x2048xf32>
    %91 = tpu.matmul %90, %89, %cst_16 {dimension_numbers = #tpu.dot_dimension_numbers<[1], [0], [0], [1], [0, 0, 1, 1], [], []>} : vector<32x512xbf16>, vector<512x2048xbf16>, vector<32x2048xf32> -> vector<32x2048xf32>
    %c0_17 = arith.constant 0 : index
    %c0_18 = arith.constant 0 : index
    %92 = vector.load %arg6[%c0_17, %c0_18] : memref<32x1xf32, #tpu.memory_space<vmem>>, vector<32x1xf32>
    %93 = vector.broadcast %92 : vector<32x1xf32> to vector<32x2048xf32>
    %94 = arith.mulf %91, %93 : vector<32x2048xf32>
    %c0_19 = arith.constant 0 : index
    %c0_20 = arith.constant 0 : index
    %95 = vector.load %arg7[%c0_19, %c0_20] : memref<32x1xf32, #tpu.memory_space<vmem>>, vector<32x1xf32>
    %96 = vector.broadcast %95 : vector<32x1xf32> to vector<32x2048xf32>
    %97 = arith.addf %94, %96 : vector<32x2048xf32>
    %98 = arith.truncf %97 : vector<32x2048xf32> to vector<32x2048xbf16>
    %99 = vector.extract_strided_slice %98 {offsets = [0, 1], sizes = [32, 2047], strides = [1, 1]} : vector<32x2048xbf16> to vector<32x2047xbf16>
    %100 = vector.extract_strided_slice %98 {offsets = [0, 0], sizes = [32, 1], strides = [1, 1]} : vector<32x2048xbf16> to vector<32x1xbf16>
    %101 = tpu.concatenate %99, %100 in 1 : vector<32x2047xbf16>, vector<32x1xbf16> -> vector<32x2048xbf16>
    %102 = vector.extract_strided_slice %98 {offsets = [0, 2], sizes = [32, 2046], strides = [1, 1]} : vector<32x2048xbf16> to vector<32x2046xbf16>
    %103 = vector.extract_strided_slice %98 {offsets = [0, 0], sizes = [32, 2], strides = [1, 1]} : vector<32x2048xbf16> to vector<32x2xbf16>
    %104 = tpu.concatenate %102, %103 in 1 : vector<32x2046xbf16>, vector<32x2xbf16> -> vector<32x2048xbf16>
    %105 = vector.extract_strided_slice %98 {offsets = [0, 3], sizes = [32, 2045], strides = [1, 1]} : vector<32x2048xbf16> to vector<32x2045xbf16>
    %106 = vector.extract_strided_slice %98 {offsets = [0, 0], sizes = [32, 3], strides = [1, 1]} : vector<32x2048xbf16> to vector<32x3xbf16>
    %107 = tpu.concatenate %105, %106 in 1 : vector<32x2045xbf16>, vector<32x3xbf16> -> vector<32x2048xbf16>
    %108 = vector.extract_strided_slice %98 {offsets = [0, 4], sizes = [32, 2044], strides = [1, 1]} : vector<32x2048xbf16> to vector<32x2044xbf16>
    %109 = vector.extract_strided_slice %98 {offsets = [0, 0], sizes = [32, 4], strides = [1, 1]} : vector<32x2048xbf16> to vector<32x4xbf16>
    %110 = tpu.concatenate %108, %109 in 1 : vector<32x2044xbf16>, vector<32x4xbf16> -> vector<32x2048xbf16>
    %111 = vector.extract_strided_slice %98 {offsets = [0, 5], sizes = [32, 2043], strides = [1, 1]} : vector<32x2048xbf16> to vector<32x2043xbf16>
    %112 = vector.extract_strided_slice %98 {offsets = [0, 0], sizes = [32, 5], strides = [1, 1]} : vector<32x2048xbf16> to vector<32x5xbf16>
    %113 = tpu.concatenate %111, %112 in 1 : vector<32x2043xbf16>, vector<32x5xbf16> -> vector<32x2048xbf16>
    %114 = vector.extract_strided_slice %98 {offsets = [0, 6], sizes = [32, 2042], strides = [1, 1]} : vector<32x2048xbf16> to vector<32x2042xbf16>
    %115 = vector.extract_strided_slice %98 {offsets = [0, 0], sizes = [32, 6], strides = [1, 1]} : vector<32x2048xbf16> to vector<32x6xbf16>
    %116 = tpu.concatenate %114, %115 in 1 : vector<32x2042xbf16>, vector<32x6xbf16> -> vector<32x2048xbf16>
    %117 = vector.extract_strided_slice %98 {offsets = [0, 7], sizes = [32, 2041], strides = [1, 1]} : vector<32x2048xbf16> to vector<32x2041xbf16>
    %118 = vector.extract_strided_slice %98 {offsets = [0, 0], sizes = [32, 7], strides = [1, 1]} : vector<32x2048xbf16> to vector<32x7xbf16>
    %119 = tpu.concatenate %117, %118 in 1 : vector<32x2041xbf16>, vector<32x7xbf16> -> vector<32x2048xbf16>
    %120 = tpu.concatenate %98, %101, %104, %107, %110, %113, %116, %119 in 0 : vector<32x2048xbf16>, vector<32x2048xbf16>, vector<32x2048xbf16>, vector<32x2048xbf16>, vector<32x2048xbf16>, vector<32x2048xbf16>, vector<32x2048xbf16>, vector<32x2048xbf16> -> vector<256x2048xbf16>
    %c0_21 = arith.constant 0 : index
    %c0_22 = arith.constant 0 : index
    %121 = vector.load %arg8[%c0_21, %c0_22] : memref<16x256xbf16, #tpu.memory_space<vmem>>, vector<16x256xbf16>
    %cst_23 = arith.constant dense<0.000000e+00> : vector<16x2048xf32>
    %122 = tpu.matmul %121, %120, %cst_23 {dimension_numbers = #tpu.dot_dimension_numbers<[1], [0], [0], [1], [0, 0, 1, 1], [], []>} : vector<16x256xbf16>, vector<256x2048xbf16>, vector<16x2048xf32> -> vector<16x2048xf32>
    %c0_24 = arith.constant 0 : index
    %c0_25 = arith.constant 0 : index
    %123 = vector.load %arg9[%c0_24, %c0_25] : memref<16x1xf32, #tpu.memory_space<vmem>>, vector<16x1xf32>
    %124 = vector.broadcast %123 : vector<16x1xf32> to vector<16x2048xf32>
    %125 = arith.mulf %122, %124 : vector<16x2048xf32>
    %c0_26 = arith.constant 0 : index
    %c0_27 = arith.constant 0 : index
    %126 = vector.load %arg10[%c0_26, %c0_27] : memref<16x1xf32, #tpu.memory_space<vmem>>, vector<16x1xf32>
    %127 = vector.broadcast %126 : vector<16x1xf32> to vector<16x2048xf32>
    %128 = arith.addf %125, %127 : vector<16x2048xf32>
    %129 = vector.extract_strided_slice %128 {offsets = [0, 1], sizes = [16, 2047], strides = [1, 1]} : vector<16x2048xf32> to vector<16x2047xf32>
    %130 = vector.extract_strided_slice %128 {offsets = [0, 0], sizes = [16, 1], strides = [1, 1]} : vector<16x2048xf32> to vector<16x1xf32>
    %131 = tpu.concatenate %129, %130 in 1 : vector<16x2047xf32>, vector<16x1xf32> -> vector<16x2048xf32>
    %132 = arith.maximumf %128, %131 : vector<16x2048xf32>
    %133 = vector.extract_strided_slice %132 {offsets = [0, 2], sizes = [16, 2046], strides = [1, 1]} : vector<16x2048xf32> to vector<16x2046xf32>
    %134 = vector.extract_strided_slice %132 {offsets = [0, 0], sizes = [16, 2], strides = [1, 1]} : vector<16x2048xf32> to vector<16x2xf32>
    %135 = tpu.concatenate %133, %134 in 1 : vector<16x2046xf32>, vector<16x2xf32> -> vector<16x2048xf32>
    %136 = arith.maximumf %132, %135 : vector<16x2048xf32>
    %137 = vector.extract_strided_slice %136 {offsets = [0, 4], sizes = [16, 2044], strides = [1, 1]} : vector<16x2048xf32> to vector<16x2044xf32>
    %138 = vector.extract_strided_slice %136 {offsets = [0, 0], sizes = [16, 4], strides = [1, 1]} : vector<16x2048xf32> to vector<16x4xf32>
    %139 = tpu.concatenate %137, %138 in 1 : vector<16x2044xf32>, vector<16x4xf32> -> vector<16x2048xf32>
    %140 = arith.maximumf %136, %139 : vector<16x2048xf32>
    %c0_28 = arith.constant 0 : index
    %c0_29 = arith.constant 0 : index
    %c0_30 = arith.constant 0 : index
    %141 = vector.load %arg11[%c0_28, %c0_29, %c0_30] : memref<1x16x2048xf32, #tpu.memory_space<vmem>>, vector<1x16x2048xf32>
    %142 = vector.shape_cast %141 : vector<1x16x2048xf32> to vector<16x2048xf32>
    %143 = vector.shape_cast %140 : vector<16x2048xf32> to vector<1x16x2048xf32>
    tpu.vector_store %arg11[%c0_28, %c0_29, %c0_30], %143 {strides = array<i32>} : memref<1x16x2048xf32, #tpu.memory_space<vmem>>, vector<1x16x2048xf32>,
    return
  }
  func.func @transform_0(%arg0: i32) -> (i32, i32, i32) {
    %c0_i32 = arith.constant 0 : i32
    %c0_i32_0 = arith.constant 0 : i32
    %c0_i32_1 = arith.constant 0 : i32
    return %arg0, %c0_i32, %c0_i32_0 : i32, i32, i32
  }
  func.func @transform_1(%arg0: i32) -> (i32, i32) {
    %c0_i32 = arith.constant 0 : i32
    %c0_i32_0 = arith.constant 0 : i32
    %c0_i32_1 = arith.constant 0 : i32
    return %c0_i32, %c0_i32_0 : i32, i32
  }
  func.func @transform_2(%arg0: i32) -> (i32, i32) {
    %c0_i32 = arith.constant 0 : i32
    %c0_i32_0 = arith.constant 0 : i32
    %c0_i32_1 = arith.constant 0 : i32
    return %c0_i32, %c0_i32_0 : i32, i32
  }
  func.func @transform_3(%arg0: i32) -> (i32, i32) {
    %c0_i32 = arith.constant 0 : i32
    %c0_i32_0 = arith.constant 0 : i32
    %c0_i32_1 = arith.constant 0 : i32
    return %c0_i32, %c0_i32_0 : i32, i32
  }
  func.func @transform_4(%arg0: i32) -> (i32, i32) {
    %c0_i32 = arith.constant 0 : i32
    %c0_i32_0 = arith.constant 0 : i32
    %c0_i32_1 = arith.constant 0 : i32
    return %c0_i32, %c0_i32_0 : i32, i32
  }
  func.func @transform_5(%arg0: i32) -> (i32, i32) {
    %c0_i32 = arith.constant 0 : i32
    %c0_i32_0 = arith.constant 0 : i32
    %c0_i32_1 = arith.constant 0 : i32
    return %c0_i32, %c0_i32_0 : i32, i32
  }
  func.func @transform_6(%arg0: i32) -> (i32, i32) {
    %c0_i32 = arith.constant 0 : i32
    %c0_i32_0 = arith.constant 0 : i32
    %c0_i32_1 = arith.constant 0 : i32
    return %c0_i32, %c0_i32_0 : i32, i32
  }
  func.func @transform_7(%arg0: i32) -> (i32, i32) {
    %c0_i32 = arith.constant 0 : i32
    %c0_i32_0 = arith.constant 0 : i32
    %c0_i32_1 = arith.constant 0 : i32
    return %c0_i32, %c0_i32_0 : i32, i32
  }
  func.func @transform_8(%arg0: i32) -> (i32, i32) {
    %c0_i32 = arith.constant 0 : i32
    %c0_i32_0 = arith.constant 0 : i32
    %c0_i32_1 = arith.constant 0 : i32
    return %c0_i32, %c0_i32_0 : i32, i32
  }
  func.func @transform_9(%arg0: i32) -> (i32, i32) {
    %c0_i32 = arith.constant 0 : i32
    %c0_i32_0 = arith.constant 0 : i32
    %c0_i32_1 = arith.constant 0 : i32
    return %c0_i32, %c0_i32_0 : i32, i32
  }
  func.func @transform_10(%arg0: i32) -> (i32, i32, i32) {
    %c0_i32 = arith.constant 0 : i32
    %c0_i32_0 = arith.constant 0 : i32
    %c0_i32_1 = arith.constant 0 : i32
    return %arg0, %c0_i32, %c0_i32_0 : i32, i32, i32
  }
}

</mosaic_0001>

<llo_original>
// kernel: conv_k_region_forward.1
$region0: #{conv_k_region_forward.1}
  #allocation0 [shape = 'u32[]', space=smem, size = 0x4, offset = 0x4, fixed_abs, tag = 'smem constant byte address 0x4 - core index']
  #allocation1 [shape = 'u32[144,128]{1,0:T(1,128)}', space=vmem, size = 0x12000, scoped, tag = 'internal scratch']
  %s0 = inlined_call_operand.vmem [shape: f32[1,2,2048], index: 0, kind: input, shape index: {}]
  %s1 = inlined_call_operand.vmem [shape: bf16[32,8], index: 1, kind: input, shape index: {}]
  %s2 = inlined_call_operand.vmem [shape: f32[32,1], index: 2, kind: input, shape index: {}]
  %s3 = inlined_call_operand.vmem [shape: f32[32,1], index: 3, kind: input, shape index: {}]
  %s4 = inlined_call_operand.vmem [shape: bf16[32,512], index: 4, kind: input, shape index: {}]
  %s5 = inlined_call_operand.vmem [shape: f32[32,1], index: 5, kind: input, shape index: {}]
  %s6 = inlined_call_operand.vmem [shape: f32[32,1], index: 6, kind: input, shape index: {}]
  %s7 = inlined_call_operand.vmem [shape: bf16[16,256], index: 7, kind: input, shape index: {}]
  %s8 = inlined_call_operand.vmem [shape: f32[16,1], index: 8, kind: input, shape index: {}]
  %s9 = inlined_call_operand.vmem [shape: f32[16,1], index: 9, kind: input, shape index: {}]
  %s10 = inlined_call_operand.vmem [shape: f32[1,16,2048], index: 10, kind: output, shape index: {}]
  %s11 = sld [smem:[#allocation0]]
  $region50: #{conv_k_region_forward.1} parent=0
    _
  %s13 = ssub.s32 1, %s11
  %s14 = scalar_select 0, %s13, %s11
  // Predicated region
  $region2: #{conv_k_region_forward.1} parent=0 // pred_check
    _
  $region3: #{conv_k_region_forward.1} parent=0 // pred_check_branch
    %16 = sbr.rel (0) target = $region5
  $region4: #{conv_k_region_forward.1} parent=0 // pred_region
    _
  $region5: #{conv_k_region_forward.1} parent=0 // pred_fallthru
    _
  // Predicated region
  $region6: #{conv_k_region_forward.1} parent=0 // pred_check
    _
  $region7: #{conv_k_region_forward.1} parent=0 // pred_check_branch
    %18 = sbr.rel (0) target = $region9
  $region8: #{conv_k_region_forward.1} parent=0 // pred_region
    _
  $region9: #{conv_k_region_forward.1} parent=0 // pred_fallthru
    _
  // Predicated region
  $region10: #{conv_k_region_forward.1} parent=0 // pred_check
    _
  $region11: #{conv_k_region_forward.1} parent=0 // pred_check_branch
    %20 = sbr.rel (0) target = $region13
  $region12: #{conv_k_region_forward.1} parent=0 // pred_region
    _
  $region13: #{conv_k_region_forward.1} parent=0 // pred_fallthru
    _
  // Predicated region
  $region14: #{conv_k_region_forward.1} parent=0 // pred_check
    _
  $region15: #{conv_k_region_forward.1} parent=0 // pred_check_branch
    %22 = sbr.rel (0) target = $region17
  $region16: #{conv_k_region_forward.1} parent=0 // pred_region
    _
  $region17: #{conv_k_region_forward.1} parent=0 // pred_fallthru
    _
  // Predicated region
  $region18: #{conv_k_region_forward.1} parent=0 // pred_check
    _
  $region19: #{conv_k_region_forward.1} parent=0 // pred_check_branch
    %24 = sbr.rel (0) target = $region21
  $region20: #{conv_k_region_forward.1} parent=0 // pred_region
    _
  $region21: #{conv_k_region_forward.1} parent=0 // pred_fallthru
    _
  // Predicated region
  $region22: #{conv_k_region_forward.1} parent=0 // pred_check
    _
  $region23: #{conv_k_region_forward.1} parent=0 // pred_check_branch
    %26 = sbr.rel (0) target = $region25
  $region24: #{conv_k_region_forward.1} parent=0 // pred_region
    _
  $region25: #{conv_k_region_forward.1} parent=0 // pred_fallthru
    _
  // Predicated region
  $region26: #{conv_k_region_forward.1} parent=0 // pred_check
    _
  $region27: #{conv_k_region_forward.1} parent=0 // pred_check_branch
    %28 = sbr.rel (0) target = $region29
  $region28: #{conv_k_region_forward.1} parent=0 // pred_region
    _
  $region29: #{conv_k_region_forward.1} parent=0 // pred_fallthru
    _
  // Predicated region
  $region30: #{conv_k_region_forward.1} parent=0 // pred_check
    _
  $region31: #{conv_k_region_forward.1} parent=0 // pred_check_branch
    %30 = sbr.rel (0) target = $region33
  $region32: #{conv_k_region_forward.1} parent=0 // pred_region
    _
  $region33: #{conv_k_region_forward.1} parent=0 // pred_fallthru
    _
  // Predicated region
  $region34: #{conv_k_region_forward.1} parent=0 // pred_check
    _
  $region35: #{conv_k_region_forward.1} parent=0 // pred_check_branch
    %32 = sbr.rel (0) target = $region37
  $region36: #{conv_k_region_forward.1} parent=0 // pred_region
    _
  $region37: #{conv_k_region_forward.1} parent=0 // pred_fallthru
    _
  // Predicated region
  $region38: #{conv_k_region_forward.1} parent=0 // pred_check
    _
  $region39: #{conv_k_region_forward.1} parent=0 // pred_check_branch
    %34 = sbr.rel (0) target = $region41
  $region40: #{conv_k_region_forward.1} parent=0 // pred_region
    _
  $region41: #{conv_k_region_forward.1} parent=0 // pred_fallthru
    _
  %v36 = vld [vmem:[%s0] sm:$0xff]
  %v37 = vld [vmem:[%s0 + $0x8] sm:$0xff]
  %v38 = vld [vmem:[%s0 + $0x10] sm:$0xff]
  %v39 = vld [vmem:[%s0 + $0x18] sm:$0xff]
  %v44 = vcombine.high %v36, %v36
  %v46 = vunpack.c.l.s4 1983009808
  %v47 = vunpack.c.0.s8 %v46
  %v48 = vlaneseq
  %v49 = vshrl.u32 %v48, 7
  %v50 = vsub.s32 %v47, %v49
  %v51 = vrot.slane %v36, %v50
  %v53 = vunpack.c.l.s4 1983009808
  %v54 = vunpack.c.0.s8 %v53
  %v55 = vlaneseq
  %v56 = vshrl.u32 %v55, 7
  %v57 = vsub.s32 %v54, %v56
  %v58 = vrot.slane %v44, %v57
  %v59 = vcombine.high %v51, %v51
  %v60 = vcombine.high %v58, %v58
  %v61 = vcombine.high %v37, %v37
  %v63 = vunpack.c.l.s4 1983009808
  %v64 = vunpack.c.0.s8 %v63
  %v65 = vlaneseq
  %v66 = vshrl.u32 %v65, 7
  %v67 = vsub.s32 %v64, %v66
  %v68 = vrot.slane %v37, %v67
  %v70 = vunpack.c.l.s4 1983009808
  %v71 = vunpack.c.0.s8 %v70
  %v72 = vlaneseq
  %v73 = vshrl.u32 %v72, 7
  %v74 = vsub.s32 %v71, %v73
  %v75 = vrot.slane %v61, %v74
  %v76 = vcombine.high %v68, %v68
  %v77 = vcombine.high %v75, %v75
  %v78 = vcombine.high %v38, %v38
  %v80 = vunpack.c.l.s4 1983009808
  %v81 = vunpack.c.0.s8 %v80
  %v82 = vlaneseq
  %v83 = vshrl.u32 %v82, 7
  %v84 = vsub.s32 %v81, %v83
  %v85 = vrot.slane %v38, %v84
  %v87 = vunpack.c.l.s4 1983009808
  %v88 = vunpack.c.0.s8 %v87
  %v89 = vlaneseq
  %v90 = vshrl.u32 %v89, 7
  %v91 = vsub.s32 %v88, %v90
  %v92 = vrot.slane %v78, %v91
  %v93 = vcombine.high %v85, %v85
  %v94 = vcombine.high %v92, %v92
  %v95 = vcombine.high %v39, %v39
  %v97 = vunpack.c.l.s4 1983009808
  %v98 = vunpack.c.0.s8 %v97
  %v99 = vlaneseq
  %v100 = vshrl.u32 %v99, 7
  %v101 = vsub.s32 %v98, %v100
  %v102 = vrot.slane %v39, %v101
  %v104 = vunpack.c.l.s4 1983009808
  %v105 = vunpack.c.0.s8 %v104
  %v106 = vlaneseq
  %v107 = vshrl.u32 %v106, 7
  %v108 = vsub.s32 %v105, %v107
  %v109 = vrot.slane %v95, %v108
  %v110 = vcombine.high %v102, %v102
  %v111 = vcombine.high %v109, %v109
  %v112 = vcombine.low %v109, %v111
  %v113 = vcombine.low %v51, %v59
  %v115 = vunpack.c.l.s4 1983009808
  %v116 = vunpack.c.0.s8 %v115
  %v117 = vlaneseq
  %v118 = vshrl.u32 %v117, 7
  %v119 = vsub.s32 %v116, %v118
  %v120 = vrot.slane %v112, %v119
  %v122 = vunpack.c.l.s4 1983009808
  %v123 = vunpack.c.0.s8 %v122
  %v124 = vlaneseq
  %v125 = vshrl.u32 %v124, 7
  %v126 = vsub.s32 %v123, %v125
  %v127 = vrot.slane %v113, %v126
  %v128 = vcombine.low %v120, %v127
  %v129 = vcombine.low %v58, %v60
  %v130 = vcombine.low %v68, %v76
  %v132 = vunpack.c.l.s4 1983009808
  %v133 = vunpack.c.0.s8 %v132
  %v134 = vlaneseq
  %v135 = vshrl.u32 %v134, 7
  %v136 = vsub.s32 %v133, %v135
  %v137 = vrot.slane %v129, %v136
  %v139 = vunpack.c.l.s4 1983009808
  %v140 = vunpack.c.0.s8 %v139
  %v141 = vlaneseq
  %v142 = vshrl.u32 %v141, 7
  %v143 = vsub.s32 %v140, %v142
  %v144 = vrot.slane %v130, %v143
  %v145 = vcombine.low %v137, %v144
  %v146 = vcombine.low %v75, %v77
  %v147 = vcombine.low %v85, %v93
  %v149 = vunpack.c.l.s4 1983009808
  %v150 = vunpack.c.0.s8 %v149
  %v151 = vlaneseq
  %v152 = vshrl.u32 %v151, 7
  %v153 = vsub.s32 %v150, %v152
  %v154 = vrot.slane %v146, %v153
  %v156 = vunpack.c.l.s4 1983009808
  %v157 = vunpack.c.0.s8 %v156
  %v158 = vlaneseq
  %v159 = vshrl.u32 %v158, 7
  %v160 = vsub.s32 %v157, %v159
  %v161 = vrot.slane %v147, %v160
  %v162 = vcombine.low %v154, %v161
  %v163 = vcombine.low %v92, %v94
  %v164 = vcombine.low %v102, %v110
  %v166 = vunpack.c.l.s4 1983009808
  %v167 = vunpack.c.0.s8 %v166
  %v168 = vlaneseq
  %v169 = vshrl.u32 %v168, 7
  %v170 = vsub.s32 %v167, %v169
  %v171 = vrot.slane %v163, %v170
  %v173 = vunpack.c.l.s4 1983009808
  %v174 = vunpack.c.0.s8 %v173
  %v175 = vlaneseq
  %v176 = vshrl.u32 %v175, 7
  %v177 = vsub.s32 %v174, %v176
  %v178 = vrot.slane %v164, %v177
  %v179 = vcombine.low %v171, %v178
  %v184 = vadd.f32 %v36, %v128
  %v185 = vadd.f32 %v37, %v145
  %v186 = vadd.f32 %v38, %v162
  %v187 = vadd.f32 %v39, %v179
  %v192 = vcombine.high %v184, %v184
  %v194 = vunpack.c.l.s4 1983009808
  %v195 = vunpack.c.0.s8 %v194
  %v196 = vlaneseq
  %v197 = vshrl.u32 %v196, 7
  %v198 = vsub.s32 %v195, %v197
  %v199 = vrot.slane %v184, %v198
  %v201 = vunpack.c.l.s4 1983009808
  %v202 = vunpack.c.0.s8 %v201
  %v203 = vlaneseq
  %v204 = vshrl.u32 %v203, 7
  %v205 = vsub.s32 %v202, %v204
  %v206 = vrot.slane %v192, %v205
  %v207 = vcombine.high %v199, %v199
  %v208 = vcombine.high %v206, %v206
  %v209 = vcombine.high %v185, %v185
  %v211 = vunpack.c.l.s4 1983009808
  %v212 = vunpack.c.0.s8 %v211
  %v213 = vlaneseq
  %v214 = vshrl.u32 %v213, 7
  %v215 = vsub.s32 %v212, %v214
  %v216 = vrot.slane %v185, %v215
  %v218 = vunpack.c.l.s4 1983009808
  %v219 = vunpack.c.0.s8 %v218
  %v220 = vlaneseq
  %v221 = vshrl.u32 %v220, 7
  %v222 = vsub.s32 %v219, %v221
  %v223 = vrot.slane %v209, %v222
  %v224 = vcombine.high %v216, %v216
  %v225 = vcombine.high %v223, %v223
  %v226 = vcombine.high %v186, %v186
  %v228 = vunpack.c.l.s4 1983009808
  %v229 = vunpack.c.0.s8 %v228
  %v230 = vlaneseq
  %v231 = vshrl.u32 %v230, 7
  %v232 = vsub.s32 %v229, %v231
  %v233 = vrot.slane %v186, %v232
  %v235 = vunpack.c.l.s4 1983009808
  %v236 = vunpack.c.0.s8 %v235
  %v237 = vlaneseq
  %v238 = vshrl.u32 %v237, 7
  %v239 = vsub.s32 %v236, %v238
  %v240 = vrot.slane %v226, %v239
  %v241 = vcombine.high %v233, %v233
  %v242 = vcombine.high %v240, %v240
  %v243 = vcombine.high %v187, %v187
  %v245 = vunpack.c.l.s4 1983009808
  %v246 = vunpack.c.0.s8 %v245
  %v247 = vlaneseq
  %v248 = vshrl.u32 %v247, 7
  %v249 = vsub.s32 %v246, %v248
  %v250 = vrot.slane %v187, %v249
  %v252 = vunpack.c.l.s4 1983009808
  %v253 = vunpack.c.0.s8 %v252
  %v254 = vlaneseq
  %v255 = vshrl.u32 %v254, 7
  %v256 = vsub.s32 %v253, %v255
  %v257 = vrot.slane %v243, %v256
  %v258 = vcombine.high %v250, %v250
  %v259 = vcombine.high %v257, %v257
  %v260 = vcombine.low %v250, %v258
  %v261 = vcombine.low %v257, %v259
  %v263 = vunpack.c.l.s4 1983009808
  %v264 = vunpack.c.0.s8 %v263
  %v265 = vlaneseq
  %v266 = vshrl.u32 %v265, 7
  %v267 = vsub.s32 %v264, %v266
  %v268 = vrot.slane %v260, %v267
  %v270 = vunpack.c.l.s4 1983009808
  %v271 = vunpack.c.0.s8 %v270
  %v272 = vlaneseq
  %v273 = vshrl.u32 %v272, 7
  %v274 = vsub.s32 %v271, %v273
  %v275 = vrot.slane %v261, %v274
  %v276 = vcombine.low %v268, %v275
  %v277 = vcombine.low %v199, %v207
  %v278 = vcombine.low %v206, %v208
  %v280 = vunpack.c.l.s4 1983009808
  %v281 = vunpack.c.0.s8 %v280
  %v282 = vlaneseq
  %v283 = vshrl.u32 %v282, 7
  %v284 = vsub.s32 %v281, %v283
  %v285 = vrot.slane %v277, %v284
  %v287 = vunpack.c.l.s4 1983009808
  %v288 = vunpack.c.0.s8 %v287
  %v289 = vlaneseq
  %v290 = vshrl.u32 %v289, 7
  %v291 = vsub.s32 %v288, %v290
  %v292 = vrot.slane %v278, %v291
  %v293 = vcombine.low %v285, %v292
  %v294 = vcombine.low %v216, %v224
  %v295 = vcombine.low %v223, %v225
  %v297 = vunpack.c.l.s4 1983009808
  %v298 = vunpack.c.0.s8 %v297
  %v299 = vlaneseq
  %v300 = vshrl.u32 %v299, 7
  %v301 = vsub.s32 %v298, %v300
  %v302 = vrot.slane %v294, %v301
  %v304 = vunpack.c.l.s4 1983009808
  %v305 = vunpack.c.0.s8 %v304
  %v306 = vlaneseq
  %v307 = vshrl.u32 %v306, 7
  %v308 = vsub.s32 %v305, %v307
  %v309 = vrot.slane %v295, %v308
  %v310 = vcombine.low %v302, %v309
  %v311 = vcombine.low %v233, %v241
  %v312 = vcombine.low %v240, %v242
  %v314 = vunpack.c.l.s4 1983009808
  %v315 = vunpack.c.0.s8 %v314
  %v316 = vlaneseq
  %v317 = vshrl.u32 %v316, 7
  %v318 = vsub.s32 %v315, %v317
  %v319 = vrot.slane %v311, %v318
  %v321 = vunpack.c.l.s4 1983009808
  %v322 = vunpack.c.0.s8 %v321
  %v323 = vlaneseq
  %v324 = vshrl.u32 %v323, 7
  %v325 = vsub.s32 %v322, %v324
  %v326 = vrot.slane %v312, %v325
  %v327 = vcombine.low %v319, %v326
  %v332 = vadd.f32 %v184, %v276
  %v333 = vadd.f32 %v185, %v293
  %v334 = vadd.f32 %v186, %v310
  %v335 = vadd.f32 %v187, %v327
  %v340 = vcombine.high %v332, %v332
  %v342 = vunpack.c.l.s4 1983009808
  %v343 = vunpack.c.0.s8 %v342
  %v344 = vlaneseq
  %v345 = vshrl.u32 %v344, 7
  %v346 = vsub.s32 %v343, %v345
  %v347 = vrot.slane %v332, %v346
  %v349 = vunpack.c.l.s4 1983009808
  %v350 = vunpack.c.0.s8 %v349
  %v351 = vlaneseq
  %v352 = vshrl.u32 %v351, 7
  %v353 = vsub.s32 %v350, %v352
  %v354 = vrot.slane %v340, %v353
  %v355 = vcombine.high %v347, %v347
  %v356 = vcombine.high %v354, %v354
  %v357 = vcombine.high %v333, %v333
  %v359 = vunpack.c.l.s4 1983009808
  %v360 = vunpack.c.0.s8 %v359
  %v361 = vlaneseq
  %v362 = vshrl.u32 %v361, 7
  %v363 = vsub.s32 %v360, %v362
  %v364 = vrot.slane %v333, %v363
  %v366 = vunpack.c.l.s4 1983009808
  %v367 = vunpack.c.0.s8 %v366
  %v368 = vlaneseq
  %v369 = vshrl.u32 %v368, 7
  %v370 = vsub.s32 %v367, %v369
  %v371 = vrot.slane %v357, %v370
  %v372 = vcombine.high %v364, %v364
  %v373 = vcombine.high %v371, %v371
  %v374 = vcombine.high %v334, %v334
  %v376 = vunpack.c.l.s4 1983009808
  %v377 = vunpack.c.0.s8 %v376
  %v378 = vlaneseq
  %v379 = vshrl.u32 %v378, 7
  %v380 = vsub.s32 %v377, %v379
  %v381 = vrot.slane %v334, %v380
  %v383 = vunpack.c.l.s4 1983009808
  %v384 = vunpack.c.0.s8 %v383
  %v385 = vlaneseq
  %v386 = vshrl.u32 %v385, 7
  %v387 = vsub.s32 %v384, %v386
  %v388 = vrot.slane %v374, %v387
  %v389 = vcombine.high %v381, %v381
  %v390 = vcombine.high %v388, %v388
  %v391 = vcombine.high %v335, %v335
  %v393 = vunpack.c.l.s4 1983009808
  %v394 = vunpack.c.0.s8 %v393
  %v395 = vlaneseq
  %v396 = vshrl.u32 %v395, 7
  %v397 = vsub.s32 %v394, %v396
  %v398 = vrot.slane %v335, %v397
  %v400 = vunpack.c.l.s4 1983009808
  %v401 = vunpack.c.0.s8 %v400
  %v402 = vlaneseq
  %v403 = vshrl.u32 %v402, 7
  %v404 = vsub.s32 %v401, %v403
  %v405 = vrot.slane %v391, %v404
  %v406 = vcombine.high %v398, %v398
  %v407 = vcombine.high %v405, %v405
  %v408 = vcombine.low %v381, %v389
  %v409 = vcombine.low %v388, %v390
  %v411 = vunpack.c.l.s4 1983009808
  %v412 = vunpack.c.0.s8 %v411
  %v413 = vlaneseq
  %v414 = vshrl.u32 %v413, 7
  %v415 = vsub.s32 %v412, %v414
  %v416 = vrot.slane %v408, %v415
  %v418 = vunpack.c.l.s4 1983009808
  %v419 = vunpack.c.0.s8 %v418
  %v420 = vlaneseq
  %v421 = vshrl.u32 %v420, 7
  %v422 = vsub.s32 %v419, %v421
  %v423 = vrot.slane %v409, %v422
  %v424 = vcombine.low %v416, %v423
  %v425 = vcombine.low %v398, %v406
  %v426 = vcombine.low %v405, %v407
  %v428 = vunpack.c.l.s4 1983009808
  %v429 = vunpack.c.0.s8 %v428
  %v430 = vlaneseq
  %v431 = vshrl.u32 %v430, 7
  %v432 = vsub.s32 %v429, %v431
  %v433 = vrot.slane %v425, %v432
  %v435 = vunpack.c.l.s4 1983009808
  %v436 = vunpack.c.0.s8 %v435
  %v437 = vlaneseq
  %v438 = vshrl.u32 %v437, 7
  %v439 = vsub.s32 %v436, %v438
  %v440 = vrot.slane %v426, %v439
  %v441 = vcombine.low %v433, %v440
  %v442 = vcombine.low %v347, %v355
  %v443 = vcombine.low %v354, %v356
  %v445 = vunpack.c.l.s4 1983009808
  %v446 = vunpack.c.0.s8 %v445
  %v447 = vlaneseq
  %v448 = vshrl.u32 %v447, 7
  %v449 = vsub.s32 %v446, %v448
  %v450 = vrot.slane %v442, %v449
  %v452 = vunpack.c.l.s4 1983009808
  %v453 = vunpack.c.0.s8 %v452
  %v454 = vlaneseq
  %v455 = vshrl.u32 %v454, 7
  %v456 = vsub.s32 %v453, %v455
  %v457 = vrot.slane %v443, %v456
  %v458 = vcombine.low %v450, %v457
  %v459 = vcombine.low %v364, %v372
  %v460 = vcombine.low %v371, %v373
  %v462 = vunpack.c.l.s4 1983009808
  %v463 = vunpack.c.0.s8 %v462
  %v464 = vlaneseq
  %v465 = vshrl.u32 %v464, 7
  %v466 = vsub.s32 %v463, %v465
  %v467 = vrot.slane %v459, %v466
  %v469 = vunpack.c.l.s4 1983009808
  %v470 = vunpack.c.0.s8 %v469
  %v471 = vlaneseq
  %v472 = vshrl.u32 %v471, 7
  %v473 = vsub.s32 %v470, %v472
  %v474 = vrot.slane %v460, %v473
  %v475 = vcombine.low %v467, %v474
  %v480 = vadd.f32 %v332, %v424
  %v481 = vadd.f32 %v333, %v441
  %v482 = vadd.f32 %v334, %v458
  %v483 = vadd.f32 %v335, %v475
  %v484 = vmul.f32 %v480, 0.125
  %v485 = vmul.f32 %v481, 0.125
  %v486 = vmul.f32 %v482, 0.125
  %v487 = vmul.f32 %v483, 0.125
  %v488 = vsub.f32 %v36, %v484
  %v489 = vsub.f32 %v37, %v485
  %v490 = vsub.f32 %v38, %v486
  %v491 = vsub.f32 %v39, %v487
  %v492 = vmul.f32 %v488, %v488
  %v493 = vmul.f32 %v489, %v489
  %v494 = vmul.f32 %v490, %v490
  %v495 = vmul.f32 %v491, %v491
  %v500 = vcombine.high %v492, %v492
  %v502 = vunpack.c.l.s4 1983009808
  %v503 = vunpack.c.0.s8 %v502
  %v504 = vlaneseq
  %v505 = vshrl.u32 %v504, 7
  %v506 = vsub.s32 %v503, %v505
  %v507 = vrot.slane %v492, %v506
  %v509 = vunpack.c.l.s4 1983009808
  %v510 = vunpack.c.0.s8 %v509
  %v511 = vlaneseq
  %v512 = vshrl.u32 %v511, 7
  %v513 = vsub.s32 %v510, %v512
  %v514 = vrot.slane %v500, %v513
  %v515 = vcombine.high %v507, %v507
  %v516 = vcombine.high %v514, %v514
  %v517 = vcombine.high %v493, %v493
  %v519 = vunpack.c.l.s4 1983009808
  %v520 = vunpack.c.0.s8 %v519
  %v521 = vlaneseq
  %v522 = vshrl.u32 %v521, 7
  %v523 = vsub.s32 %v520, %v522
  %v524 = vrot.slane %v493, %v523
  %v526 = vunpack.c.l.s4 1983009808
  %v527 = vunpack.c.0.s8 %v526
  %v528 = vlaneseq
  %v529 = vshrl.u32 %v528, 7
  %v530 = vsub.s32 %v527, %v529
  %v531 = vrot.slane %v517, %v530
  %v532 = vcombine.high %v524, %v524
  %v533 = vcombine.high %v531, %v531
  %v534 = vcombine.high %v494, %v494
  %v536 = vunpack.c.l.s4 1983009808
  %v537 = vunpack.c.0.s8 %v536
  %v538 = vlaneseq
  %v539 = vshrl.u32 %v538, 7
  %v540 = vsub.s32 %v537, %v539
  %v541 = vrot.slane %v494, %v540
  %v543 = vunpack.c.l.s4 1983009808
  %v544 = vunpack.c.0.s8 %v543
  %v545 = vlaneseq
  %v546 = vshrl.u32 %v545, 7
  %v547 = vsub.s32 %v544, %v546
  %v548 = vrot.slane %v534, %v547
  %v549 = vcombine.high %v541, %v541
  %v550 = vcombine.high %v548, %v548
  %v551 = vcombine.high %v495, %v495
  %v553 = vunpack.c.l.s4 1983009808
  %v554 = vunpack.c.0.s8 %v553
  %v555 = vlaneseq
  %v556 = vshrl.u32 %v555, 7
  %v557 = vsub.s32 %v554, %v556
  %v558 = vrot.slane %v495, %v557
  %v560 = vunpack.c.l.s4 1983009808
  %v561 = vunpack.c.0.s8 %v560
  %v562 = vlaneseq
  %v563 = vshrl.u32 %v562, 7
  %v564 = vsub.s32 %v561, %v563
  %v565 = vrot.slane %v551, %v564
  %v566 = vcombine.high %v558, %v558
  %v567 = vcombine.high %v565, %v565
  %v568 = vcombine.low %v565, %v567
  %v569 = vcombine.low %v507, %v515
  %v571 = vunpack.c.l.s4 1983009808
  %v572 = vunpack.c.0.s8 %v571
  %v573 = vlaneseq
  %v574 = vshrl.u32 %v573, 7
  %v575 = vsub.s32 %v572, %v574
  %v576 = vrot.slane %v568, %v575
  %v578 = vunpack.c.l.s4 1983009808
  %v579 = vunpack.c.0.s8 %v578
  %v580 = vlaneseq
  %v581 = vshrl.u32 %v580, 7
  %v582 = vsub.s32 %v579, %v581
  %v583 = vrot.slane %v569, %v582
  %v584 = vcombine.low %v576, %v583
  %v585 = vcombine.low %v514, %v516
  %v586 = vcombine.low %v524, %v532
  %v588 = vunpack.c.l.s4 1983009808
  %v589 = vunpack.c.0.s8 %v588
  %v590 = vlaneseq
  %v591 = vshrl.u32 %v590, 7
  %v592 = vsub.s32 %v589, %v591
  %v593 = vrot.slane %v585, %v592
  %v595 = vunpack.c.l.s4 1983009808
  %v596 = vunpack.c.0.s8 %v595
  %v597 = vlaneseq
  %v598 = vshrl.u32 %v597, 7
  %v599 = vsub.s32 %v596, %v598
  %v600 = vrot.slane %v586, %v599
  %v601 = vcombine.low %v593, %v600
  %v602 = vcombine.low %v531, %v533
  %v603 = vcombine.low %v541, %v549
  %v605 = vunpack.c.l.s4 1983009808
  %v606 = vunpack.c.0.s8 %v605
  %v607 = vlaneseq
  %v608 = vshrl.u32 %v607, 7
  %v609 = vsub.s32 %v606, %v608
  %v610 = vrot.slane %v602, %v609
  %v612 = vunpack.c.l.s4 1983009808
  %v613 = vunpack.c.0.s8 %v612
  %v614 = vlaneseq
  %v615 = vshrl.u32 %v614, 7
  %v616 = vsub.s32 %v613, %v615
  %v617 = vrot.slane %v603, %v616
  %v618 = vcombine.low %v610, %v617
  %v619 = vcombine.low %v548, %v550
  %v620 = vcombine.low %v558, %v566
  %v622 = vunpack.c.l.s4 1983009808
  %v623 = vunpack.c.0.s8 %v622
  %v624 = vlaneseq
  %v625 = vshrl.u32 %v624, 7
  %v626 = vsub.s32 %v623, %v625
  %v627 = vrot.slane %v619, %v626
  %v629 = vunpack.c.l.s4 1983009808
  %v630 = vunpack.c.0.s8 %v629
  %v631 = vlaneseq
  %v632 = vshrl.u32 %v631, 7
  %v633 = vsub.s32 %v630, %v632
  %v634 = vrot.slane %v620, %v633
  %v635 = vcombine.low %v627, %v634
  %v640 = vadd.f32 %v492, %v584
  %v641 = vadd.f32 %v493, %v601
  %v642 = vadd.f32 %v494, %v618
  %v643 = vadd.f32 %v495, %v635
  %v648 = vcombine.high %v640, %v640
  %v650 = vunpack.c.l.s4 1983009808
  %v651 = vunpack.c.0.s8 %v650
  %v652 = vlaneseq
  %v653 = vshrl.u32 %v652, 7
  %v654 = vsub.s32 %v651, %v653
  %v655 = vrot.slane %v640, %v654
  %v657 = vunpack.c.l.s4 1983009808
  %v658 = vunpack.c.0.s8 %v657
  %v659 = vlaneseq
  %v660 = vshrl.u32 %v659, 7
  %v661 = vsub.s32 %v658, %v660
  %v662 = vrot.slane %v648, %v661
  %v663 = vcombine.high %v655, %v655
  %v664 = vcombine.high %v662, %v662
  %v665 = vcombine.high %v641, %v641
  %v667 = vunpack.c.l.s4 1983009808
  %v668 = vunpack.c.0.s8 %v667
  %v669 = vlaneseq
  %v670 = vshrl.u32 %v669, 7
  %v671 = vsub.s32 %v668, %v670
  %v672 = vrot.slane %v641, %v671
  %v674 = vunpack.c.l.s4 1983009808
  %v675 = vunpack.c.0.s8 %v674
  %v676 = vlaneseq
  %v677 = vshrl.u32 %v676, 7
  %v678 = vsub.s32 %v675, %v677
  %v679 = vrot.slane %v665, %v678
  %v680 = vcombine.high %v672, %v672
  %v681 = vcombine.high %v679, %v679
  %v682 = vcombine.high %v642, %v642
  %v684 = vunpack.c.l.s4 1983009808
  %v685 = vunpack.c.0.s8 %v684
  %v686 = vlaneseq
  %v687 = vshrl.u32 %v686, 7
  %v688 = vsub.s32 %v685, %v687
  %v689 = vrot.slane %v642, %v688
  %v691 = vunpack.c.l.s4 1983009808
  %v692 = vunpack.c.0.s8 %v691
  %v693 = vlaneseq
  %v694 = vshrl.u32 %v693, 7
  %v695 = vsub.s32 %v692, %v694
  %v696 = vrot.slane %v682, %v695
  %v697 = vcombine.high %v689, %v689
  %v698 = vcombine.high %v696, %v696
  %v699 = vcombine.high %v643, %v643
  %v701 = vunpack.c.l.s4 1983009808
  %v702 = vunpack.c.0.s8 %v701
  %v703 = vlaneseq
  %v704 = vshrl.u32 %v703, 7
  %v705 = vsub.s32 %v702, %v704
  %v706 = vrot.slane %v643, %v705
  %v708 = vunpack.c.l.s4 1983009808
  %v709 = vunpack.c.0.s8 %v708
  %v710 = vlaneseq
  %v711 = vshrl.u32 %v710, 7
  %v712 = vsub.s32 %v709, %v711
  %v713 = vrot.slane %v699, %v712
  %v714 = vcombine.high %v706, %v706
  %v715 = vcombine.high %v713, %v713
  %v716 = vcombine.low %v706, %v714
  %v717 = vcombine.low %v713, %v715
  %v719 = vunpack.c.l.s4 1983009808
  %v720 = vunpack.c.0.s8 %v719
  %v721 = vlaneseq
  %v722 = vshrl.u32 %v721, 7
  %v723 = vsub.s32 %v720, %v722
  %v724 = vrot.slane %v716, %v723
  %v726 = vunpack.c.l.s4 1983009808
  %v727 = vunpack.c.0.s8 %v726
  %v728 = vlaneseq
  %v729 = vshrl.u32 %v728, 7
  %v730 = vsub.s32 %v727, %v729
  %v731 = vrot.slane %v717, %v730
  %v732 = vcombine.low %v724, %v731
  %v733 = vcombine.low %v655, %v663
  %v734 = vcombine.low %v662, %v664
  %v736 = vunpack.c.l.s4 1983009808
  %v737 = vunpack.c.0.s8 %v736
  %v738 = vlaneseq
  %v739 = vshrl.u32 %v738, 7
  %v740 = vsub.s32 %v737, %v739
  %v741 = vrot.slane %v733, %v740
  %v743 = vunpack.c.l.s4 1983009808
  %v744 = vunpack.c.0.s8 %v743
  %v745 = vlaneseq
  %v746 = vshrl.u32 %v745, 7
  %v747 = vsub.s32 %v744, %v746
  %v748 = vrot.slane %v734, %v747
  %v749 = vcombine.low %v741, %v748
  %v750 = vcombine.low %v672, %v680
  %v751 = vcombine.low %v679, %v681
  %v753 = vunpack.c.l.s4 1983009808
  %v754 = vunpack.c.0.s8 %v753
  %v755 = vlaneseq
  %v756 = vshrl.u32 %v755, 7
  %v757 = vsub.s32 %v754, %v756
  %v758 = vrot.slane %v750, %v757
  %v760 = vunpack.c.l.s4 1983009808
  %v761 = vunpack.c.0.s8 %v760
  %v762 = vlaneseq
  %v763 = vshrl.u32 %v762, 7
  %v764 = vsub.s32 %v761, %v763
  %v765 = vrot.slane %v751, %v764
  %v766 = vcombine.low %v758, %v765
  %v767 = vcombine.low %v689, %v697
  %v768 = vcombine.low %v696, %v698
  %v770 = vunpack.c.l.s4 1983009808
  %v771 = vunpack.c.0.s8 %v770
  %v772 = vlaneseq
  %v773 = vshrl.u32 %v772, 7
  %v774 = vsub.s32 %v771, %v773
  %v775 = vrot.slane %v767, %v774
  %v777 = vunpack.c.l.s4 1983009808
  %v778 = vunpack.c.0.s8 %v777
  %v779 = vlaneseq
  %v780 = vshrl.u32 %v779, 7
  %v781 = vsub.s32 %v778, %v780
  %v782 = vrot.slane %v768, %v781
  %v783 = vcombine.low %v775, %v782
  %v788 = vadd.f32 %v640, %v732
  %v789 = vadd.f32 %v641, %v749
  %v790 = vadd.f32 %v642, %v766
  %v791 = vadd.f32 %v643, %v783
  %v796 = vcombine.high %v788, %v788
  %v798 = vunpack.c.l.s4 1983009808
  %v799 = vunpack.c.0.s8 %v798
  %v800 = vlaneseq
  %v801 = vshrl.u32 %v800, 7
  %v802 = vsub.s32 %v799, %v801
  %v803 = vrot.slane %v788, %v802
  %v805 = vunpack.c.l.s4 1983009808
  %v806 = vunpack.c.0.s8 %v805
  %v807 = vlaneseq
  %v808 = vshrl.u32 %v807, 7
  %v809 = vsub.s32 %v806, %v808
  %v810 = vrot.slane %v796, %v809
  %v811 = vcombine.high %v803, %v803
  %v812 = vcombine.high %v810, %v810
  %v813 = vcombine.high %v789, %v789
  %v815 = vunpack.c.l.s4 1983009808
  %v816 = vunpack.c.0.s8 %v815
  %v817 = vlaneseq
  %v818 = vshrl.u32 %v817, 7
  %v819 = vsub.s32 %v816, %v818
  %v820 = vrot.slane %v789, %v819
  %v822 = vunpack.c.l.s4 1983009808
  %v823 = vunpack.c.0.s8 %v822
  %v824 = vlaneseq
  %v825 = vshrl.u32 %v824, 7
  %v826 = vsub.s32 %v823, %v825
  %v827 = vrot.slane %v813, %v826
  %v828 = vcombine.high %v820, %v820
  %v829 = vcombine.high %v827, %v827
  %v830 = vcombine.high %v790, %v790
  %v832 = vunpack.c.l.s4 1983009808
  %v833 = vunpack.c.0.s8 %v832
  %v834 = vlaneseq
  %v835 = vshrl.u32 %v834, 7
  %v836 = vsub.s32 %v833, %v835
  %v837 = vrot.slane %v790, %v836
  %v839 = vunpack.c.l.s4 1983009808
  %v840 = vunpack.c.0.s8 %v839
  %v841 = vlaneseq
  %v842 = vshrl.u32 %v841, 7
  %v843 = vsub.s32 %v840, %v842
  %v844 = vrot.slane %v830, %v843
  %v845 = vcombine.high %v837, %v837
  %v846 = vcombine.high %v844, %v844
  %v847 = vcombine.high %v791, %v791
  %v849 = vunpack.c.l.s4 1983009808
  %v850 = vunpack.c.0.s8 %v849
  %v851 = vlaneseq
  %v852 = vshrl.u32 %v851, 7
  %v853 = vsub.s32 %v850, %v852
  %v854 = vrot.slane %v791, %v853
  %v856 = vunpack.c.l.s4 1983009808
  %v857 = vunpack.c.0.s8 %v856
  %v858 = vlaneseq
  %v859 = vshrl.u32 %v858, 7
  %v860 = vsub.s32 %v857, %v859
  %v861 = vrot.slane %v847, %v860
  %v862 = vcombine.high %v854, %v854
  %v863 = vcombine.high %v861, %v861
  %v864 = vcombine.low %v837, %v845
  %v865 = vcombine.low %v844, %v846
  %v867 = vunpack.c.l.s4 1983009808
  %v868 = vunpack.c.0.s8 %v867
  %v869 = vlaneseq
  %v870 = vshrl.u32 %v869, 7
  %v871 = vsub.s32 %v868, %v870
  %v872 = vrot.slane %v864, %v871
  %v874 = vunpack.c.l.s4 1983009808
  %v875 = vunpack.c.0.s8 %v874
  %v876 = vlaneseq
  %v877 = vshrl.u32 %v876, 7
  %v878 = vsub.s32 %v875, %v877
  %v879 = vrot.slane %v865, %v878
  %v880 = vcombine.low %v872, %v879
  %v881 = vcombine.low %v854, %v862
  %v882 = vcombine.low %v861, %v863
  %v884 = vunpack.c.l.s4 1983009808
  %v885 = vunpack.c.0.s8 %v884
  %v886 = vlaneseq
  %v887 = vshrl.u32 %v886, 7
  %v888 = vsub.s32 %v885, %v887
  %v889 = vrot.slane %v881, %v888
  %v891 = vunpack.c.l.s4 1983009808
  %v892 = vunpack.c.0.s8 %v891
  %v893 = vlaneseq
  %v894 = vshrl.u32 %v893, 7
  %v895 = vsub.s32 %v892, %v894
  %v896 = vrot.slane %v882, %v895
  %v897 = vcombine.low %v889, %v896
  %v898 = vcombine.low %v803, %v811
  %v899 = vcombine.low %v810, %v812
  %v901 = vunpack.c.l.s4 1983009808
  %v902 = vunpack.c.0.s8 %v901
  %v903 = vlaneseq
  %v904 = vshrl.u32 %v903, 7
  %v905 = vsub.s32 %v902, %v904
  %v906 = vrot.slane %v898, %v905
  %v908 = vunpack.c.l.s4 1983009808
  %v909 = vunpack.c.0.s8 %v908
  %v910 = vlaneseq
  %v911 = vshrl.u32 %v910, 7
  %v912 = vsub.s32 %v909, %v911
  %v913 = vrot.slane %v899, %v912
  %v914 = vcombine.low %v906, %v913
  %v915 = vcombine.low %v820, %v828
  %v916 = vcombine.low %v827, %v829
  %v918 = vunpack.c.l.s4 1983009808
  %v919 = vunpack.c.0.s8 %v918
  %v920 = vlaneseq
  %v921 = vshrl.u32 %v920, 7
  %v922 = vsub.s32 %v919, %v921
  %v923 = vrot.slane %v915, %v922
  %v925 = vunpack.c.l.s4 1983009808
  %v926 = vunpack.c.0.s8 %v925
  %v927 = vlaneseq
  %v928 = vshrl.u32 %v927, 7
  %v929 = vsub.s32 %v926, %v928
  %v930 = vrot.slane %v916, %v929
  %v931 = vcombine.low %v923, %v930
  %v936 = vadd.f32 %v788, %v880
  %v937 = vadd.f32 %v789, %v897
  %v938 = vadd.f32 %v790, %v914
  %v939 = vadd.f32 %v791, %v931
  %v940 = vmul.f32 %v936, 0.125
  %v941 = vmul.f32 %v937, 0.125
  %v942 = vmul.f32 %v938, 0.125
  %v943 = vmul.f32 %v939, 0.125
  %v944 = vadd.f32 %v940, 1e-05
  %v945 = vadd.f32 %v941, 1e-05
  %v946 = vadd.f32 %v942, 1e-05
  %v947 = vadd.f32 %v943, 1e-05
  %v948 = vrsqrt.pop %v944
  %v949 = vrsqrt.pop %v945
  %v950 = vrsqrt.pop %v946
  %v951 = vrsqrt.pop %v947
  %v952 = vmul.f32 %v488, %v948
  %v953 = vmul.f32 %v489, %v949
  %v954 = vmul.f32 %v490, %v950
  %v955 = vmul.f32 %v491, %v951
  %v960 = vcombine.high %v952, %v952
  %v962 = vunpack.c.l.s4 1983009808
  %v963 = vunpack.c.0.s8 %v962
  %v964 = vlaneseq
  %v965 = vshrl.u32 %v964, 7
  %v966 = vsub.s32 %v963, %v965
  %v967 = vrot.slane %v952, %v966
  %v969 = vunpack.c.l.s4 1983009808
  %v970 = vunpack.c.0.s8 %v969
  %v971 = vlaneseq
  %v972 = vshrl.u32 %v971, 7
  %v973 = vsub.s32 %v970, %v972
  %v974 = vrot.slane %v960, %v973
  %v975 = vcombine.high %v967, %v967
  %v976 = vcombine.high %v974, %v974
  %v977 = vcombine.high %v953, %v953
  %v979 = vunpack.c.l.s4 1983009808
  %v980 = vunpack.c.0.s8 %v979
  %v981 = vlaneseq
  %v982 = vshrl.u32 %v981, 7
  %v983 = vsub.s32 %v980, %v982
  %v984 = vrot.slane %v953, %v983
  %v986 = vunpack.c.l.s4 1983009808
  %v987 = vunpack.c.0.s8 %v986
  %v988 = vlaneseq
  %v989 = vshrl.u32 %v988, 7
  %v990 = vsub.s32 %v987, %v989
  %v991 = vrot.slane %v977, %v990
  %v992 = vcombine.high %v984, %v984
  %v993 = vcombine.high %v991, %v991
  %v994 = vcombine.high %v954, %v954
  %v996 = vunpack.c.l.s4 1983009808
  %v997 = vunpack.c.0.s8 %v996
  %v998 = vlaneseq
  %v999 = vshrl.u32 %v998, 7
  %v1000 = vsub.s32 %v997, %v999
  %v1001 = vrot.slane %v954, %v1000
  %v1003 = vunpack.c.l.s4 1983009808
  %v1004 = vunpack.c.0.s8 %v1003
  %v1005 = vlaneseq
  %v1006 = vshrl.u32 %v1005, 7
  %v1007 = vsub.s32 %v1004, %v1006
  %v1008 = vrot.slane %v994, %v1007
  %v1009 = vcombine.high %v1001, %v1001
  %v1010 = vcombine.high %v1008, %v1008
  %v1011 = vcombine.high %v955, %v955
  %v1013 = vunpack.c.l.s4 1983009808
  %v1014 = vunpack.c.0.s8 %v1013
  %v1015 = vlaneseq
  %v1016 = vshrl.u32 %v1015, 7
  %v1017 = vsub.s32 %v1014, %v1016
  %v1018 = vrot.slane %v955, %v1017
  %v1020 = vunpack.c.l.s4 1983009808
  %v1021 = vunpack.c.0.s8 %v1020
  %v1022 = vlaneseq
  %v1023 = vshrl.u32 %v1022, 7
  %v1024 = vsub.s32 %v1021, %v1023
  %v1025 = vrot.slane %v1011, %v1024
  %v1026 = vcombine.high %v1018, %v1018
  %v1027 = vcombine.high %v1025, %v1025
  %v1044 = vpack.c.bf16 %v967, %v967
  %v1045 = vpack.c.bf16 %v975, %v975
  %v1046 = vpack.c.bf16 %v974, %v974
  %v1047 = vpack.c.bf16 %v976, %v976
  %v1048 = vpack.c.bf16 %v984, %v984
  %v1049 = vpack.c.bf16 %v992, %v992
  %v1050 = vpack.c.bf16 %v991, %v991
  %v1051 = vpack.c.bf16 %v993, %v993
  %v1052 = vpack.c.bf16 %v1001, %v1001
  %v1053 = vpack.c.bf16 %v1009, %v1009
  %v1054 = vpack.c.bf16 %v1008, %v1008
  %v1055 = vpack.c.bf16 %v1010, %v1010
  %v1056 = vpack.c.bf16 %v1018, %v1018
  %v1057 = vpack.c.bf16 %v1026, %v1026
  %v1058 = vpack.c.bf16 %v1025, %v1025
  %v1059 = vpack.c.bf16 %v1027, %v1027
  %1076 = vrot.lane.b32.xlu0 %v1044, 127
  %v1077 = vpop.permute.xlu0 %1076
  %1078 = vrot.lane.b32.xlu0 %v1045, 127
  %v1079 = vpop.permute.xlu0 %1078
  %1080 = vrot.lane.b32.xlu0 %v1046, 127
  %v1081 = vpop.permute.xlu0 %1080
  %1082 = vrot.lane.b32.xlu0 %v1047, 127
  %v1083 = vpop.permute.xlu0 %1082
  %1084 = vrot.lane.b32.xlu0 %v1048, 127
  %v1085 = vpop.permute.xlu0 %1084
  %1086 = vrot.lane.b32.xlu0 %v1049, 127
  %v1087 = vpop.permute.xlu0 %1086
  %1088 = vrot.lane.b32.xlu0 %v1050, 127
  %v1089 = vpop.permute.xlu0 %1088
  %1090 = vrot.lane.b32.xlu0 %v1051, 127
  %v1091 = vpop.permute.xlu0 %1090
  %1092 = vrot.lane.b32.xlu0 %v1052, 127
  %v1093 = vpop.permute.xlu0 %1092
  %1094 = vrot.lane.b32.xlu0 %v1053, 127
  %v1095 = vpop.permute.xlu0 %1094
  %1096 = vrot.lane.b32.xlu0 %v1054, 127
  %v1097 = vpop.permute.xlu0 %1096
  %1098 = vrot.lane.b32.xlu0 %v1055, 127
  %v1099 = vpop.permute.xlu0 %1098
  %1100 = vrot.lane.b32.xlu0 %v1056, 127
  %v1101 = vpop.permute.xlu0 %1100
  %1102 = vrot.lane.b32.xlu0 %v1057, 127
  %v1103 = vpop.permute.xlu0 %1102
  %1104 = vrot.lane.b32.xlu0 %v1058, 127
  %v1105 = vpop.permute.xlu0 %1104
  %1106 = vrot.lane.b32.xlu0 %v1059, 127
  %v1107 = vpop.permute.xlu0 %1106
  %vm1108 = vcmask 1039360
  %v1109 = vsel %vm1108, %v1077, %v1079
  %v1110 = vsel %vm1108, %v1079, %v1081
  %v1111 = vsel %vm1108, %v1081, %v1083
  %v1112 = vsel %vm1108, %v1083, %v1085
  %v1113 = vsel %vm1108, %v1085, %v1087
  %v1114 = vsel %vm1108, %v1087, %v1089
  %v1115 = vsel %vm1108, %v1089, %v1091
  %v1116 = vsel %vm1108, %v1091, %v1093
  %v1117 = vsel %vm1108, %v1093, %v1095
  %v1118 = vsel %vm1108, %v1095, %v1097
  %v1119 = vsel %vm1108, %v1097, %v1099
  %v1120 = vsel %vm1108, %v1099, %v1101
  %v1121 = vsel %vm1108, %v1101, %v1103
  %v1122 = vsel %vm1108, %v1103, %v1105
  %v1123 = vsel %vm1108, %v1105, %v1107
  %vm1124 = vcmask 1039360
  %v1127 = vsel %vm1124, %v1107, %v1077
  %1128 = vrot.lane.b32.xlu0 %v1044, 126
  %v1129 = vpop.permute.xlu0 %1128
  %1130 = vrot.lane.b32.xlu0 %v1045, 126
  %v1131 = vpop.permute.xlu0 %1130
  %1132 = vrot.lane.b32.xlu0 %v1046, 126
  %v1133 = vpop.permute.xlu0 %1132
  %1134 = vrot.lane.b32.xlu0 %v1047, 126
  %v1135 = vpop.permute.xlu0 %1134
  %1136 = vrot.lane.b32.xlu0 %v1048, 126
  %v1137 = vpop.permute.xlu0 %1136
  %1138 = vrot.lane.b32.xlu0 %v1049, 126
  %v1139 = vpop.permute.xlu0 %1138
  %1140 = vrot.lane.b32.xlu0 %v1050, 126
  %v1141 = vpop.permute.xlu0 %1140
  %1142 = vrot.lane.b32.xlu0 %v1051, 126
  %v1143 = vpop.permute.xlu0 %1142
  %1144 = vrot.lane.b32.xlu0 %v1052, 126
  %v1145 = vpop.permute.xlu0 %1144
  %1146 = vrot.lane.b32.xlu0 %v1053, 126
  %v1147 = vpop.permute.xlu0 %1146
  %1148 = vrot.lane.b32.xlu0 %v1054, 126
  %v1149 = vpop.permute.xlu0 %1148
  %1150 = vrot.lane.b32.xlu0 %v1055, 126
  %v1151 = vpop.permute.xlu0 %1150
  %1152 = vrot.lane.b32.xlu0 %v1056, 126
  %v1153 = vpop.permute.xlu0 %1152
  %1154 = vrot.lane.b32.xlu0 %v1057, 126
  %v1155 = vpop.permute.xlu0 %1154
  %1156 = vrot.lane.b32.xlu0 %v1058, 126
  %v1157 = vpop.permute.xlu0 %1156
  %1158 = vrot.lane.b32.xlu0 %v1059, 126
  %v1159 = vpop.permute.xlu0 %1158
  %vm1160 = vcmask 1031168
  %v1161 = vsel %vm1160, %v1129, %v1131
  %v1162 = vsel %vm1160, %v1131, %v1133
  %v1163 = vsel %vm1160, %v1133, %v1135
  %v1164 = vsel %vm1160, %v1135, %v1137
  %v1165 = vsel %vm1160, %v1137, %v1139
  %v1166 = vsel %vm1160, %v1139, %v1141
  %v1167 = vsel %vm1160, %v1141, %v1143
  %v1168 = vsel %vm1160, %v1143, %v1145
  %v1169 = vsel %vm1160, %v1145, %v1147
  %v1170 = vsel %vm1160, %v1147, %v1149
  %v1171 = vsel %vm1160, %v1149, %v1151
  %v1172 = vsel %vm1160, %v1151, %v1153
  %v1173 = vsel %vm1160, %v1153, %v1155
  %v1174 = vsel %vm1160, %v1155, %v1157
  %v1175 = vsel %vm1160, %v1157, %v1159
  %vm1176 = vcmask 1031168
  %v1179 = vsel %vm1176, %v1159, %v1129
  %1180 = vrot.lane.b32.xlu0 %v1044, 125
  %v1181 = vpop.permute.xlu0 %1180
  %1182 = vrot.lane.b32.xlu0 %v1045, 125
  %v1183 = vpop.permute.xlu0 %1182
  %1184 = vrot.lane.b32.xlu0 %v1046, 125
  %v1185 = vpop.permute.xlu0 %1184
  %1186 = vrot.lane.b32.xlu0 %v1047, 125
  %v1187 = vpop.permute.xlu0 %1186
  %1188 = vrot.lane.b32.xlu0 %v1048, 125
  %v1189 = vpop.permute.xlu0 %1188
  %1190 = vrot.lane.b32.xlu0 %v1049, 125
  %v1191 = vpop.permute.xlu0 %1190
  %1192 = vrot.lane.b32.xlu0 %v1050, 125
  %v1193 = vpop.permute.xlu0 %1192
  %1194 = vrot.lane.b32.xlu0 %v1051, 125
  %v1195 = vpop.permute.xlu0 %1194
  %1196 = vrot.lane.b32.xlu0 %v1052, 125
  %v1197 = vpop.permute.xlu0 %1196
  %1198 = vrot.lane.b32.xlu0 %v1053, 125
  %v1199 = vpop.permute.xlu0 %1198
  %1200 = vrot.lane.b32.xlu0 %v1054, 125
  %v1201 = vpop.permute.xlu0 %1200
  %1202 = vrot.lane.b32.xlu0 %v1055, 125
  %v1203 = vpop.permute.xlu0 %1202
  %1204 = vrot.lane.b32.xlu0 %v1056, 125
  %v1205 = vpop.permute.xlu0 %1204
  %1206 = vrot.lane.b32.xlu0 %v1057, 125
  %v1207 = vpop.permute.xlu0 %1206
  %1208 = vrot.lane.b32.xlu0 %v1058, 125
  %v1209 = vpop.permute.xlu0 %1208
  %1210 = vrot.lane.b32.xlu0 %v1059, 125
  %v1211 = vpop.permute.xlu0 %1210
  %vm1212 = vcmask 1022976
  %v1213 = vsel %vm1212, %v1181, %v1183
  %v1214 = vsel %vm1212, %v1183, %v1185
  %v1215 = vsel %vm1212, %v1185, %v1187
  %v1216 = vsel %vm1212, %v1187, %v1189
  %v1217 = vsel %vm1212, %v1189, %v1191
  %v1218 = vsel %vm1212, %v1191, %v1193
  %v1219 = vsel %vm1212, %v1193, %v1195
  %v1220 = vsel %vm1212, %v1195, %v1197
  %v1221 = vsel %vm1212, %v1197, %v1199
  %v1222 = vsel %vm1212, %v1199, %v1201
  %v1223 = vsel %vm1212, %v1201, %v1203
  %v1224 = vsel %vm1212, %v1203, %v1205
  %v1225 = vsel %vm1212, %v1205, %v1207
  %v1226 = vsel %vm1212, %v1207, %v1209
  %v1227 = vsel %vm1212, %v1209, %v1211
  %vm1228 = vcmask 1022976
  %v1231 = vsel %vm1228, %v1211, %v1181
  %v1233 = vrot.slane %v1109, 7
  %v1234 = vrot.slane %v1110, 7
  %v1235 = vrot.slane %v1111, 7
  %v1236 = vrot.slane %v1112, 7
  %v1237 = vrot.slane %v1113, 7
  %v1238 = vrot.slane %v1114, 7
  %v1239 = vrot.slane %v1115, 7
  %v1240 = vrot.slane %v1116, 7
  %v1241 = vrot.slane %v1117, 7
  %v1242 = vrot.slane %v1118, 7
  %v1243 = vrot.slane %v1119, 7
  %v1244 = vrot.slane %v1120, 7
  %v1245 = vrot.slane %v1121, 7
  %v1246 = vrot.slane %v1122, 7
  %v1247 = vrot.slane %v1123, 7
  %v1248 = vrot.slane %v1127, 7
  %v1250 = vrot.slane %v1161, 6
  %v1251 = vrot.slane %v1162, 6
  %v1252 = vrot.slane %v1163, 6
  %v1253 = vrot.slane %v1164, 6
  %v1254 = vrot.slane %v1165, 6
  %v1255 = vrot.slane %v1166, 6
  %v1256 = vrot.slane %v1167, 6
  %v1257 = vrot.slane %v1168, 6
  %v1258 = vrot.slane %v1169, 6
  %v1259 = vrot.slane %v1170, 6
  %v1260 = vrot.slane %v1171, 6
  %v1261 = vrot.slane %v1172, 6
  %v1262 = vrot.slane %v1173, 6
  %v1263 = vrot.slane %v1174, 6
  %v1264 = vrot.slane %v1175, 6
  %v1265 = vrot.slane %v1179, 6
  %v1267 = vrot.slane %v1213, 5
  %v1268 = vrot.slane %v1214, 5
  %v1269 = vrot.slane %v1215, 5
  %v1270 = vrot.slane %v1216, 5
  %v1271 = vrot.slane %v1217, 5
  %v1272 = vrot.slane %v1218, 5
  %v1273 = vrot.slane %v1219, 5
  %v1274 = vrot.slane %v1220, 5
  %v1275 = vrot.slane %v1221, 5
  %v1276 = vrot.slane %v1222, 5
  %v1277 = vrot.slane %v1223, 5
  %v1278 = vrot.slane %v1224, 5
  %v1279 = vrot.slane %v1225, 5
  %v1280 = vrot.slane %v1226, 5
  %v1281 = vrot.slane %v1227, 5
  %v1282 = vrot.slane %v1231, 5
  %vm1283 = vcmask 1040384
  %v1286 = vsel %vm1283, %v1044, %v1233
  %v1289 = vsel %vm1283, %v1045, %v1234
  %v1292 = vsel %vm1283, %v1046, %v1235
  %v1295 = vsel %vm1283, %v1047, %v1236
  %v1298 = vsel %vm1283, %v1048, %v1237
  %v1301 = vsel %vm1283, %v1049, %v1238
  %v1304 = vsel %vm1283, %v1050, %v1239
  %v1307 = vsel %vm1283, %v1051, %v1240
  %v1310 = vsel %vm1283, %v1052, %v1241
  %v1313 = vsel %vm1283, %v1053, %v1242
  %v1316 = vsel %vm1283, %v1054, %v1243
  %v1319 = vsel %vm1283, %v1055, %v1244
  %v1322 = vsel %vm1283, %v1056, %v1245
  %v1325 = vsel %vm1283, %v1057, %v1246
  %v1328 = vsel %vm1283, %v1058, %v1247
  %v1331 = vsel %vm1283, %v1059, %v1248
  %vm1332 = vcmask 1041408
  %v1334 = vsel %vm1332, %v1286, %v1250
  %v1336 = vsel %vm1332, %v1289, %v1251
  %v1338 = vsel %vm1332, %v1292, %v1252
  %v1340 = vsel %vm1332, %v1295, %v1253
  %v1342 = vsel %vm1332, %v1298, %v1254
  %v1344 = vsel %vm1332, %v1301, %v1255
  %v1346 = vsel %vm1332, %v1304, %v1256
  %v1348 = vsel %vm1332, %v1307, %v1257
  %v1350 = vsel %vm1332, %v1310, %v1258
  %v1352 = vsel %vm1332, %v1313, %v1259
  %v1354 = vsel %vm1332, %v1316, %v1260
  %v1356 = vsel %vm1332, %v1319, %v1261
  %v1358 = vsel %vm1332, %v1322, %v1262
  %v1360 = vsel %vm1332, %v1325, %v1263
  %v1362 = vsel %vm1332, %v1328, %v1264
  %v1364 = vsel %vm1332, %v1331, %v1265
  %vm1365 = vcmask 1042432
  %v1367 = vsel %vm1365, %v1334, %v1267
  %v1369 = vsel %vm1365, %v1336, %v1268
  %v1371 = vsel %vm1365, %v1338, %v1269
  %v1373 = vsel %vm1365, %v1340, %v1270
  %v1375 = vsel %vm1365, %v1342, %v1271
  %v1377 = vsel %vm1365, %v1344, %v1272
  %v1379 = vsel %vm1365, %v1346, %v1273
  %v1381 = vsel %vm1365, %v1348, %v1274
  %v1383 = vsel %vm1365, %v1350, %v1275
  %v1385 = vsel %vm1365, %v1352, %v1276
  %v1387 = vsel %vm1365, %v1354, %v1277
  %v1389 = vsel %vm1365, %v1356, %v1278
  %v1391 = vsel %vm1365, %v1358, %v1279
  %v1393 = vsel %vm1365, %v1360, %v1280
  %v1395 = vsel %vm1365, %v1362, %v1281
  %v1397 = vsel %vm1365, %v1364, %v1282
  %v1398 = vld [vmem:[%s1] sm:$0xf]
  %v1399 = vld [vmem:[%s1 + $0x4] sm:$0xf]
  %v1400 = vld [vmem:[%s1 + $0x8] sm:$0xf]
  %v1401 = vld [vmem:[%s1 + $0xc] sm:$0xf]
  %v1406 = vunpack.c.l.b16 %v1398
  %v1407 = vunpack.c.l.b16 %v1399
  %v1408 = vunpack.c.l.b16 %v1400
  %v1409 = vunpack.c.l.b16 %v1401
  %v1410 = vpack.c.b16 %v1407, %v1406
  %v1411 = vpack.c.b16 %v1409, %v1408
  %vm1412 = vcmask 64512
  %v1414 = vsel %vm1412, %v1410, 0
  %v1417 = vsel %vm1412, %v1411, 0
  %vm1419 = vcmask 1043456
  %v1420 = vsel %vm1419, %v1367, 0
  %v1422 = vsel %vm1419, %v1369, 0
  %v1424 = vsel %vm1419, %v1371, 0
  %v1426 = vsel %vm1419, %v1373, 0
  %v1428 = vsel %vm1419, %v1375, 0
  %v1430 = vsel %vm1419, %v1377, 0
  %v1432 = vsel %vm1419, %v1379, 0
  %v1434 = vsel %vm1419, %v1381, 0
  %v1436 = vsel %vm1419, %v1383, 0
  %v1438 = vsel %vm1419, %v1385, 0
  %v1440 = vsel %vm1419, %v1387, 0
  %v1442 = vsel %vm1419, %v1389, 0
  %v1444 = vsel %vm1419, %v1391, 0
  %v1446 = vsel %vm1419, %v1393, 0
  %v1448 = vsel %vm1419, %v1395, 0
  %v1450 = vsel %vm1419, %v1397, 0
  %1452 = vmatprep.subr.bf16.mxu0 0
  %1453 = vmatpush1.bf16.msra.mxu0 0
  %1454 = vmatprep.subr.bf16.mxu0 0
  %1455 = vmatpush1.bf16.msra.mxu0 0
  %1456 = vmatprep.subr.bf16.mxu0 0
  %1457 = vmatpush1.bf16.msra.mxu0 0
  %1458 = vmatprep.subr.bf16.mxu0 0
  %1459 = vmatpush1.bf16.msra.mxu0 0
  %1460 = vmatprep.subr.bf16.mxu0 0
  %1461 = vmatpush1.bf16.msra.mxu0 0
  %1462 = vmatprep.subr.bf16.mxu0 0
  %1463 = vmatpush1.bf16.msra.mxu0 0
  %1464 = vmatprep.subr.bf16.mxu0 0
  %1465 = vmatpush1.bf16.msra.mxu0 0
  %1466 = vmatprep.subr.bf16.mxu0 %v1422
  %1467 = vmatpush1.bf16.msra.mxu0 %v1420
  %1468 = vmatprep.subr.bf16.mxu0 0
  %1469 = vmatpush2.bf16.msra.mxu0 0
  %1470 = vmatprep.subr.bf16.mxu0 0
  %1471 = vmatpush2.bf16.msra.mxu0 0
  %1472 = vmatprep.subr.bf16.mxu0 0
  %1473 = vmatpush2.bf16.msra.mxu0 0
  %1474 = vmatprep.subr.bf16.mxu0 0
  %1475 = vmatpush2.bf16.msra.mxu0 0
  %1476 = vmatprep.subr.bf16.mxu0 0
  %1477 = vmatpush2.bf16.msra.mxu0 0
  %1478 = vmatprep.subr.bf16.mxu0 0
  %1479 = vmatpush2.bf16.msra.mxu0 0
  %1480 = vmatprep.subr.bf16.mxu0 0
  %1481 = vmatpush2.bf16.msra.mxu0 0
  %1482 = vmatprep.subr.bf16.mxu0 0
  %1483 = vmatpush2.bf16.msra.mxu0 0
  %1484 = vmatprep.mubr.bf16.mxu0 0
  %1485 = vmatmul.mubr.bf16.gmra.mxu0 %v1414
  %v1486 = vpop.f32.mrf.mxu0
  %v1487 = vadd.f32 0.0, %v1486
  %v1488 = vpop.f32.mrf.mxu0
  %v1489 = vadd.f32 0.0, %v1488
  %v1490 = vpop.f32.mrf.mxu0
  %v1491 = vadd.f32 0.0, %v1490
  %v1492 = vpop.f32.mrf.mxu0
  %v1493 = vadd.f32 0.0, %v1492
  %1494 = vmatprep.mubr.bf16.mxu0 0
  %1495 = vmatmul.mubr.bf16.gmra.mxu0 %v1417
  %v1496 = vpop.f32.mrf.mxu0
  %v1497 = vadd.f32 0.0, %v1496
  %v1498 = vpop.f32.mrf.mxu0
  %v1499 = vadd.f32 0.0, %v1498
  %v1500 = vpop.f32.mrf.mxu0
  %v1501 = vadd.f32 0.0, %v1500
  %v1502 = vpop.f32.mrf.mxu0
  %v1503 = vadd.f32 0.0, %v1502
  %1504 = vdwg.mxu0
  %1505 = vmatprep.subr.bf16.mxu0 0
  %1506 = vmatpush1.bf16.msra.mxu0 0
  %1507 = vmatprep.subr.bf16.mxu0 0
  %1508 = vmatpush1.bf16.msra.mxu0 0
  %1509 = vmatprep.subr.bf16.mxu0 0
  %1510 = vmatpush1.bf16.msra.mxu0 0
  %1511 = vmatprep.subr.bf16.mxu0 0
  %1512 = vmatpush1.bf16.msra.mxu0 0
  %1513 = vmatprep.subr.bf16.mxu0 0
  %1514 = vmatpush1.bf16.msra.mxu0 0
  %1515 = vmatprep.subr.bf16.mxu0 0
  %1516 = vmatpush1.bf16.msra.mxu0 0
  %1517 = vmatprep.subr.bf16.mxu0 0
  %1518 = vmatpush1.bf16.msra.mxu0 0
  %1519 = vmatprep.subr.bf16.mxu0 %v1426
  %1520 = vmatpush1.bf16.msra.mxu0 %v1424
  %1521 = vmatprep.subr.bf16.mxu0 0
  %1522 = vmatpush2.bf16.msra.mxu0 0
  %1523 = vmatprep.subr.bf16.mxu0 0
  %1524 = vmatpush2.bf16.msra.mxu0 0
  %1525 = vmatprep.subr.bf16.mxu0 0
  %1526 = vmatpush2.bf16.msra.mxu0 0
  %1527 = vmatprep.subr.bf16.mxu0 0
  %1528 = vmatpush2.bf16.msra.mxu0 0
  %1529 = vmatprep.subr.bf16.mxu0 0
  %1530 = vmatpush2.bf16.msra.mxu0 0
  %1531 = vmatprep.subr.bf16.mxu0 0
  %1532 = vmatpush2.bf16.msra.mxu0 0
  %1533 = vmatprep.subr.bf16.mxu0 0
  %1534 = vmatpush2.bf16.msra.mxu0 0
  %1535 = vmatprep.subr.bf16.mxu0 0
  %1536 = vmatpush2.bf16.msra.mxu0 0
  %1537 = vmatprep.mubr.bf16.mxu0 0
  %1538 = vmatmul.mubr.bf16.gmra.mxu0 %v1414
  %v1539 = vpop.f32.mrf.mxu0
  %v1540 = vadd.f32 0.0, %v1539
  %v1541 = vpop.f32.mrf.mxu0
  %v1542 = vadd.f32 0.0, %v1541
  %v1543 = vpop.f32.mrf.mxu0
  %v1544 = vadd.f32 0.0, %v1543
  %v1545 = vpop.f32.mrf.mxu0
  %v1546 = vadd.f32 0.0, %v1545
  %1547 = vmatprep.mubr.bf16.mxu0 0
  %1548 = vmatmul.mubr.bf16.gmra.mxu0 %v1417
  %v1549 = vpop.f32.mrf.mxu0
  %v1550 = vadd.f32 0.0, %v1549
  %v1551 = vpop.f32.mrf.mxu0
  %v1552 = vadd.f32 0.0, %v1551
  %v1553 = vpop.f32.mrf.mxu0
  %v1554 = vadd.f32 0.0, %v1553
  %v1555 = vpop.f32.mrf.mxu0
  %v1556 = vadd.f32 0.0, %v1555
  %1557 = vdwg.mxu0
  %1558 = vmatprep.subr.bf16.mxu0 0
  %1559 = vmatpush1.bf16.msra.mxu0 0
  %1560 = vmatprep.subr.bf16.mxu0 0
  %1561 = vmatpush1.bf16.msra.mxu0 0
  %1562 = vmatprep.subr.bf16.mxu0 0
  %1563 = vmatpush1.bf16.msra.mxu0 0
  %1564 = vmatprep.subr.bf16.mxu0 0
  %1565 = vmatpush1.bf16.msra.mxu0 0
  %1566 = vmatprep.subr.bf16.mxu0 0
  %1567 = vmatpush1.bf16.msra.mxu0 0
  %1568 = vmatprep.subr.bf16.mxu0 0
  %1569 = vmatpush1.bf16.msra.mxu0 0
  %1570 = vmatprep.subr.bf16.mxu0 0
  %1571 = vmatpush1.bf16.msra.mxu0 0
  %1572 = vmatprep.subr.bf16.mxu0 %v1430
  %1573 = vmatpush1.bf16.msra.mxu0 %v1428
  %1574 = vmatprep.subr.bf16.mxu0 0
  %1575 = vmatpush2.bf16.msra.mxu0 0
  %1576 = vmatprep.subr.bf16.mxu0 0
  %1577 = vmatpush2.bf16.msra.mxu0 0
  %1578 = vmatprep.subr.bf16.mxu0 0
  %1579 = vmatpush2.bf16.msra.mxu0 0
  %1580 = vmatprep.subr.bf16.mxu0 0
  %1581 = vmatpush2.bf16.msra.mxu0 0
  %1582 = vmatprep.subr.bf16.mxu0 0
  %1583 = vmatpush2.bf16.msra.mxu0 0
  %1584 = vmatprep.subr.bf16.mxu0 0
  %1585 = vmatpush2.bf16.msra.mxu0 0
  %1586 = vmatprep.subr.bf16.mxu0 0
  %1587 = vmatpush2.bf16.msra.mxu0 0
  %1588 = vmatprep.subr.bf16.mxu0 0
  %1589 = vmatpush2.bf16.msra.mxu0 0
  %1590 = vmatprep.mubr.bf16.mxu0 0
  %1591 = vmatmul.mubr.bf16.gmra.mxu0 %v1414
  %v1592 = vpop.f32.mrf.mxu0
  %v1593 = vadd.f32 0.0, %v1592
  %v1594 = vpop.f32.mrf.mxu0
  %v1595 = vadd.f32 0.0, %v1594
  %v1596 = vpop.f32.mrf.mxu0
  %v1597 = vadd.f32 0.0, %v1596
  %v1598 = vpop.f32.mrf.mxu0
  %v1599 = vadd.f32 0.0, %v1598
  %1600 = vmatprep.mubr.bf16.mxu0 0
  %1601 = vmatmul.mubr.bf16.gmra.mxu0 %v1417
  %v1602 = vpop.f32.mrf.mxu0
  %v1603 = vadd.f32 0.0, %v1602
  %v1604 = vpop.f32.mrf.mxu0
  %v1605 = vadd.f32 0.0, %v1604
  %v1606 = vpop.f32.mrf.mxu0
  %v1607 = vadd.f32 0.0, %v1606
  %v1608 = vpop.f32.mrf.mxu0
  %v1609 = vadd.f32 0.0, %v1608
  %1610 = vdwg.mxu0
  %1611 = vmatprep.subr.bf16.mxu0 0
  %1612 = vmatpush1.bf16.msra.mxu0 0
  %1613 = vmatprep.subr.bf16.mxu0 0
  %1614 = vmatpush1.bf16.msra.mxu0 0
  %1615 = vmatprep.subr.bf16.mxu0 0
  %1616 = vmatpush1.bf16.msra.mxu0 0
  %1617 = vmatprep.subr.bf16.mxu0 0
  %1618 = vmatpush1.bf16.msra.mxu0 0
  %1619 = vmatprep.subr.bf16.mxu0 0
  %1620 = vmatpush1.bf16.msra.mxu0 0
  %1621 = vmatprep.subr.bf16.mxu0 0
  %1622 = vmatpush1.bf16.msra.mxu0 0
  %1623 = vmatprep.subr.bf16.mxu0 0
  %1624 = vmatpush1.bf16.msra.mxu0 0
  %1625 = vmatprep.subr.bf16.mxu0 %v1434
  %1626 = vmatpush1.bf16.msra.mxu0 %v1432
  %1627 = vmatprep.subr.bf16.mxu0 0
  %1628 = vmatpush2.bf16.msra.mxu0 0
  %1629 = vmatprep.subr.bf16.mxu0 0
  %1630 = vmatpush2.bf16.msra.mxu0 0
  %1631 = vmatprep.subr.bf16.mxu0 0
  %1632 = vmatpush2.bf16.msra.mxu0 0
  %1633 = vmatprep.subr.bf16.mxu0 0
  %1634 = vmatpush2.bf16.msra.mxu0 0
  %1635 = vmatprep.subr.bf16.mxu0 0
  %1636 = vmatpush2.bf16.msra.mxu0 0
  %1637 = vmatprep.subr.bf16.mxu0 0
  %1638 = vmatpush2.bf16.msra.mxu0 0
  %1639 = vmatprep.subr.bf16.mxu0 0
  %1640 = vmatpush2.bf16.msra.mxu0 0
  %1641 = vmatprep.subr.bf16.mxu0 0
  %1642 = vmatpush2.bf16.msra.mxu0 0
  %1643 = vmatprep.mubr.bf16.mxu0 0
  %1644 = vmatmul.mubr.bf16.gmra.mxu0 %v1414
  %v1645 = vpop.f32.mrf.mxu0
  %v1646 = vadd.f32 0.0, %v1645
  %v1647 = vpop.f32.mrf.mxu0
  %v1648 = vadd.f32 0.0, %v1647
  %v1649 = vpop.f32.mrf.mxu0
  %v1650 = vadd.f32 0.0, %v1649
  %v1651 = vpop.f32.mrf.mxu0
  %v1652 = vadd.f32 0.0, %v1651
  %1653 = vmatprep.mubr.bf16.mxu0 0
  %1654 = vmatmul.mubr.bf16.gmra.mxu0 %v1417
  %v1655 = vpop.f32.mrf.mxu0
  %v1656 = vadd.f32 0.0, %v1655
  %v1657 = vpop.f32.mrf.mxu0
  %v1658 = vadd.f32 0.0, %v1657
  %v1659 = vpop.f32.mrf.mxu0
  %v1660 = vadd.f32 0.0, %v1659
  %v1661 = vpop.f32.mrf.mxu0
  %v1662 = vadd.f32 0.0, %v1661
  %1663 = vdwg.mxu0
  %1664 = vmatprep.subr.bf16.mxu0 0
  %1665 = vmatpush1.bf16.msra.mxu0 0
  %1666 = vmatprep.subr.bf16.mxu0 0
  %1667 = vmatpush1.bf16.msra.mxu0 0
  %1668 = vmatprep.subr.bf16.mxu0 0
  %1669 = vmatpush1.bf16.msra.mxu0 0
  %1670 = vmatprep.subr.bf16.mxu0 0
  %1671 = vmatpush1.bf16.msra.mxu0 0
  %1672 = vmatprep.subr.bf16.mxu0 0
  %1673 = vmatpush1.bf16.msra.mxu0 0
  %1674 = vmatprep.subr.bf16.mxu0 0
  %1675 = vmatpush1.bf16.msra.mxu0 0
  %1676 = vmatprep.subr.bf16.mxu0 0
  %1677 = vmatpush1.bf16.msra.mxu0 0
  %1678 = vmatprep.subr.bf16.mxu0 %v1438
  %1679 = vmatpush1.bf16.msra.mxu0 %v1436
  %1680 = vmatprep.subr.bf16.mxu0 0
  %1681 = vmatpush2.bf16.msra.mxu0 0
  %1682 = vmatprep.subr.bf16.mxu0 0
  %1683 = vmatpush2.bf16.msra.mxu0 0
  %1684 = vmatprep.subr.bf16.mxu0 0
  %1685 = vmatpush2.bf16.msra.mxu0 0
  %1686 = vmatprep.subr.bf16.mxu0 0
  %1687 = vmatpush2.bf16.msra.mxu0 0
  %1688 = vmatprep.subr.bf16.mxu0 0
  %1689 = vmatpush2.bf16.msra.mxu0 0
  %1690 = vmatprep.subr.bf16.mxu0 0
  %1691 = vmatpush2.bf16.msra.mxu0 0
  %1692 = vmatprep.subr.bf16.mxu0 0
  %1693 = vmatpush2.bf16.msra.mxu0 0
  %1694 = vmatprep.subr.bf16.mxu0 0
  %1695 = vmatpush2.bf16.msra.mxu0 0
  %1696 = vmatprep.mubr.bf16.mxu0 0
  %1697 = vmatmul.mubr.bf16.gmra.mxu0 %v1414
  %v1698 = vpop.f32.mrf.mxu0
  %v1699 = vadd.f32 0.0, %v1698
  %v1700 = vpop.f32.mrf.mxu0
  %v1701 = vadd.f32 0.0, %v1700
  %v1702 = vpop.f32.mrf.mxu0
  %v1703 = vadd.f32 0.0, %v1702
  %v1704 = vpop.f32.mrf.mxu0
  %v1705 = vadd.f32 0.0, %v1704
  %1706 = vmatprep.mubr.bf16.mxu0 0
  %1707 = vmatmul.mubr.bf16.gmra.mxu0 %v1417
  %v1708 = vpop.f32.mrf.mxu0
  %v1709 = vadd.f32 0.0, %v1708
  %v1710 = vpop.f32.mrf.mxu0
  %v1711 = vadd.f32 0.0, %v1710
  %v1712 = vpop.f32.mrf.mxu0
  %v1713 = vadd.f32 0.0, %v1712
  %v1714 = vpop.f32.mrf.mxu0
  %v1715 = vadd.f32 0.0, %v1714
  %1716 = vdwg.mxu0
  %1717 = vmatprep.subr.bf16.mxu0 0
  %1718 = vmatpush1.bf16.msra.mxu0 0
  %1719 = vmatprep.subr.bf16.mxu0 0
  %1720 = vmatpush1.bf16.msra.mxu0 0
  %1721 = vmatprep.subr.bf16.mxu0 0
  %1722 = vmatpush1.bf16.msra.mxu0 0
  %1723 = vmatprep.subr.bf16.mxu0 0
  %1724 = vmatpush1.bf16.msra.mxu0 0
  %1725 = vmatprep.subr.bf16.mxu0 0
  %1726 = vmatpush1.bf16.msra.mxu0 0
  %1727 = vmatprep.subr.bf16.mxu0 0
  %1728 = vmatpush1.bf16.msra.mxu0 0
  %1729 = vmatprep.subr.bf16.mxu0 0
  %1730 = vmatpush1.bf16.msra.mxu0 0
  %1731 = vmatprep.subr.bf16.mxu0 %v1442
  %1732 = vmatpush1.bf16.msra.mxu0 %v1440
  %1733 = vmatprep.subr.bf16.mxu0 0
  %1734 = vmatpush2.bf16.msra.mxu0 0
  %1735 = vmatprep.subr.bf16.mxu0 0
  %1736 = vmatpush2.bf16.msra.mxu0 0
  %1737 = vmatprep.subr.bf16.mxu0 0
  %1738 = vmatpush2.bf16.msra.mxu0 0
  %1739 = vmatprep.subr.bf16.mxu0 0
  %1740 = vmatpush2.bf16.msra.mxu0 0
  %1741 = vmatprep.subr.bf16.mxu0 0
  %1742 = vmatpush2.bf16.msra.mxu0 0
  %1743 = vmatprep.subr.bf16.mxu0 0
  %1744 = vmatpush2.bf16.msra.mxu0 0
  %1745 = vmatprep.subr.bf16.mxu0 0
  %1746 = vmatpush2.bf16.msra.mxu0 0
  %1747 = vmatprep.subr.bf16.mxu0 0
  %1748 = vmatpush2.bf16.msra.mxu0 0
  %1749 = vmatprep.mubr.bf16.mxu0 0
  %1750 = vmatmul.mubr.bf16.gmra.mxu0 %v1414
  %v1751 = vpop.f32.mrf.mxu0
  %v1752 = vadd.f32 0.0, %v1751
  %v1753 = vpop.f32.mrf.mxu0
  %v1754 = vadd.f32 0.0, %v1753
  %v1755 = vpop.f32.mrf.mxu0
  %v1756 = vadd.f32 0.0, %v1755
  %v1757 = vpop.f32.mrf.mxu0
  %v1758 = vadd.f32 0.0, %v1757
  %1759 = vmatprep.mubr.bf16.mxu0 0
  %1760 = vmatmul.mubr.bf16.gmra.mxu0 %v1417
  %v1761 = vpop.f32.mrf.mxu0
  %v1762 = vadd.f32 0.0, %v1761
  %v1763 = vpop.f32.mrf.mxu0
  %v1764 = vadd.f32 0.0, %v1763
  %v1765 = vpop.f32.mrf.mxu0
  %v1766 = vadd.f32 0.0, %v1765
  %v1767 = vpop.f32.mrf.mxu0
  %v1768 = vadd.f32 0.0, %v1767
  %1769 = vdwg.mxu0
  %1770 = vmatprep.subr.bf16.mxu0 0
  %1771 = vmatpush1.bf16.msra.mxu0 0
  %1772 = vmatprep.subr.bf16.mxu0 0
  %1773 = vmatpush1.bf16.msra.mxu0 0
  %1774 = vmatprep.subr.bf16.mxu0 0
  %1775 = vmatpush1.bf16.msra.mxu0 0
  %1776 = vmatprep.subr.bf16.mxu0 0
  %1777 = vmatpush1.bf16.msra.mxu0 0
  %1778 = vmatprep.subr.bf16.mxu0 0
  %1779 = vmatpush1.bf16.msra.mxu0 0
  %1780 = vmatprep.subr.bf16.mxu0 0
  %1781 = vmatpush1.bf16.msra.mxu0 0
  %1782 = vmatprep.subr.bf16.mxu0 0
  %1783 = vmatpush1.bf16.msra.mxu0 0
  %1784 = vmatprep.subr.bf16.mxu0 %v1446
  %1785 = vmatpush1.bf16.msra.mxu0 %v1444
  %1786 = vmatprep.subr.bf16.mxu0 0
  %1787 = vmatpush2.bf16.msra.mxu0 0
  %1788 = vmatprep.subr.bf16.mxu0 0
  %1789 = vmatpush2.bf16.msra.mxu0 0
  %1790 = vmatprep.subr.bf16.mxu0 0
  %1791 = vmatpush2.bf16.msra.mxu0 0
  %1792 = vmatprep.subr.bf16.mxu0 0
  %1793 = vmatpush2.bf16.msra.mxu0 0
  %1794 = vmatprep.subr.bf16.mxu0 0
  %1795 = vmatpush2.bf16.msra.mxu0 0
  %1796 = vmatprep.subr.bf16.mxu0 0
  %1797 = vmatpush2.bf16.msra.mxu0 0
  %1798 = vmatprep.subr.bf16.mxu0 0
  %1799 = vmatpush2.bf16.msra.mxu0 0
  %1800 = vmatprep.subr.bf16.mxu0 0
  %1801 = vmatpush2.bf16.msra.mxu0 0
  %1802 = vmatprep.mubr.bf16.mxu0 0
  %1803 = vmatmul.mubr.bf16.gmra.mxu0 %v1414
  %v1804 = vpop.f32.mrf.mxu0
  %v1805 = vadd.f32 0.0, %v1804
  %v1806 = vpop.f32.mrf.mxu0
  %v1807 = vadd.f32 0.0, %v1806
  %v1808 = vpop.f32.mrf.mxu0
  %v1809 = vadd.f32 0.0, %v1808
  %v1810 = vpop.f32.mrf.mxu0
  %v1811 = vadd.f32 0.0, %v1810
  %1812 = vmatprep.mubr.bf16.mxu0 0
  %1813 = vmatmul.mubr.bf16.gmra.mxu0 %v1417
  %v1814 = vpop.f32.mrf.mxu0
  %v1815 = vadd.f32 0.0, %v1814
  %v1816 = vpop.f32.mrf.mxu0
  %v1817 = vadd.f32 0.0, %v1816
  %v1818 = vpop.f32.mrf.mxu0
  %v1819 = vadd.f32 0.0, %v1818
  %v1820 = vpop.f32.mrf.mxu0
  %v1821 = vadd.f32 0.0, %v1820
  %1822 = vdwg.mxu0
  %1823 = vmatprep.subr.bf16.mxu0 0
  %1824 = vmatpush1.bf16.msra.mxu0 0
  %1825 = vmatprep.subr.bf16.mxu0 0
  %1826 = vmatpush1.bf16.msra.mxu0 0
  %1827 = vmatprep.subr.bf16.mxu0 0
  %1828 = vmatpush1.bf16.msra.mxu0 0
  %1829 = vmatprep.subr.bf16.mxu0 0
  %1830 = vmatpush1.bf16.msra.mxu0 0
  %1831 = vmatprep.subr.bf16.mxu0 0
  %1832 = vmatpush1.bf16.msra.mxu0 0
  %1833 = vmatprep.subr.bf16.mxu0 0
  %1834 = vmatpush1.bf16.msra.mxu0 0
  %1835 = vmatprep.subr.bf16.mxu0 0
  %1836 = vmatpush1.bf16.msra.mxu0 0
  %1837 = vmatprep.subr.bf16.mxu0 %v1450
  %1838 = vmatpush1.bf16.msra.mxu0 %v1448
  %1839 = vmatprep.subr.bf16.mxu0 0
  %1840 = vmatpush2.bf16.msra.mxu0 0
  %1841 = vmatprep.subr.bf16.mxu0 0
  %1842 = vmatpush2.bf16.msra.mxu0 0
  %1843 = vmatprep.subr.bf16.mxu0 0
  %1844 = vmatpush2.bf16.msra.mxu0 0
  %1845 = vmatprep.subr.bf16.mxu0 0
  %1846 = vmatpush2.bf16.msra.mxu0 0
  %1847 = vmatprep.subr.bf16.mxu0 0
  %1848 = vmatpush2.bf16.msra.mxu0 0
  %1849 = vmatprep.subr.bf16.mxu0 0
  %1850 = vmatpush2.bf16.msra.mxu0 0
  %1851 = vmatprep.subr.bf16.mxu0 0
  %1852 = vmatpush2.bf16.msra.mxu0 0
  %1853 = vmatprep.subr.bf16.mxu0 0
  %1854 = vmatpush2.bf16.msra.mxu0 0
  %1855 = vmatprep.mubr.bf16.mxu0 0
  %1856 = vmatmul.mubr.bf16.gmra.mxu0 %v1414
  %v1857 = vpop.f32.mrf.mxu0
  %v1858 = vadd.f32 0.0, %v1857
  %v1859 = vpop.f32.mrf.mxu0
  %v1860 = vadd.f32 0.0, %v1859
  %v1861 = vpop.f32.mrf.mxu0
  %v1862 = vadd.f32 0.0, %v1861
  %v1863 = vpop.f32.mrf.mxu0
  %v1864 = vadd.f32 0.0, %v1863
  %1865 = vmatprep.mubr.bf16.mxu0 0
  %1866 = vmatmul.mubr.bf16.gmra.mxu0 %v1417
  %v1867 = vpop.f32.mrf.mxu0
  %v1868 = vadd.f32 0.0, %v1867
  %v1869 = vpop.f32.mrf.mxu0
  %v1870 = vadd.f32 0.0, %v1869
  %v1871 = vpop.f32.mrf.mxu0
  %v1872 = vadd.f32 0.0, %v1871
  %v1873 = vpop.f32.mrf.mxu0
  %v1874 = vadd.f32 0.0, %v1873
  %1875 = vdwg.mxu0
  %v1876 = vld [vmem:[%s2] sm:$0xff]
  %v1877 = vld [vmem:[%s2 + $0x8] sm:$0xff]
  %v1878 = vld [vmem:[%s2 + $0x10] sm:$0xff]
  %v1879 = vld [vmem:[%s2 + $0x18] sm:$0xff]
  %1881 = vset.pattern.permute.xlu0 0
  %1882 = vperm.xlu0 %1881, %v1876
  %v1883 = vpop.permute.xlu0 %1882
  %1886 = vset.pattern.permute.xlu0 0
  %1887 = vperm.xlu0 %1886, %v1877
  %v1888 = vpop.permute.xlu0 %1887
  %1891 = vset.pattern.permute.xlu0 0
  %1892 = vperm.xlu0 %1891, %v1878
  %v1893 = vpop.permute.xlu0 %1892
  %1896 = vset.pattern.permute.xlu0 0
  %1897 = vperm.xlu0 %1896, %v1879
  %v1898 = vpop.permute.xlu0 %1897
  %v1900 = vmul.f32 %v1487, %v1883
  %v1901 = vmul.f32 %v1489, %v1883
  %v1902 = vmul.f32 %v1540, %v1883
  %v1903 = vmul.f32 %v1542, %v1883
  %v1904 = vmul.f32 %v1593, %v1883
  %v1905 = vmul.f32 %v1595, %v1883
  %v1906 = vmul.f32 %v1646, %v1883
  %v1907 = vmul.f32 %v1648, %v1883
  %v1908 = vmul.f32 %v1699, %v1883
  %v1909 = vmul.f32 %v1701, %v1883
  %v1910 = vmul.f32 %v1752, %v1883
  %v1911 = vmul.f32 %v1754, %v1883
  %v1912 = vmul.f32 %v1805, %v1883
  %v1913 = vmul.f32 %v1807, %v1883
  %v1914 = vmul.f32 %v1858, %v1883
  %v1915 = vmul.f32 %v1860, %v1883
  %v1916 = vmul.f32 %v1491, %v1888
  %v1917 = vmul.f32 %v1493, %v1888
  %v1918 = vmul.f32 %v1544, %v1888
  %v1919 = vmul.f32 %v1546, %v1888
  %v1920 = vmul.f32 %v1597, %v1888
  %v1921 = vmul.f32 %v1599, %v1888
  %v1922 = vmul.f32 %v1650, %v1888
  %v1923 = vmul.f32 %v1652, %v1888
  %v1924 = vmul.f32 %v1703, %v1888
  %v1925 = vmul.f32 %v1705, %v1888
  %v1926 = vmul.f32 %v1756, %v1888
  %v1927 = vmul.f32 %v1758, %v1888
  %v1928 = vmul.f32 %v1809, %v1888
  %v1929 = vmul.f32 %v1811, %v1888
  %v1930 = vmul.f32 %v1862, %v1888
  %v1931 = vmul.f32 %v1864, %v1888
  %v1932 = vmul.f32 %v1497, %v1893
  %v1933 = vmul.f32 %v1499, %v1893
  %v1934 = vmul.f32 %v1550, %v1893
  %v1935 = vmul.f32 %v1552, %v1893
  %v1936 = vmul.f32 %v1603, %v1893
  %v1937 = vmul.f32 %v1605, %v1893
  %v1938 = vmul.f32 %v1656, %v1893
  %v1939 = vmul.f32 %v1658, %v1893
  %v1940 = vmul.f32 %v1709, %v1893
  %v1941 = vmul.f32 %v1711, %v1893
  %v1942 = vmul.f32 %v1762, %v1893
  %v1943 = vmul.f32 %v1764, %v1893
  %v1944 = vmul.f32 %v1815, %v1893
  %v1945 = vmul.f32 %v1817, %v1893
  %v1946 = vmul.f32 %v1868, %v1893
  %v1947 = vmul.f32 %v1870, %v1893
  %v1948 = vmul.f32 %v1501, %v1898
  %v1949 = vmul.f32 %v1503, %v1898
  %v1950 = vmul.f32 %v1554, %v1898
  %v1951 = vmul.f32 %v1556, %v1898
  %v1952 = vmul.f32 %v1607, %v1898
  %v1953 = vmul.f32 %v1609, %v1898
  %v1954 = vmul.f32 %v1660, %v1898
  %v1955 = vmul.f32 %v1662, %v1898
  %v1956 = vmul.f32 %v1713, %v1898
  %v1957 = vmul.f32 %v1715, %v1898
  %v1958 = vmul.f32 %v1766, %v1898
  %v1959 = vmul.f32 %v1768, %v1898
  %v1960 = vmul.f32 %v1819, %v1898
  %v1961 = vmul.f32 %v1821, %v1898
  %v1962 = vmul.f32 %v1872, %v1898
  %v1963 = vmul.f32 %v1874, %v1898
  %v1964 = vld [vmem:[%s3] sm:$0xff]
  %v1965 = vld [vmem:[%s3 + $0x8] sm:$0xff]
  %v1966 = vld [vmem:[%s3 + $0x10] sm:$0xff]
  %v1967 = vld [vmem:[%s3 + $0x18] sm:$0xff]
  %1969 = vset.pattern.permute.xlu0 0
  %1970 = vperm.xlu0 %1969, %v1964
  %v1971 = vpop.permute.xlu0 %1970
  %1974 = vset.pattern.permute.xlu0 0
  %1975 = vperm.xlu0 %1974, %v1965
  %v1976 = vpop.permute.xlu0 %1975
  %1979 = vset.pattern.permute.xlu0 0
  %1980 = vperm.xlu0 %1979, %v1966
  %v1981 = vpop.permute.xlu0 %1980
  %1984 = vset.pattern.permute.xlu0 0
  %1985 = vperm.xlu0 %1984, %v1967
  %v1986 = vpop.permute.xlu0 %1985
  %v1988 = vadd.f32 %v1900, %v1971
  %v1989 = vadd.f32 %v1901, %v1971
  %v1990 = vadd.f32 %v1902, %v1971
  %v1991 = vadd.f32 %v1903, %v1971
  %v1992 = vadd.f32 %v1904, %v1971
  %v1993 = vadd.f32 %v1905, %v1971
  %v1994 = vadd.f32 %v1906, %v1971
  %v1995 = vadd.f32 %v1907, %v1971
  %v1996 = vadd.f32 %v1908, %v1971
  %v1997 = vadd.f32 %v1909, %v1971
  %v1998 = vadd.f32 %v1910, %v1971
  %v1999 = vadd.f32 %v1911, %v1971
  %v2000 = vadd.f32 %v1912, %v1971
  %v2001 = vadd.f32 %v1913, %v1971
  %v2002 = vadd.f32 %v1914, %v1971
  %v2003 = vadd.f32 %v1915, %v1971
  %v2004 = vadd.f32 %v1916, %v1976
  %v2005 = vadd.f32 %v1917, %v1976
  %v2006 = vadd.f32 %v1918, %v1976
  %v2007 = vadd.f32 %v1919, %v1976
  %v2008 = vadd.f32 %v1920, %v1976
  %v2009 = vadd.f32 %v1921, %v1976
  %v2010 = vadd.f32 %v1922, %v1976
  %v2011 = vadd.f32 %v1923, %v1976
  %v2012 = vadd.f32 %v1924, %v1976
  %v2013 = vadd.f32 %v1925, %v1976
  %v2014 = vadd.f32 %v1926, %v1976
  %v2015 = vadd.f32 %v1927, %v1976
  %v2016 = vadd.f32 %v1928, %v1976
  %v2017 = vadd.f32 %v1929, %v1976
  %v2018 = vadd.f32 %v1930, %v1976
  %v2019 = vadd.f32 %v1931, %v1976
  %v2020 = vadd.f32 %v1932, %v1981
  %v2021 = vadd.f32 %v1933, %v1981
  %v2022 = vadd.f32 %v1934, %v1981
  %v2023 = vadd.f32 %v1935, %v1981
  %v2024 = vadd.f32 %v1936, %v1981
  %v2025 = vadd.f32 %v1937, %v1981
  %v2026 = vadd.f32 %v1938, %v1981
  %v2027 = vadd.f32 %v1939, %v1981
  %v2028 = vadd.f32 %v1940, %v1981
  %v2029 = vadd.f32 %v1941, %v1981
  %v2030 = vadd.f32 %v1942, %v1981
  %v2031 = vadd.f32 %v1943, %v1981
  %v2032 = vadd.f32 %v1944, %v1981
  %v2033 = vadd.f32 %v1945, %v1981
  %v2034 = vadd.f32 %v1946, %v1981
  %v2035 = vadd.f32 %v1947, %v1981
  %v2036 = vadd.f32 %v1948, %v1986
  %v2037 = vadd.f32 %v1949, %v1986
  %v2038 = vadd.f32 %v1950, %v1986
  %v2039 = vadd.f32 %v1951, %v1986
  %v2040 = vadd.f32 %v1952, %v1986
  %v2041 = vadd.f32 %v1953, %v1986
  %v2042 = vadd.f32 %v1954, %v1986
  %v2043 = vadd.f32 %v1955, %v1986
  %v2044 = vadd.f32 %v1956, %v1986
  %v2045 = vadd.f32 %v1957, %v1986
  %v2046 = vadd.f32 %v1958, %v1986
  %v2047 = vadd.f32 %v1959, %v1986
  %v2048 = vadd.f32 %v1960, %v1986
  %v2049 = vadd.f32 %v1961, %v1986
  %v2050 = vadd.f32 %v1962, %v1986
  %v2051 = vadd.f32 %v1963, %v1986
  %v2052 = vpack.c.bf16 %v2004, %v1988
  %v2053 = vpack.c.bf16 %v2005, %v1989
  %v2054 = vpack.c.bf16 %v2006, %v1990
  %v2055 = vpack.c.bf16 %v2007, %v1991
  %v2056 = vpack.c.bf16 %v2008, %v1992
  %v2057 = vpack.c.bf16 %v2009, %v1993
  %v2058 = vpack.c.bf16 %v2010, %v1994
  %v2059 = vpack.c.bf16 %v2011, %v1995
  %v2060 = vpack.c.bf16 %v2012, %v1996
  %v2061 = vpack.c.bf16 %v2013, %v1997
  %v2062 = vpack.c.bf16 %v2014, %v1998
  %v2063 = vpack.c.bf16 %v2015, %v1999
  %v2064 = vpack.c.bf16 %v2016, %v2000
  %v2065 = vpack.c.bf16 %v2017, %v2001
  %v2066 = vpack.c.bf16 %v2018, %v2002
  %v2067 = vpack.c.bf16 %v2019, %v2003
  %v2068 = vpack.c.bf16 %v2036, %v2020
  %v2069 = vpack.c.bf16 %v2037, %v2021
  %v2070 = vpack.c.bf16 %v2038, %v2022
  %v2071 = vpack.c.bf16 %v2039, %v2023
  %v2072 = vpack.c.bf16 %v2040, %v2024
  %v2073 = vpack.c.bf16 %v2041, %v2025
  %v2074 = vpack.c.bf16 %v2042, %v2026
  %v2075 = vpack.c.bf16 %v2043, %v2027
  %v2076 = vpack.c.bf16 %v2044, %v2028
  %v2077 = vpack.c.bf16 %v2045, %v2029
  %v2078 = vpack.c.bf16 %v2046, %v2030
  %v2079 = vpack.c.bf16 %v2047, %v2031
  %v2080 = vpack.c.bf16 %v2048, %v2032
  %v2081 = vpack.c.bf16 %v2049, %v2033
  %v2082 = vpack.c.bf16 %v2050, %v2034
  %v2083 = vpack.c.bf16 %v2051, %v2035
  %2116 = vrot.lane.b32.xlu0 %v2052, 127
  %v2117 = vpop.permute.xlu0 %2116
  %2118 = vrot.lane.b32.xlu0 %v2053, 127
  %v2119 = vpop.permute.xlu0 %2118
  %2120 = vrot.lane.b32.xlu0 %v2054, 127
  %v2121 = vpop.permute.xlu0 %2120
  %2122 = vrot.lane.b32.xlu0 %v2055, 127
  %v2123 = vpop.permute.xlu0 %2122
  %2124 = vrot.lane.b32.xlu0 %v2056, 127
  %v2125 = vpop.permute.xlu0 %2124
  %2126 = vrot.lane.b32.xlu0 %v2057, 127
  %v2127 = vpop.permute.xlu0 %2126
  %2128 = vrot.lane.b32.xlu0 %v2058, 127
  %v2129 = vpop.permute.xlu0 %2128
  %2130 = vrot.lane.b32.xlu0 %v2059, 127
  %v2131 = vpop.permute.xlu0 %2130
  %2132 = vrot.lane.b32.xlu0 %v2060, 127
  %v2133 = vpop.permute.xlu0 %2132
  %2134 = vrot.lane.b32.xlu0 %v2061, 127
  %v2135 = vpop.permute.xlu0 %2134
  %2136 = vrot.lane.b32.xlu0 %v2062, 127
  %v2137 = vpop.permute.xlu0 %2136
  %2138 = vrot.lane.b32.xlu0 %v2063, 127
  %v2139 = vpop.permute.xlu0 %2138
  %2140 = vrot.lane.b32.xlu0 %v2064, 127
  %v2141 = vpop.permute.xlu0 %2140
  %2142 = vrot.lane.b32.xlu0 %v2065, 127
  %v2143 = vpop.permute.xlu0 %2142
  %2144 = vrot.lane.b32.xlu0 %v2066, 127
  %v2145 = vpop.permute.xlu0 %2144
  %2146 = vrot.lane.b32.xlu0 %v2067, 127
  %v2147 = vpop.permute.xlu0 %2146
  %2148 = vrot.lane.b32.xlu0 %v2068, 127
  %v2149 = vpop.permute.xlu0 %2148
  %2150 = vrot.lane.b32.xlu0 %v2069, 127
  %v2151 = vpop.permute.xlu0 %2150
  %2152 = vrot.lane.b32.xlu0 %v2070, 127
  %v2153 = vpop.permute.xlu0 %2152
  %2154 = vrot.lane.b32.xlu0 %v2071, 127
  %v2155 = vpop.permute.xlu0 %2154
  %2156 = vrot.lane.b32.xlu0 %v2072, 127
  %v2157 = vpop.permute.xlu0 %2156
  %2158 = vrot.lane.b32.xlu0 %v2073, 127
  %v2159 = vpop.permute.xlu0 %2158
  %2160 = vrot.lane.b32.xlu0 %v2074, 127
  %v2161 = vpop.permute.xlu0 %2160
  %2162 = vrot.lane.b32.xlu0 %v2075, 127
  %v2163 = vpop.permute.xlu0 %2162
  %2164 = vrot.lane.b32.xlu0 %v2076, 127
  %v2165 = vpop.permute.xlu0 %2164
  %2166 = vrot.lane.b32.xlu0 %v2077, 127
  %v2167 = vpop.permute.xlu0 %2166
  %2168 = vrot.lane.b32.xlu0 %v2078, 127
  %v2169 = vpop.permute.xlu0 %2168
  %2170 = vrot.lane.b32.xlu0 %v2079, 127
  %v2171 = vpop.permute.xlu0 %2170
  %2172 = vrot.lane.b32.xlu0 %v2080, 127
  %v2173 = vpop.permute.xlu0 %2172
  %2174 = vrot.lane.b32.xlu0 %v2081, 127
  %v2175 = vpop.permute.xlu0 %2174
  %2176 = vrot.lane.b32.xlu0 %v2082, 127
  %v2177 = vpop.permute.xlu0 %2176
  %2178 = vrot.lane.b32.xlu0 %v2083, 127
  %v2179 = vpop.permute.xlu0 %2178
  %v2180 = vsel %vm1108, %v2117, %v2119
  %v2181 = vsel %vm1108, %v2119, %v2121
  %v2182 = vsel %vm1108, %v2121, %v2123
  %v2183 = vsel %vm1108, %v2123, %v2125
  %v2184 = vsel %vm1108, %v2125, %v2127
  %v2185 = vsel %vm1108, %v2127, %v2129
  %v2186 = vsel %vm1108, %v2129, %v2131
  %v2187 = vsel %vm1108, %v2131, %v2133
  %v2188 = vsel %vm1108, %v2133, %v2135
  %v2189 = vsel %vm1108, %v2135, %v2137
  %v2190 = vsel %vm1108, %v2137, %v2139
  %v2191 = vsel %vm1108, %v2139, %v2141
  %v2192 = vsel %vm1108, %v2141, %v2143
  %v2193 = vsel %vm1108, %v2143, %v2145
  %v2194 = vsel %vm1108, %v2145, %v2147
  %v2195 = vsel %vm1108, %v2149, %v2151
  %v2196 = vsel %vm1108, %v2151, %v2153
  %v2197 = vsel %vm1108, %v2153, %v2155
  %v2198 = vsel %vm1108, %v2155, %v2157
  %v2199 = vsel %vm1108, %v2157, %v2159
  %v2200 = vsel %vm1108, %v2159, %v2161
  %v2201 = vsel %vm1108, %v2161, %v2163
  %v2202 = vsel %vm1108, %v2163, %v2165
  %v2203 = vsel %vm1108, %v2165, %v2167
  %v2204 = vsel %vm1108, %v2167, %v2169
  %v2205 = vsel %vm1108, %v2169, %v2171
  %v2206 = vsel %vm1108, %v2171, %v2173
  %v2207 = vsel %vm1108, %v2173, %v2175
  %v2208 = vsel %vm1108, %v2175, %v2177
  %v2209 = vsel %vm1108, %v2177, %v2179
  %v2242 = vsel %vm1124, %v2147, %v2117
  %v2246 = vsel %vm1124, %v2179, %v2149
  %2248 = vrot.lane.b32.xlu0 %v2052, 126
  %v2249 = vpop.permute.xlu0 %2248
  %2250 = vrot.lane.b32.xlu0 %v2053, 126
  %v2251 = vpop.permute.xlu0 %2250
  %2252 = vrot.lane.b32.xlu0 %v2054, 126
  %v2253 = vpop.permute.xlu0 %2252
  %2254 = vrot.lane.b32.xlu0 %v2055, 126
  %v2255 = vpop.permute.xlu0 %2254
  %2256 = vrot.lane.b32.xlu0 %v2056, 126
  %v2257 = vpop.permute.xlu0 %2256
  %2258 = vrot.lane.b32.xlu0 %v2057, 126
  %v2259 = vpop.permute.xlu0 %2258
  %2260 = vrot.lane.b32.xlu0 %v2058, 126
  %v2261 = vpop.permute.xlu0 %2260
  %2262 = vrot.lane.b32.xlu0 %v2059, 126
  %v2263 = vpop.permute.xlu0 %2262
  %2264 = vrot.lane.b32.xlu0 %v2060, 126
  %v2265 = vpop.permute.xlu0 %2264
  %2266 = vrot.lane.b32.xlu0 %v2061, 126
  %v2267 = vpop.permute.xlu0 %2266
  %2268 = vrot.lane.b32.xlu0 %v2062, 126
  %v2269 = vpop.permute.xlu0 %2268
  %2270 = vrot.lane.b32.xlu0 %v2063, 126
  %v2271 = vpop.permute.xlu0 %2270
  %2272 = vrot.lane.b32.xlu0 %v2064, 126
  %v2273 = vpop.permute.xlu0 %2272
  %2274 = vrot.lane.b32.xlu0 %v2065, 126
  %v2275 = vpop.permute.xlu0 %2274
  %2276 = vrot.lane.b32.xlu0 %v2066, 126
  %v2277 = vpop.permute.xlu0 %2276
  %2278 = vrot.lane.b32.xlu0 %v2067, 126
  %v2279 = vpop.permute.xlu0 %2278
  %2280 = vrot.lane.b32.xlu0 %v2068, 126
  %v2281 = vpop.permute.xlu0 %2280
  %2282 = vrot.lane.b32.xlu0 %v2069, 126
  %v2283 = vpop.permute.xlu0 %2282
  %2284 = vrot.lane.b32.xlu0 %v2070, 126
  %v2285 = vpop.permute.xlu0 %2284
  %2286 = vrot.lane.b32.xlu0 %v2071, 126
  %v2287 = vpop.permute.xlu0 %2286
  %2288 = vrot.lane.b32.xlu0 %v2072, 126
  %v2289 = vpop.permute.xlu0 %2288
  %2290 = vrot.lane.b32.xlu0 %v2073, 126
  %v2291 = vpop.permute.xlu0 %2290
  %2292 = vrot.lane.b32.xlu0 %v2074, 126
  %v2293 = vpop.permute.xlu0 %2292
  %2294 = vrot.lane.b32.xlu0 %v2075, 126
  %v2295 = vpop.permute.xlu0 %2294
  %2296 = vrot.lane.b32.xlu0 %v2076, 126
  %v2297 = vpop.permute.xlu0 %2296
  %2298 = vrot.lane.b32.xlu0 %v2077, 126
  %v2299 = vpop.permute.xlu0 %2298
  %2300 = vrot.lane.b32.xlu0 %v2078, 126
  %v2301 = vpop.permute.xlu0 %2300
  %2302 = vrot.lane.b32.xlu0 %v2079, 126
  %v2303 = vpop.permute.xlu0 %2302
  %2304 = vrot.lane.b32.xlu0 %v2080, 126
  %v2305 = vpop.permute.xlu0 %2304
  %2306 = vrot.lane.b32.xlu0 %v2081, 126
  %v2307 = vpop.permute.xlu0 %2306
  %2308 = vrot.lane.b32.xlu0 %v2082, 126
  %v2309 = vpop.permute.xlu0 %2308
  %2310 = vrot.lane.b32.xlu0 %v2083, 126
  %v2311 = vpop.permute.xlu0 %2310
  %v2312 = vsel %vm1160, %v2249, %v2251
  %v2313 = vsel %vm1160, %v2251, %v2253
  %v2314 = vsel %vm1160, %v2253, %v2255
  %v2315 = vsel %vm1160, %v2255, %v2257
  %v2316 = vsel %vm1160, %v2257, %v2259
  %v2317 = vsel %vm1160, %v2259, %v2261
  %v2318 = vsel %vm1160, %v2261, %v2263
  %v2319 = vsel %vm1160, %v2263, %v2265
  %v2320 = vsel %vm1160, %v2265, %v2267
  %v2321 = vsel %vm1160, %v2267, %v2269
  %v2322 = vsel %vm1160, %v2269, %v2271
  %v2323 = vsel %vm1160, %v2271, %v2273
  %v2324 = vsel %vm1160, %v2273, %v2275
  %v2325 = vsel %vm1160, %v2275, %v2277
  %v2326 = vsel %vm1160, %v2277, %v2279
  %v2327 = vsel %vm1160, %v2281, %v2283
  %v2328 = vsel %vm1160, %v2283, %v2285
  %v2329 = vsel %vm1160, %v2285, %v2287
  %v2330 = vsel %vm1160, %v2287, %v2289
  %v2331 = vsel %vm1160, %v2289, %v2291
  %v2332 = vsel %vm1160, %v2291, %v2293
  %v2333 = vsel %vm1160, %v2293, %v2295
  %v2334 = vsel %vm1160, %v2295, %v2297
  %v2335 = vsel %vm1160, %v2297, %v2299
  %v2336 = vsel %vm1160, %v2299, %v2301
  %v2337 = vsel %vm1160, %v2301, %v2303
  %v2338 = vsel %vm1160, %v2303, %v2305
  %v2339 = vsel %vm1160, %v2305, %v2307
  %v2340 = vsel %vm1160, %v2307, %v2309
  %v2341 = vsel %vm1160, %v2309, %v2311
  %v2374 = vsel %vm1176, %v2279, %v2249
  %v2378 = vsel %vm1176, %v2311, %v2281
  %2380 = vrot.lane.b32.xlu0 %v2052, 125
  %v2381 = vpop.permute.xlu0 %2380
  %2382 = vrot.lane.b32.xlu0 %v2053, 125
  %v2383 = vpop.permute.xlu0 %2382
  %2384 = vrot.lane.b32.xlu0 %v2054, 125
  %v2385 = vpop.permute.xlu0 %2384
  %2386 = vrot.lane.b32.xlu0 %v2055, 125
  %v2387 = vpop.permute.xlu0 %2386
  %2388 = vrot.lane.b32.xlu0 %v2056, 125
  %v2389 = vpop.permute.xlu0 %2388
  %2390 = vrot.lane.b32.xlu0 %v2057, 125
  %v2391 = vpop.permute.xlu0 %2390
  %2392 = vrot.lane.b32.xlu0 %v2058, 125
  %v2393 = vpop.permute.xlu0 %2392
  %2394 = vrot.lane.b32.xlu0 %v2059, 125
  %v2395 = vpop.permute.xlu0 %2394
  %2396 = vrot.lane.b32.xlu0 %v2060, 125
  %v2397 = vpop.permute.xlu0 %2396
  %2398 = vrot.lane.b32.xlu0 %v2061, 125
  %v2399 = vpop.permute.xlu0 %2398
  %2400 = vrot.lane.b32.xlu0 %v2062, 125
  %v2401 = vpop.permute.xlu0 %2400
  %2402 = vrot.lane.b32.xlu0 %v2063, 125
  %v2403 = vpop.permute.xlu0 %2402
  %2404 = vrot.lane.b32.xlu0 %v2064, 125
  %v2405 = vpop.permute.xlu0 %2404
  %2406 = vrot.lane.b32.xlu0 %v2065, 125
  %v2407 = vpop.permute.xlu0 %2406
  %2408 = vrot.lane.b32.xlu0 %v2066, 125
  %v2409 = vpop.permute.xlu0 %2408
  %2410 = vrot.lane.b32.xlu0 %v2067, 125
  %v2411 = vpop.permute.xlu0 %2410
  %2412 = vrot.lane.b32.xlu0 %v2068, 125
  %v2413 = vpop.permute.xlu0 %2412
  %2414 = vrot.lane.b32.xlu0 %v2069, 125
  %v2415 = vpop.permute.xlu0 %2414
  %2416 = vrot.lane.b32.xlu0 %v2070, 125
  %v2417 = vpop.permute.xlu0 %2416
  %2418 = vrot.lane.b32.xlu0 %v2071, 125
  %v2419 = vpop.permute.xlu0 %2418
  %2420 = vrot.lane.b32.xlu0 %v2072, 125
  %v2421 = vpop.permute.xlu0 %2420
  %2422 = vrot.lane.b32.xlu0 %v2073, 125
  %v2423 = vpop.permute.xlu0 %2422
  %2424 = vrot.lane.b32.xlu0 %v2074, 125
  %v2425 = vpop.permute.xlu0 %2424
  %2426 = vrot.lane.b32.xlu0 %v2075, 125
  %v2427 = vpop.permute.xlu0 %2426
  %2428 = vrot.lane.b32.xlu0 %v2076, 125
  %v2429 = vpop.permute.xlu0 %2428
  %2430 = vrot.lane.b32.xlu0 %v2077, 125
  %v2431 = vpop.permute.xlu0 %2430
  %2432 = vrot.lane.b32.xlu0 %v2078, 125
  %v2433 = vpop.permute.xlu0 %2432
  %2434 = vrot.lane.b32.xlu0 %v2079, 125
  %v2435 = vpop.permute.xlu0 %2434
  %2436 = vrot.lane.b32.xlu0 %v2080, 125
  %v2437 = vpop.permute.xlu0 %2436
  %2438 = vrot.lane.b32.xlu0 %v2081, 125
  %v2439 = vpop.permute.xlu0 %2438
  %2440 = vrot.lane.b32.xlu0 %v2082, 125
  %v2441 = vpop.permute.xlu0 %2440
  %2442 = vrot.lane.b32.xlu0 %v2083, 125
  %v2443 = vpop.permute.xlu0 %2442
  %v2444 = vsel %vm1212, %v2381, %v2383
  %v2445 = vsel %vm1212, %v2383, %v2385
  %v2446 = vsel %vm1212, %v2385, %v2387
  %v2447 = vsel %vm1212, %v2387, %v2389
  %v2448 = vsel %vm1212, %v2389, %v2391
  %v2449 = vsel %vm1212, %v2391, %v2393
  %v2450 = vsel %vm1212, %v2393, %v2395
  %v2451 = vsel %vm1212, %v2395, %v2397
  %v2452 = vsel %vm1212, %v2397, %v2399
  %v2453 = vsel %vm1212, %v2399, %v2401
  %v2454 = vsel %vm1212, %v2401, %v2403
  %v2455 = vsel %vm1212, %v2403, %v2405
  %v2456 = vsel %vm1212, %v2405, %v2407
  %v2457 = vsel %vm1212, %v2407, %v2409
  %v2458 = vsel %vm1212, %v2409, %v2411
  %v2459 = vsel %vm1212, %v2413, %v2415
  %v2460 = vsel %vm1212, %v2415, %v2417
  %v2461 = vsel %vm1212, %v2417, %v2419
  %v2462 = vsel %vm1212, %v2419, %v2421
  %v2463 = vsel %vm1212, %v2421, %v2423
  %v2464 = vsel %vm1212, %v2423, %v2425
  %v2465 = vsel %vm1212, %v2425, %v2427
  %v2466 = vsel %vm1212, %v2427, %v2429
  %v2467 = vsel %vm1212, %v2429, %v2431
  %v2468 = vsel %vm1212, %v2431, %v2433
  %v2469 = vsel %vm1212, %v2433, %v2435
  %v2470 = vsel %vm1212, %v2435, %v2437
  %v2471 = vsel %vm1212, %v2437, %v2439
  %v2472 = vsel %vm1212, %v2439, %v2441
  %v2473 = vsel %vm1212, %v2441, %v2443
  %v2506 = vsel %vm1228, %v2411, %v2381
  %v2510 = vsel %vm1228, %v2443, %v2413
  %2512 = vrot.lane.b32.xlu0 %v2052, 124
  %v2513 = vpop.permute.xlu0 %2512
  %2514 = vrot.lane.b32.xlu0 %v2053, 124
  %v2515 = vpop.permute.xlu0 %2514
  %2516 = vrot.lane.b32.xlu0 %v2054, 124
  %v2517 = vpop.permute.xlu0 %2516
  %2518 = vrot.lane.b32.xlu0 %v2055, 124
  %v2519 = vpop.permute.xlu0 %2518
  %2520 = vrot.lane.b32.xlu0 %v2056, 124
  %v2521 = vpop.permute.xlu0 %2520
  %2522 = vrot.lane.b32.xlu0 %v2057, 124
  %v2523 = vpop.permute.xlu0 %2522
  %2524 = vrot.lane.b32.xlu0 %v2058, 124
  %v2525 = vpop.permute.xlu0 %2524
  %2526 = vrot.lane.b32.xlu0 %v2059, 124
  %v2527 = vpop.permute.xlu0 %2526
  %2528 = vrot.lane.b32.xlu0 %v2060, 124
  %v2529 = vpop.permute.xlu0 %2528
  %2530 = vrot.lane.b32.xlu0 %v2061, 124
  %v2531 = vpop.permute.xlu0 %2530
  %2532 = vrot.lane.b32.xlu0 %v2062, 124
  %v2533 = vpop.permute.xlu0 %2532
  %2534 = vrot.lane.b32.xlu0 %v2063, 124
  %v2535 = vpop.permute.xlu0 %2534
  %2536 = vrot.lane.b32.xlu0 %v2064, 124
  %v2537 = vpop.permute.xlu0 %2536
  %2538 = vrot.lane.b32.xlu0 %v2065, 124
  %v2539 = vpop.permute.xlu0 %2538
  %2540 = vrot.lane.b32.xlu0 %v2066, 124
  %v2541 = vpop.permute.xlu0 %2540
  %2542 = vrot.lane.b32.xlu0 %v2067, 124
  %v2543 = vpop.permute.xlu0 %2542
  %2544 = vrot.lane.b32.xlu0 %v2068, 124
  %v2545 = vpop.permute.xlu0 %2544
  %2546 = vrot.lane.b32.xlu0 %v2069, 124
  %v2547 = vpop.permute.xlu0 %2546
  %2548 = vrot.lane.b32.xlu0 %v2070, 124
  %v2549 = vpop.permute.xlu0 %2548
  %2550 = vrot.lane.b32.xlu0 %v2071, 124
  %v2551 = vpop.permute.xlu0 %2550
  %2552 = vrot.lane.b32.xlu0 %v2072, 124
  %v2553 = vpop.permute.xlu0 %2552
  %2554 = vrot.lane.b32.xlu0 %v2073, 124
  %v2555 = vpop.permute.xlu0 %2554
  %2556 = vrot.lane.b32.xlu0 %v2074, 124
  %v2557 = vpop.permute.xlu0 %2556
  %2558 = vrot.lane.b32.xlu0 %v2075, 124
  %v2559 = vpop.permute.xlu0 %2558
  %2560 = vrot.lane.b32.xlu0 %v2076, 124
  %v2561 = vpop.permute.xlu0 %2560
  %2562 = vrot.lane.b32.xlu0 %v2077, 124
  %v2563 = vpop.permute.xlu0 %2562
  %2564 = vrot.lane.b32.xlu0 %v2078, 124
  %v2565 = vpop.permute.xlu0 %2564
  %2566 = vrot.lane.b32.xlu0 %v2079, 124
  %v2567 = vpop.permute.xlu0 %2566
  %2568 = vrot.lane.b32.xlu0 %v2080, 124
  %v2569 = vpop.permute.xlu0 %2568
  %2570 = vrot.lane.b32.xlu0 %v2081, 124
  %v2571 = vpop.permute.xlu0 %2570
  %2572 = vrot.lane.b32.xlu0 %v2082, 124
  %v2573 = vpop.permute.xlu0 %2572
  %2574 = vrot.lane.b32.xlu0 %v2083, 124
  %v2575 = vpop.permute.xlu0 %2574
  %vm2576 = vcmask 1014784
  %v2577 = vsel %vm2576, %v2513, %v2515
  %v2578 = vsel %vm2576, %v2515, %v2517
  %v2579 = vsel %vm2576, %v2517, %v2519
  %v2580 = vsel %vm2576, %v2519, %v2521
  %v2581 = vsel %vm2576, %v2521, %v2523
  %v2582 = vsel %vm2576, %v2523, %v2525
  %v2583 = vsel %vm2576, %v2525, %v2527
  %v2584 = vsel %vm2576, %v2527, %v2529
  %v2585 = vsel %vm2576, %v2529, %v2531
  %v2586 = vsel %vm2576, %v2531, %v2533
  %v2587 = vsel %vm2576, %v2533, %v2535
  %v2588 = vsel %vm2576, %v2535, %v2537
  %v2589 = vsel %vm2576, %v2537, %v2539
  %v2590 = vsel %vm2576, %v2539, %v2541
  %v2591 = vsel %vm2576, %v2541, %v2543
  %v2592 = vsel %vm2576, %v2545, %v2547
  %v2593 = vsel %vm2576, %v2547, %v2549
  %v2594 = vsel %vm2576, %v2549, %v2551
  %v2595 = vsel %vm2576, %v2551, %v2553
  %v2596 = vsel %vm2576, %v2553, %v2555
  %v2597 = vsel %vm2576, %v2555, %v2557
  %v2598 = vsel %vm2576, %v2557, %v2559
  %v2599 = vsel %vm2576, %v2559, %v2561
  %v2600 = vsel %vm2576, %v2561, %v2563
  %v2601 = vsel %vm2576, %v2563, %v2565
  %v2602 = vsel %vm2576, %v2565, %v2567
  %v2603 = vsel %vm2576, %v2567, %v2569
  %v2604 = vsel %vm2576, %v2569, %v2571
  %v2605 = vsel %vm2576, %v2571, %v2573
  %v2606 = vsel %vm2576, %v2573, %v2575
  %vm2637 = vcmask 1014784
  %v2640 = vsel %vm2637, %v2543, %v2513
  %v2644 = vsel %vm2637, %v2575, %v2545
  %2646 = vrot.lane.b32.xlu0 %v2052, 123
  %v2647 = vpop.permute.xlu0 %2646
  %2648 = vrot.lane.b32.xlu0 %v2053, 123
  %v2649 = vpop.permute.xlu0 %2648
  %2650 = vrot.lane.b32.xlu0 %v2054, 123
  %v2651 = vpop.permute.xlu0 %2650
  %2652 = vrot.lane.b32.xlu0 %v2055, 123
  %v2653 = vpop.permute.xlu0 %2652
  %2654 = vrot.lane.b32.xlu0 %v2056, 123
  %v2655 = vpop.permute.xlu0 %2654
  %2656 = vrot.lane.b32.xlu0 %v2057, 123
  %v2657 = vpop.permute.xlu0 %2656
  %2658 = vrot.lane.b32.xlu0 %v2058, 123
  %v2659 = vpop.permute.xlu0 %2658
  %2660 = vrot.lane.b32.xlu0 %v2059, 123
  %v2661 = vpop.permute.xlu0 %2660
  %2662 = vrot.lane.b32.xlu0 %v2060, 123
  %v2663 = vpop.permute.xlu0 %2662
  %2664 = vrot.lane.b32.xlu0 %v2061, 123
  %v2665 = vpop.permute.xlu0 %2664
  %2666 = vrot.lane.b32.xlu0 %v2062, 123
  %v2667 = vpop.permute.xlu0 %2666
  %2668 = vrot.lane.b32.xlu0 %v2063, 123
  %v2669 = vpop.permute.xlu0 %2668
  %2670 = vrot.lane.b32.xlu0 %v2064, 123
  %v2671 = vpop.permute.xlu0 %2670
  %2672 = vrot.lane.b32.xlu0 %v2065, 123
  %v2673 = vpop.permute.xlu0 %2672
  %2674 = vrot.lane.b32.xlu0 %v2066, 123
  %v2675 = vpop.permute.xlu0 %2674
  %2676 = vrot.lane.b32.xlu0 %v2067, 123
  %v2677 = vpop.permute.xlu0 %2676
  %2678 = vrot.lane.b32.xlu0 %v2068, 123
  %v2679 = vpop.permute.xlu0 %2678
  %2680 = vrot.lane.b32.xlu0 %v2069, 123
  %v2681 = vpop.permute.xlu0 %2680
  %2682 = vrot.lane.b32.xlu0 %v2070, 123
  %v2683 = vpop.permute.xlu0 %2682
  %2684 = vrot.lane.b32.xlu0 %v2071, 123
  %v2685 = vpop.permute.xlu0 %2684
  %2686 = vrot.lane.b32.xlu0 %v2072, 123
  %v2687 = vpop.permute.xlu0 %2686
  %2688 = vrot.lane.b32.xlu0 %v2073, 123
  %v2689 = vpop.permute.xlu0 %2688
  %2690 = vrot.lane.b32.xlu0 %v2074, 123
  %v2691 = vpop.permute.xlu0 %2690
  %2692 = vrot.lane.b32.xlu0 %v2075, 123
  %v2693 = vpop.permute.xlu0 %2692
  %2694 = vrot.lane.b32.xlu0 %v2076, 123
  %v2695 = vpop.permute.xlu0 %2694
  %2696 = vrot.lane.b32.xlu0 %v2077, 123
  %v2697 = vpop.permute.xlu0 %2696
  %2698 = vrot.lane.b32.xlu0 %v2078, 123
  %v2699 = vpop.permute.xlu0 %2698
  %2700 = vrot.lane.b32.xlu0 %v2079, 123
  %v2701 = vpop.permute.xlu0 %2700
  %2702 = vrot.lane.b32.xlu0 %v2080, 123
  %v2703 = vpop.permute.xlu0 %2702
  %2704 = vrot.lane.b32.xlu0 %v2081, 123
  %v2705 = vpop.permute.xlu0 %2704
  %2706 = vrot.lane.b32.xlu0 %v2082, 123
  %v2707 = vpop.permute.xlu0 %2706
  %2708 = vrot.lane.b32.xlu0 %v2083, 123
  %v2709 = vpop.permute.xlu0 %2708
  %vm2710 = vcmask 1006592
  %v2711 = vsel %vm2710, %v2647, %v2649
  %v2712 = vsel %vm2710, %v2649, %v2651
  %v2713 = vsel %vm2710, %v2651, %v2653
  %v2714 = vsel %vm2710, %v2653, %v2655
  %v2715 = vsel %vm2710, %v2655, %v2657
  %v2716 = vsel %vm2710, %v2657, %v2659
  %v2717 = vsel %vm2710, %v2659, %v2661
  %v2718 = vsel %vm2710, %v2661, %v2663
  %v2719 = vsel %vm2710, %v2663, %v2665
  %v2720 = vsel %vm2710, %v2665, %v2667
  %v2721 = vsel %vm2710, %v2667, %v2669
  %v2722 = vsel %vm2710, %v2669, %v2671
  %v2723 = vsel %vm2710, %v2671, %v2673
  %v2724 = vsel %vm2710, %v2673, %v2675
  %v2725 = vsel %vm2710, %v2675, %v2677
  %v2726 = vsel %vm2710, %v2679, %v2681
  %v2727 = vsel %vm2710, %v2681, %v2683
  %v2728 = vsel %vm2710, %v2683, %v2685
  %v2729 = vsel %vm2710, %v2685, %v2687
  %v2730 = vsel %vm2710, %v2687, %v2689
  %v2731 = vsel %vm2710, %v2689, %v2691
  %v2732 = vsel %vm2710, %v2691, %v2693
  %v2733 = vsel %vm2710, %v2693, %v2695
  %v2734 = vsel %vm2710, %v2695, %v2697
  %v2735 = vsel %vm2710, %v2697, %v2699
  %v2736 = vsel %vm2710, %v2699, %v2701
  %v2737 = vsel %vm2710, %v2701, %v2703
  %v2738 = vsel %vm2710, %v2703, %v2705
  %v2739 = vsel %vm2710, %v2705, %v2707
  %v2740 = vsel %vm2710, %v2707, %v2709
  %vm2771 = vcmask 1006592
  %v2774 = vsel %vm2771, %v2677, %v2647
  %v2778 = vsel %vm2771, %v2709, %v2679
  %2780 = vrot.lane.b32.xlu0 %v2052, 122
  %v2781 = vpop.permute.xlu0 %2780
  %2782 = vrot.lane.b32.xlu0 %v2053, 122
  %v2783 = vpop.permute.xlu0 %2782
  %2784 = vrot.lane.b32.xlu0 %v2054, 122
  %v2785 = vpop.permute.xlu0 %2784
  %2786 = vrot.lane.b32.xlu0 %v2055, 122
  %v2787 = vpop.permute.xlu0 %2786
  %2788 = vrot.lane.b32.xlu0 %v2056, 122
  %v2789 = vpop.permute.xlu0 %2788
  %2790 = vrot.lane.b32.xlu0 %v2057, 122
  %v2791 = vpop.permute.xlu0 %2790
  %2792 = vrot.lane.b32.xlu0 %v2058, 122
  %v2793 = vpop.permute.xlu0 %2792
  %2794 = vrot.lane.b32.xlu0 %v2059, 122
  %v2795 = vpop.permute.xlu0 %2794
  %2796 = vrot.lane.b32.xlu0 %v2060, 122
  %v2797 = vpop.permute.xlu0 %2796
  %2798 = vrot.lane.b32.xlu0 %v2061, 122
  %v2799 = vpop.permute.xlu0 %2798
  %2800 = vrot.lane.b32.xlu0 %v2062, 122
  %v2801 = vpop.permute.xlu0 %2800
  %2802 = vrot.lane.b32.xlu0 %v2063, 122
  %v2803 = vpop.permute.xlu0 %2802
  %2804 = vrot.lane.b32.xlu0 %v2064, 122
  %v2805 = vpop.permute.xlu0 %2804
  %2806 = vrot.lane.b32.xlu0 %v2065, 122
  %v2807 = vpop.permute.xlu0 %2806
  %2808 = vrot.lane.b32.xlu0 %v2066, 122
  %v2809 = vpop.permute.xlu0 %2808
  %2810 = vrot.lane.b32.xlu0 %v2067, 122
  %v2811 = vpop.permute.xlu0 %2810
  %2812 = vrot.lane.b32.xlu0 %v2068, 122
  %v2813 = vpop.permute.xlu0 %2812
  %2814 = vrot.lane.b32.xlu0 %v2069, 122
  %v2815 = vpop.permute.xlu0 %2814
  %2816 = vrot.lane.b32.xlu0 %v2070, 122
  %v2817 = vpop.permute.xlu0 %2816
  %2818 = vrot.lane.b32.xlu0 %v2071, 122
  %v2819 = vpop.permute.xlu0 %2818
  %2820 = vrot.lane.b32.xlu0 %v2072, 122
  %v2821 = vpop.permute.xlu0 %2820
  %2822 = vrot.lane.b32.xlu0 %v2073, 122
  %v2823 = vpop.permute.xlu0 %2822
  %2824 = vrot.lane.b32.xlu0 %v2074, 122
  %v2825 = vpop.permute.xlu0 %2824
  %2826 = vrot.lane.b32.xlu0 %v2075, 122
  %v2827 = vpop.permute.xlu0 %2826
  %2828 = vrot.lane.b32.xlu0 %v2076, 122
  %v2829 = vpop.permute.xlu0 %2828
  %2830 = vrot.lane.b32.xlu0 %v2077, 122
  %v2831 = vpop.permute.xlu0 %2830
  %2832 = vrot.lane.b32.xlu0 %v2078, 122
  %v2833 = vpop.permute.xlu0 %2832
  %2834 = vrot.lane.b32.xlu0 %v2079, 122
  %v2835 = vpop.permute.xlu0 %2834
  %2836 = vrot.lane.b32.xlu0 %v2080, 122
  %v2837 = vpop.permute.xlu0 %2836
  %2838 = vrot.lane.b32.xlu0 %v2081, 122
  %v2839 = vpop.permute.xlu0 %2838
  %2840 = vrot.lane.b32.xlu0 %v2082, 122
  %v2841 = vpop.permute.xlu0 %2840
  %2842 = vrot.lane.b32.xlu0 %v2083, 122
  %v2843 = vpop.permute.xlu0 %2842
  %vm2844 = vcmask 998400
  %v2845 = vsel %vm2844, %v2781, %v2783
  %v2846 = vsel %vm2844, %v2783, %v2785
  %v2847 = vsel %vm2844, %v2785, %v2787
  %v2848 = vsel %vm2844, %v2787, %v2789
  %v2849 = vsel %vm2844, %v2789, %v2791
  %v2850 = vsel %vm2844, %v2791, %v2793
  %v2851 = vsel %vm2844, %v2793, %v2795
  %v2852 = vsel %vm2844, %v2795, %v2797
  %v2853 = vsel %vm2844, %v2797, %v2799
  %v2854 = vsel %vm2844, %v2799, %v2801
  %v2855 = vsel %vm2844, %v2801, %v2803
  %v2856 = vsel %vm2844, %v2803, %v2805
  %v2857 = vsel %vm2844, %v2805, %v2807
  %v2858 = vsel %vm2844, %v2807, %v2809
  %v2859 = vsel %vm2844, %v2809, %v2811
  %v2860 = vsel %vm2844, %v2813, %v2815
  %v2861 = vsel %vm2844, %v2815, %v2817
  %v2862 = vsel %vm2844, %v2817, %v2819
  %v2863 = vsel %vm2844, %v2819, %v2821
  %v2864 = vsel %vm2844, %v2821, %v2823
  %v2865 = vsel %vm2844, %v2823, %v2825
  %v2866 = vsel %vm2844, %v2825, %v2827
  %v2867 = vsel %vm2844, %v2827, %v2829
  %v2868 = vsel %vm2844, %v2829, %v2831
  %v2869 = vsel %vm2844, %v2831, %v2833
  %v2870 = vsel %vm2844, %v2833, %v2835
  %v2871 = vsel %vm2844, %v2835, %v2837
  %v2872 = vsel %vm2844, %v2837, %v2839
  %v2873 = vsel %vm2844, %v2839, %v2841
  %v2874 = vsel %vm2844, %v2841, %v2843
  %vm2905 = vcmask 998400
  %v2908 = vsel %vm2905, %v2811, %v2781
  %v2912 = vsel %vm2905, %v2843, %v2813
  %2914 = vrot.lane.b32.xlu0 %v2052, 121
  %v2915 = vpop.permute.xlu0 %2914
  %2916 = vrot.lane.b32.xlu0 %v2053, 121
  %v2917 = vpop.permute.xlu0 %2916
  %2918 = vrot.lane.b32.xlu0 %v2054, 121
  %v2919 = vpop.permute.xlu0 %2918
  %2920 = vrot.lane.b32.xlu0 %v2055, 121
  %v2921 = vpop.permute.xlu0 %2920
  %2922 = vrot.lane.b32.xlu0 %v2056, 121
  %v2923 = vpop.permute.xlu0 %2922
  %2924 = vrot.lane.b32.xlu0 %v2057, 121
  %v2925 = vpop.permute.xlu0 %2924
  %2926 = vrot.lane.b32.xlu0 %v2058, 121
  %v2927 = vpop.permute.xlu0 %2926
  %2928 = vrot.lane.b32.xlu0 %v2059, 121
  %v2929 = vpop.permute.xlu0 %2928
  %2930 = vrot.lane.b32.xlu0 %v2060, 121
  %v2931 = vpop.permute.xlu0 %2930
  %2932 = vrot.lane.b32.xlu0 %v2061, 121
  %v2933 = vpop.permute.xlu0 %2932
  %2934 = vrot.lane.b32.xlu0 %v2062, 121
  %v2935 = vpop.permute.xlu0 %2934
  %2936 = vrot.lane.b32.xlu0 %v2063, 121
  %v2937 = vpop.permute.xlu0 %2936
  %2938 = vrot.lane.b32.xlu0 %v2064, 121
  %v2939 = vpop.permute.xlu0 %2938
  %2940 = vrot.lane.b32.xlu0 %v2065, 121
  %v2941 = vpop.permute.xlu0 %2940
  %2942 = vrot.lane.b32.xlu0 %v2066, 121
  %v2943 = vpop.permute.xlu0 %2942
  %2944 = vrot.lane.b32.xlu0 %v2067, 121
  %v2945 = vpop.permute.xlu0 %2944
  %2946 = vrot.lane.b32.xlu0 %v2068, 121
  %v2947 = vpop.permute.xlu0 %2946
  %2948 = vrot.lane.b32.xlu0 %v2069, 121
  %v2949 = vpop.permute.xlu0 %2948
  %2950 = vrot.lane.b32.xlu0 %v2070, 121
  %v2951 = vpop.permute.xlu0 %2950
  %2952 = vrot.lane.b32.xlu0 %v2071, 121
  %v2953 = vpop.permute.xlu0 %2952
  %2954 = vrot.lane.b32.xlu0 %v2072, 121
  %v2955 = vpop.permute.xlu0 %2954
  %2956 = vrot.lane.b32.xlu0 %v2073, 121
  %v2957 = vpop.permute.xlu0 %2956
  %2958 = vrot.lane.b32.xlu0 %v2074, 121
  %v2959 = vpop.permute.xlu0 %2958
  %2960 = vrot.lane.b32.xlu0 %v2075, 121
  %v2961 = vpop.permute.xlu0 %2960
  %2962 = vrot.lane.b32.xlu0 %v2076, 121
  %v2963 = vpop.permute.xlu0 %2962
  %2964 = vrot.lane.b32.xlu0 %v2077, 121
  %v2965 = vpop.permute.xlu0 %2964
  %2966 = vrot.lane.b32.xlu0 %v2078, 121
  %v2967 = vpop.permute.xlu0 %2966
  %2968 = vrot.lane.b32.xlu0 %v2079, 121
  %v2969 = vpop.permute.xlu0 %2968
  %2970 = vrot.lane.b32.xlu0 %v2080, 121
  %v2971 = vpop.permute.xlu0 %2970
  %2972 = vrot.lane.b32.xlu0 %v2081, 121
  %v2973 = vpop.permute.xlu0 %2972
  %2974 = vrot.lane.b32.xlu0 %v2082, 121
  %v2975 = vpop.permute.xlu0 %2974
  %2976 = vrot.lane.b32.xlu0 %v2083, 121
  %v2977 = vpop.permute.xlu0 %2976
  %vm2978 = vcmask 990208
  %v2979 = vsel %vm2978, %v2915, %v2917
  %v2980 = vsel %vm2978, %v2917, %v2919
  %v2981 = vsel %vm2978, %v2919, %v2921
  %v2982 = vsel %vm2978, %v2921, %v2923
  %v2983 = vsel %vm2978, %v2923, %v2925
  %v2984 = vsel %vm2978, %v2925, %v2927
  %v2985 = vsel %vm2978, %v2927, %v2929
  %v2986 = vsel %vm2978, %v2929, %v2931
  %v2987 = vsel %vm2978, %v2931, %v2933
  %v2988 = vsel %vm2978, %v2933, %v2935
  %v2989 = vsel %vm2978, %v2935, %v2937
  %v2990 = vsel %vm2978, %v2937, %v2939
  %v2991 = vsel %vm2978, %v2939, %v2941
  %v2992 = vsel %vm2978, %v2941, %v2943
  %v2993 = vsel %vm2978, %v2943, %v2945
  %v2994 = vsel %vm2978, %v2947, %v2949
  %v2995 = vsel %vm2978, %v2949, %v2951
  %v2996 = vsel %vm2978, %v2951, %v2953
  %v2997 = vsel %vm2978, %v2953, %v2955
  %v2998 = vsel %vm2978, %v2955, %v2957
  %v2999 = vsel %vm2978, %v2957, %v2959
  %v3000 = vsel %vm2978, %v2959, %v2961
  %v3001 = vsel %vm2978, %v2961, %v2963
  %v3002 = vsel %vm2978, %v2963, %v2965
  %v3003 = vsel %vm2978, %v2965, %v2967
  %v3004 = vsel %vm2978, %v2967, %v2969
  %v3005 = vsel %vm2978, %v2969, %v2971
  %v3006 = vsel %vm2978, %v2971, %v2973
  %v3007 = vsel %vm2978, %v2973, %v2975
  %v3008 = vsel %vm2978, %v2975, %v2977
  %vm3039 = vcmask 990208
  %v3042 = vsel %vm3039, %v2945, %v2915
  %v3046 = vsel %vm3039, %v2977, %v2947
  %3048 = vrot.lane.b32.xlu0 %v2052, 120
  %v3049 = vpop.permute.xlu0 %3048
  %3050 = vrot.lane.b32.xlu0 %v2053, 120
  %v3051 = vpop.permute.xlu0 %3050
  %3052 = vrot.lane.b32.xlu0 %v2054, 120
  %v3053 = vpop.permute.xlu0 %3052
  %3054 = vrot.lane.b32.xlu0 %v2055, 120
  %v3055 = vpop.permute.xlu0 %3054
  %3056 = vrot.lane.b32.xlu0 %v2056, 120
  %v3057 = vpop.permute.xlu0 %3056
  %3058 = vrot.lane.b32.xlu0 %v2057, 120
  %v3059 = vpop.permute.xlu0 %3058
  %3060 = vrot.lane.b32.xlu0 %v2058, 120
  %v3061 = vpop.permute.xlu0 %3060
  %3062 = vrot.lane.b32.xlu0 %v2059, 120
  %v3063 = vpop.permute.xlu0 %3062
  %3064 = vrot.lane.b32.xlu0 %v2060, 120
  %v3065 = vpop.permute.xlu0 %3064
  %3066 = vrot.lane.b32.xlu0 %v2061, 120
  %v3067 = vpop.permute.xlu0 %3066
  %3068 = vrot.lane.b32.xlu0 %v2062, 120
  %v3069 = vpop.permute.xlu0 %3068
  %3070 = vrot.lane.b32.xlu0 %v2063, 120
  %v3071 = vpop.permute.xlu0 %3070
  %3072 = vrot.lane.b32.xlu0 %v2064, 120
  %v3073 = vpop.permute.xlu0 %3072
  %3074 = vrot.lane.b32.xlu0 %v2065, 120
  %v3075 = vpop.permute.xlu0 %3074
  %3076 = vrot.lane.b32.xlu0 %v2066, 120
  %v3077 = vpop.permute.xlu0 %3076
  %3078 = vrot.lane.b32.xlu0 %v2067, 120
  %v3079 = vpop.permute.xlu0 %3078
  %3080 = vrot.lane.b32.xlu0 %v2068, 120
  %v3081 = vpop.permute.xlu0 %3080
  %3082 = vrot.lane.b32.xlu0 %v2069, 120
  %v3083 = vpop.permute.xlu0 %3082
  %3084 = vrot.lane.b32.xlu0 %v2070, 120
  %v3085 = vpop.permute.xlu0 %3084
  %3086 = vrot.lane.b32.xlu0 %v2071, 120
  %v3087 = vpop.permute.xlu0 %3086
  %3088 = vrot.lane.b32.xlu0 %v2072, 120
  %v3089 = vpop.permute.xlu0 %3088
  %3090 = vrot.lane.b32.xlu0 %v2073, 120
  %v3091 = vpop.permute.xlu0 %3090
  %3092 = vrot.lane.b32.xlu0 %v2074, 120
  %v3093 = vpop.permute.xlu0 %3092
  %3094 = vrot.lane.b32.xlu0 %v2075, 120
  %v3095 = vpop.permute.xlu0 %3094
  %3096 = vrot.lane.b32.xlu0 %v2076, 120
  %v3097 = vpop.permute.xlu0 %3096
  %3098 = vrot.lane.b32.xlu0 %v2077, 120
  %v3099 = vpop.permute.xlu0 %3098
  %3100 = vrot.lane.b32.xlu0 %v2078, 120
  %v3101 = vpop.permute.xlu0 %3100
  %3102 = vrot.lane.b32.xlu0 %v2079, 120
  %v3103 = vpop.permute.xlu0 %3102
  %3104 = vrot.lane.b32.xlu0 %v2080, 120
  %v3105 = vpop.permute.xlu0 %3104
  %3106 = vrot.lane.b32.xlu0 %v2081, 120
  %v3107 = vpop.permute.xlu0 %3106
  %3108 = vrot.lane.b32.xlu0 %v2082, 120
  %v3109 = vpop.permute.xlu0 %3108
  %3110 = vrot.lane.b32.xlu0 %v2083, 120
  %v3111 = vpop.permute.xlu0 %3110
  %vm3112 = vcmask 982016
  %v3113 = vsel %vm3112, %v3049, %v3051
  %v3114 = vsel %vm3112, %v3051, %v3053
  %v3115 = vsel %vm3112, %v3053, %v3055
  %v3116 = vsel %vm3112, %v3055, %v3057
  %v3117 = vsel %vm3112, %v3057, %v3059
  %v3118 = vsel %vm3112, %v3059, %v3061
  %v3119 = vsel %vm3112, %v3061, %v3063
  %v3120 = vsel %vm3112, %v3063, %v3065
  %v3121 = vsel %vm3112, %v3065, %v3067
  %v3122 = vsel %vm3112, %v3067, %v3069
  %v3123 = vsel %vm3112, %v3069, %v3071
  %v3124 = vsel %vm3112, %v3071, %v3073
  %v3125 = vsel %vm3112, %v3073, %v3075
  %v3126 = vsel %vm3112, %v3075, %v3077
  %v3127 = vsel %vm3112, %v3077, %v3079
  %v3128 = vsel %vm3112, %v3081, %v3083
  %v3129 = vsel %vm3112, %v3083, %v3085
  %v3130 = vsel %vm3112, %v3085, %v3087
  %v3131 = vsel %vm3112, %v3087, %v3089
  %v3132 = vsel %vm3112, %v3089, %v3091
  %v3133 = vsel %vm3112, %v3091, %v3093
  %v3134 = vsel %vm3112, %v3093, %v3095
  %v3135 = vsel %vm3112, %v3095, %v3097
  %v3136 = vsel %vm3112, %v3097, %v3099
  %v3137 = vsel %vm3112, %v3099, %v3101
  %v3138 = vsel %vm3112, %v3101, %v3103
  %v3139 = vsel %vm3112, %v3103, %v3105
  %v3140 = vsel %vm3112, %v3105, %v3107
  %v3141 = vsel %vm3112, %v3107, %v3109
  %v3142 = vsel %vm3112, %v3109, %v3111
  %vm3173 = vcmask 982016
  %v3176 = vsel %vm3173, %v3079, %v3049
  %v3180 = vsel %vm3173, %v3111, %v3081
  %3182 = vrot.lane.b32.xlu0 %v2052, 119
  %v3183 = vpop.permute.xlu0 %3182
  %3184 = vrot.lane.b32.xlu0 %v2053, 119
  %v3185 = vpop.permute.xlu0 %3184
  %3186 = vrot.lane.b32.xlu0 %v2054, 119
  %v3187 = vpop.permute.xlu0 %3186
  %3188 = vrot.lane.b32.xlu0 %v2055, 119
  %v3189 = vpop.permute.xlu0 %3188
  %3190 = vrot.lane.b32.xlu0 %v2056, 119
  %v3191 = vpop.permute.xlu0 %3190
  %3192 = vrot.lane.b32.xlu0 %v2057, 119
  %v3193 = vpop.permute.xlu0 %3192
  %3194 = vrot.lane.b32.xlu0 %v2058, 119
  %v3195 = vpop.permute.xlu0 %3194
  %3196 = vrot.lane.b32.xlu0 %v2059, 119
  %v3197 = vpop.permute.xlu0 %3196
  %3198 = vrot.lane.b32.xlu0 %v2060, 119
  %v3199 = vpop.permute.xlu0 %3198
  %3200 = vrot.lane.b32.xlu0 %v2061, 119
  %v3201 = vpop.permute.xlu0 %3200
  %3202 = vrot.lane.b32.xlu0 %v2062, 119
  %v3203 = vpop.permute.xlu0 %3202
  %3204 = vrot.lane.b32.xlu0 %v2063, 119
  %v3205 = vpop.permute.xlu0 %3204
  %3206 = vrot.lane.b32.xlu0 %v2064, 119
  %v3207 = vpop.permute.xlu0 %3206
  %3208 = vrot.lane.b32.xlu0 %v2065, 119
  %v3209 = vpop.permute.xlu0 %3208
  %3210 = vrot.lane.b32.xlu0 %v2066, 119
  %v3211 = vpop.permute.xlu0 %3210
  %3212 = vrot.lane.b32.xlu0 %v2067, 119
  %v3213 = vpop.permute.xlu0 %3212
  %3214 = vrot.lane.b32.xlu0 %v2068, 119
  %v3215 = vpop.permute.xlu0 %3214
  %3216 = vrot.lane.b32.xlu0 %v2069, 119
  %v3217 = vpop.permute.xlu0 %3216
  %3218 = vrot.lane.b32.xlu0 %v2070, 119
  %v3219 = vpop.permute.xlu0 %3218
  %3220 = vrot.lane.b32.xlu0 %v2071, 119
  %v3221 = vpop.permute.xlu0 %3220
  %3222 = vrot.lane.b32.xlu0 %v2072, 119
  %v3223 = vpop.permute.xlu0 %3222
  %3224 = vrot.lane.b32.xlu0 %v2073, 119
  %v3225 = vpop.permute.xlu0 %3224
  %3226 = vrot.lane.b32.xlu0 %v2074, 119
  %v3227 = vpop.permute.xlu0 %3226
  %3228 = vrot.lane.b32.xlu0 %v2075, 119
  %v3229 = vpop.permute.xlu0 %3228
  %3230 = vrot.lane.b32.xlu0 %v2076, 119
  %v3231 = vpop.permute.xlu0 %3230
  %3232 = vrot.lane.b32.xlu0 %v2077, 119
  %v3233 = vpop.permute.xlu0 %3232
  %3234 = vrot.lane.b32.xlu0 %v2078, 119
  %v3235 = vpop.permute.xlu0 %3234
  %3236 = vrot.lane.b32.xlu0 %v2079, 119
  %v3237 = vpop.permute.xlu0 %3236
  %3238 = vrot.lane.b32.xlu0 %v2080, 119
  %v3239 = vpop.permute.xlu0 %3238
  %3240 = vrot.lane.b32.xlu0 %v2081, 119
  %v3241 = vpop.permute.xlu0 %3240
  %3242 = vrot.lane.b32.xlu0 %v2082, 119
  %v3243 = vpop.permute.xlu0 %3242
  %3244 = vrot.lane.b32.xlu0 %v2083, 119
  %v3245 = vpop.permute.xlu0 %3244
  %vm3246 = vcmask 973824
  %v3247 = vsel %vm3246, %v3183, %v3185
  %v3248 = vsel %vm3246, %v3185, %v3187
  %v3249 = vsel %vm3246, %v3187, %v3189
  %v3250 = vsel %vm3246, %v3189, %v3191
  %v3251 = vsel %vm3246, %v3191, %v3193
  %v3252 = vsel %vm3246, %v3193, %v3195
  %v3253 = vsel %vm3246, %v3195, %v3197
  %v3254 = vsel %vm3246, %v3197, %v3199
  %v3255 = vsel %vm3246, %v3199, %v3201
  %v3256 = vsel %vm3246, %v3201, %v3203
  %v3257 = vsel %vm3246, %v3203, %v3205
  %v3258 = vsel %vm3246, %v3205, %v3207
  %v3259 = vsel %vm3246, %v3207, %v3209
  %v3260 = vsel %vm3246, %v3209, %v3211
  %v3261 = vsel %vm3246, %v3211, %v3213
  %v3262 = vsel %vm3246, %v3215, %v3217
  %v3263 = vsel %vm3246, %v3217, %v3219
  %v3264 = vsel %vm3246, %v3219, %v3221
  %v3265 = vsel %vm3246, %v3221, %v3223
  %v3266 = vsel %vm3246, %v3223, %v3225
  %v3267 = vsel %vm3246, %v3225, %v3227
  %v3268 = vsel %vm3246, %v3227, %v3229
  %v3269 = vsel %vm3246, %v3229, %v3231
  %v3270 = vsel %vm3246, %v3231, %v3233
  %v3271 = vsel %vm3246, %v3233, %v3235
  %v3272 = vsel %vm3246, %v3235, %v3237
  %v3273 = vsel %vm3246, %v3237, %v3239
  %v3274 = vsel %vm3246, %v3239, %v3241
  %v3275 = vsel %vm3246, %v3241, %v3243
  %v3276 = vsel %vm3246, %v3243, %v3245
  %vm3307 = vcmask 973824
  %v3310 = vsel %vm3307, %v3213, %v3183
  %v3314 = vsel %vm3307, %v3245, %v3215
  %3316 = vrot.lane.b32.xlu0 %v2052, 118
  %v3317 = vpop.permute.xlu0 %3316
  %3318 = vrot.lane.b32.xlu0 %v2053, 118
  %v3319 = vpop.permute.xlu0 %3318
  %3320 = vrot.lane.b32.xlu0 %v2054, 118
  %v3321 = vpop.permute.xlu0 %3320
  %3322 = vrot.lane.b32.xlu0 %v2055, 118
  %v3323 = vpop.permute.xlu0 %3322
  %3324 = vrot.lane.b32.xlu0 %v2056, 118
  %v3325 = vpop.permute.xlu0 %3324
  %3326 = vrot.lane.b32.xlu0 %v2057, 118
  %v3327 = vpop.permute.xlu0 %3326
  %3328 = vrot.lane.b32.xlu0 %v2058, 118
  %v3329 = vpop.permute.xlu0 %3328
  %3330 = vrot.lane.b32.xlu0 %v2059, 118
  %v3331 = vpop.permute.xlu0 %3330
  %3332 = vrot.lane.b32.xlu0 %v2060, 118
  %v3333 = vpop.permute.xlu0 %3332
  %3334 = vrot.lane.b32.xlu0 %v2061, 118
  %v3335 = vpop.permute.xlu0 %3334
  %3336 = vrot.lane.b32.xlu0 %v2062, 118
  %v3337 = vpop.permute.xlu0 %3336
  %3338 = vrot.lane.b32.xlu0 %v2063, 118
  %v3339 = vpop.permute.xlu0 %3338
  %3340 = vrot.lane.b32.xlu0 %v2064, 118
  %v3341 = vpop.permute.xlu0 %3340
  %3342 = vrot.lane.b32.xlu0 %v2065, 118
  %v3343 = vpop.permute.xlu0 %3342
  %3344 = vrot.lane.b32.xlu0 %v2066, 118
  %v3345 = vpop.permute.xlu0 %3344
  %3346 = vrot.lane.b32.xlu0 %v2067, 118
  %v3347 = vpop.permute.xlu0 %3346
  %3348 = vrot.lane.b32.xlu0 %v2068, 118
  %v3349 = vpop.permute.xlu0 %3348
  %3350 = vrot.lane.b32.xlu0 %v2069, 118
  %v3351 = vpop.permute.xlu0 %3350
  %3352 = vrot.lane.b32.xlu0 %v2070, 118
  %v3353 = vpop.permute.xlu0 %3352
  %3354 = vrot.lane.b32.xlu0 %v2071, 118
  %v3355 = vpop.permute.xlu0 %3354
  %3356 = vrot.lane.b32.xlu0 %v2072, 118
  %v3357 = vpop.permute.xlu0 %3356
  %3358 = vrot.lane.b32.xlu0 %v2073, 118
  %v3359 = vpop.permute.xlu0 %3358
  %3360 = vrot.lane.b32.xlu0 %v2074, 118
  %v3361 = vpop.permute.xlu0 %3360
  %3362 = vrot.lane.b32.xlu0 %v2075, 118
  %v3363 = vpop.permute.xlu0 %3362
  %3364 = vrot.lane.b32.xlu0 %v2076, 118
  %v3365 = vpop.permute.xlu0 %3364
  %3366 = vrot.lane.b32.xlu0 %v2077, 118
  %v3367 = vpop.permute.xlu0 %3366
  %3368 = vrot.lane.b32.xlu0 %v2078, 118
  %v3369 = vpop.permute.xlu0 %3368
  %3370 = vrot.lane.b32.xlu0 %v2079, 118
  %v3371 = vpop.permute.xlu0 %3370
  %3372 = vrot.lane.b32.xlu0 %v2080, 118
  %v3373 = vpop.permute.xlu0 %3372
  %3374 = vrot.lane.b32.xlu0 %v2081, 118
  %v3375 = vpop.permute.xlu0 %3374
  %3376 = vrot.lane.b32.xlu0 %v2082, 118
  %v3377 = vpop.permute.xlu0 %3376
  %3378 = vrot.lane.b32.xlu0 %v2083, 118
  %v3379 = vpop.permute.xlu0 %3378
  %vm3380 = vcmask 965632
  %v3381 = vsel %vm3380, %v3317, %v3319
  %v3382 = vsel %vm3380, %v3319, %v3321
  %v3383 = vsel %vm3380, %v3321, %v3323
  %v3384 = vsel %vm3380, %v3323, %v3325
  %v3385 = vsel %vm3380, %v3325, %v3327
  %v3386 = vsel %vm3380, %v3327, %v3329
  %v3387 = vsel %vm3380, %v3329, %v3331
  %v3388 = vsel %vm3380, %v3331, %v3333
  %v3389 = vsel %vm3380, %v3333, %v3335
  %v3390 = vsel %vm3380, %v3335, %v3337
  %v3391 = vsel %vm3380, %v3337, %v3339
  %v3392 = vsel %vm3380, %v3339, %v3341
  %v3393 = vsel %vm3380, %v3341, %v3343
  %v3394 = vsel %vm3380, %v3343, %v3345
  %v3395 = vsel %vm3380, %v3345, %v3347
  %v3396 = vsel %vm3380, %v3349, %v3351
  %v3397 = vsel %vm3380, %v3351, %v3353
  %v3398 = vsel %vm3380, %v3353, %v3355
  %v3399 = vsel %vm3380, %v3355, %v3357
  %v3400 = vsel %vm3380, %v3357, %v3359
  %v3401 = vsel %vm3380, %v3359, %v3361
  %v3402 = vsel %vm3380, %v3361, %v3363
  %v3403 = vsel %vm3380, %v3363, %v3365
  %v3404 = vsel %vm3380, %v3365, %v3367
  %v3405 = vsel %vm3380, %v3367, %v3369
  %v3406 = vsel %vm3380, %v3369, %v3371
  %v3407 = vsel %vm3380, %v3371, %v3373
  %v3408 = vsel %vm3380, %v3373, %v3375
  %v3409 = vsel %vm3380, %v3375, %v3377
  %v3410 = vsel %vm3380, %v3377, %v3379
  %vm3441 = vcmask 965632
  %v3444 = vsel %vm3441, %v3347, %v3317
  %v3448 = vsel %vm3441, %v3379, %v3349
  %3450 = vrot.lane.b32.xlu0 %v2052, 117
  %v3451 = vpop.permute.xlu0 %3450
  %3452 = vrot.lane.b32.xlu0 %v2053, 117
  %v3453 = vpop.permute.xlu0 %3452
  %3454 = vrot.lane.b32.xlu0 %v2054, 117
  %v3455 = vpop.permute.xlu0 %3454
  %3456 = vrot.lane.b32.xlu0 %v2055, 117
  %v3457 = vpop.permute.xlu0 %3456
  %3458 = vrot.lane.b32.xlu0 %v2056, 117
  %v3459 = vpop.permute.xlu0 %3458
  %3460 = vrot.lane.b32.xlu0 %v2057, 117
  %v3461 = vpop.permute.xlu0 %3460
  %3462 = vrot.lane.b32.xlu0 %v2058, 117
  %v3463 = vpop.permute.xlu0 %3462
  %3464 = vrot.lane.b32.xlu0 %v2059, 117
  %v3465 = vpop.permute.xlu0 %3464
  %3466 = vrot.lane.b32.xlu0 %v2060, 117
  %v3467 = vpop.permute.xlu0 %3466
  %3468 = vrot.lane.b32.xlu0 %v2061, 117
  %v3469 = vpop.permute.xlu0 %3468
  %3470 = vrot.lane.b32.xlu0 %v2062, 117
  %v3471 = vpop.permute.xlu0 %3470
  %3472 = vrot.lane.b32.xlu0 %v2063, 117
  %v3473 = vpop.permute.xlu0 %3472
  %3474 = vrot.lane.b32.xlu0 %v2064, 117
  %v3475 = vpop.permute.xlu0 %3474
  %3476 = vrot.lane.b32.xlu0 %v2065, 117
  %v3477 = vpop.permute.xlu0 %3476
  %3478 = vrot.lane.b32.xlu0 %v2066, 117
  %v3479 = vpop.permute.xlu0 %3478
  %3480 = vrot.lane.b32.xlu0 %v2067, 117
  %v3481 = vpop.permute.xlu0 %3480
  %3482 = vrot.lane.b32.xlu0 %v2068, 117
  %v3483 = vpop.permute.xlu0 %3482
  %3484 = vrot.lane.b32.xlu0 %v2069, 117
  %v3485 = vpop.permute.xlu0 %3484
  %3486 = vrot.lane.b32.xlu0 %v2070, 117
  %v3487 = vpop.permute.xlu0 %3486
  %3488 = vrot.lane.b32.xlu0 %v2071, 117
  %v3489 = vpop.permute.xlu0 %3488
  %3490 = vrot.lane.b32.xlu0 %v2072, 117
  %v3491 = vpop.permute.xlu0 %3490
  %3492 = vrot.lane.b32.xlu0 %v2073, 117
  %v3493 = vpop.permute.xlu0 %3492
  %3494 = vrot.lane.b32.xlu0 %v2074, 117
  %v3495 = vpop.permute.xlu0 %3494
  %3496 = vrot.lane.b32.xlu0 %v2075, 117
  %v3497 = vpop.permute.xlu0 %3496
  %3498 = vrot.lane.b32.xlu0 %v2076, 117
  %v3499 = vpop.permute.xlu0 %3498
  %3500 = vrot.lane.b32.xlu0 %v2077, 117
  %v3501 = vpop.permute.xlu0 %3500
  %3502 = vrot.lane.b32.xlu0 %v2078, 117
  %v3503 = vpop.permute.xlu0 %3502
  %3504 = vrot.lane.b32.xlu0 %v2079, 117
  %v3505 = vpop.permute.xlu0 %3504
  %3506 = vrot.lane.b32.xlu0 %v2080, 117
  %v3507 = vpop.permute.xlu0 %3506
  %3508 = vrot.lane.b32.xlu0 %v2081, 117
  %v3509 = vpop.permute.xlu0 %3508
  %3510 = vrot.lane.b32.xlu0 %v2082, 117
  %v3511 = vpop.permute.xlu0 %3510
  %3512 = vrot.lane.b32.xlu0 %v2083, 117
  %v3513 = vpop.permute.xlu0 %3512
  %vm3514 = vcmask 957440
  %v3515 = vsel %vm3514, %v3451, %v3453
  %v3516 = vsel %vm3514, %v3453, %v3455
  %v3517 = vsel %vm3514, %v3455, %v3457
  %v3518 = vsel %vm3514, %v3457, %v3459
  %v3519 = vsel %vm3514, %v3459, %v3461
  %v3520 = vsel %vm3514, %v3461, %v3463
  %v3521 = vsel %vm3514, %v3463, %v3465
  %v3522 = vsel %vm3514, %v3465, %v3467
  %v3523 = vsel %vm3514, %v3467, %v3469
  %v3524 = vsel %vm3514, %v3469, %v3471
  %v3525 = vsel %vm3514, %v3471, %v3473
  %v3526 = vsel %vm3514, %v3473, %v3475
  %v3527 = vsel %vm3514, %v3475, %v3477
  %v3528 = vsel %vm3514, %v3477, %v3479
  %v3529 = vsel %vm3514, %v3479, %v3481
  %v3530 = vsel %vm3514, %v3483, %v3485
  %v3531 = vsel %vm3514, %v3485, %v3487
  %v3532 = vsel %vm3514, %v3487, %v3489
  %v3533 = vsel %vm3514, %v3489, %v3491
  %v3534 = vsel %vm3514, %v3491, %v3493
  %v3535 = vsel %vm3514, %v3493, %v3495
  %v3536 = vsel %vm3514, %v3495, %v3497
  %v3537 = vsel %vm3514, %v3497, %v3499
  %v3538 = vsel %vm3514, %v3499, %v3501
  %v3539 = vsel %vm3514, %v3501, %v3503
  %v3540 = vsel %vm3514, %v3503, %v3505
  %v3541 = vsel %vm3514, %v3505, %v3507
  %v3542 = vsel %vm3514, %v3507, %v3509
  %v3543 = vsel %vm3514, %v3509, %v3511
  %v3544 = vsel %vm3514, %v3511, %v3513
  %vm3575 = vcmask 957440
  %v3578 = vsel %vm3575, %v3481, %v3451
  %v3582 = vsel %vm3575, %v3513, %v3483
  %3584 = vrot.lane.b32.xlu0 %v2052, 116
  %v3585 = vpop.permute.xlu0 %3584
  %3586 = vrot.lane.b32.xlu0 %v2053, 116
  %v3587 = vpop.permute.xlu0 %3586
  %3588 = vrot.lane.b32.xlu0 %v2054, 116
  %v3589 = vpop.permute.xlu0 %3588
  %3590 = vrot.lane.b32.xlu0 %v2055, 116
  %v3591 = vpop.permute.xlu0 %3590
  %3592 = vrot.lane.b32.xlu0 %v2056, 116
  %v3593 = vpop.permute.xlu0 %3592
  %3594 = vrot.lane.b32.xlu0 %v2057, 116
  %v3595 = vpop.permute.xlu0 %3594
  %3596 = vrot.lane.b32.xlu0 %v2058, 116
  %v3597 = vpop.permute.xlu0 %3596
  %3598 = vrot.lane.b32.xlu0 %v2059, 116
  %v3599 = vpop.permute.xlu0 %3598
  %3600 = vrot.lane.b32.xlu0 %v2060, 116
  %v3601 = vpop.permute.xlu0 %3600
  %3602 = vrot.lane.b32.xlu0 %v2061, 116
  %v3603 = vpop.permute.xlu0 %3602
  %3604 = vrot.lane.b32.xlu0 %v2062, 116
  %v3605 = vpop.permute.xlu0 %3604
  %3606 = vrot.lane.b32.xlu0 %v2063, 116
  %v3607 = vpop.permute.xlu0 %3606
  %3608 = vrot.lane.b32.xlu0 %v2064, 116
  %v3609 = vpop.permute.xlu0 %3608
  %3610 = vrot.lane.b32.xlu0 %v2065, 116
  %v3611 = vpop.permute.xlu0 %3610
  %3612 = vrot.lane.b32.xlu0 %v2066, 116
  %v3613 = vpop.permute.xlu0 %3612
  %3614 = vrot.lane.b32.xlu0 %v2067, 116
  %v3615 = vpop.permute.xlu0 %3614
  %3616 = vrot.lane.b32.xlu0 %v2068, 116
  %v3617 = vpop.permute.xlu0 %3616
  %3618 = vrot.lane.b32.xlu0 %v2069, 116
  %v3619 = vpop.permute.xlu0 %3618
  %3620 = vrot.lane.b32.xlu0 %v2070, 116
  %v3621 = vpop.permute.xlu0 %3620
  %3622 = vrot.lane.b32.xlu0 %v2071, 116
  %v3623 = vpop.permute.xlu0 %3622
  %3624 = vrot.lane.b32.xlu0 %v2072, 116
  %v3625 = vpop.permute.xlu0 %3624
  %3626 = vrot.lane.b32.xlu0 %v2073, 116
  %v3627 = vpop.permute.xlu0 %3626
  %3628 = vrot.lane.b32.xlu0 %v2074, 116
  %v3629 = vpop.permute.xlu0 %3628
  %3630 = vrot.lane.b32.xlu0 %v2075, 116
  %v3631 = vpop.permute.xlu0 %3630
  %3632 = vrot.lane.b32.xlu0 %v2076, 116
  %v3633 = vpop.permute.xlu0 %3632
  %3634 = vrot.lane.b32.xlu0 %v2077, 116
  %v3635 = vpop.permute.xlu0 %3634
  %3636 = vrot.lane.b32.xlu0 %v2078, 116
  %v3637 = vpop.permute.xlu0 %3636
  %3638 = vrot.lane.b32.xlu0 %v2079, 116
  %v3639 = vpop.permute.xlu0 %3638
  %3640 = vrot.lane.b32.xlu0 %v2080, 116
  %v3641 = vpop.permute.xlu0 %3640
  %3642 = vrot.lane.b32.xlu0 %v2081, 116
  %v3643 = vpop.permute.xlu0 %3642
  %3644 = vrot.lane.b32.xlu0 %v2082, 116
  %v3645 = vpop.permute.xlu0 %3644
  %3646 = vrot.lane.b32.xlu0 %v2083, 116
  %v3647 = vpop.permute.xlu0 %3646
  %vm3648 = vcmask 949248
  %v3649 = vsel %vm3648, %v3585, %v3587
  %v3650 = vsel %vm3648, %v3587, %v3589
  %v3651 = vsel %vm3648, %v3589, %v3591
  %v3652 = vsel %vm3648, %v3591, %v3593
  %v3653 = vsel %vm3648, %v3593, %v3595
  %v3654 = vsel %vm3648, %v3595, %v3597
  %v3655 = vsel %vm3648, %v3597, %v3599
  %v3656 = vsel %vm3648, %v3599, %v3601
  %v3657 = vsel %vm3648, %v3601, %v3603
  %v3658 = vsel %vm3648, %v3603, %v3605
  %v3659 = vsel %vm3648, %v3605, %v3607
  %v3660 = vsel %vm3648, %v3607, %v3609
  %v3661 = vsel %vm3648, %v3609, %v3611
  %v3662 = vsel %vm3648, %v3611, %v3613
  %v3663 = vsel %vm3648, %v3613, %v3615
  %v3664 = vsel %vm3648, %v3617, %v3619
  %v3665 = vsel %vm3648, %v3619, %v3621
  %v3666 = vsel %vm3648, %v3621, %v3623
  %v3667 = vsel %vm3648, %v3623, %v3625
  %v3668 = vsel %vm3648, %v3625, %v3627
  %v3669 = vsel %vm3648, %v3627, %v3629
  %v3670 = vsel %vm3648, %v3629, %v3631
  %v3671 = vsel %vm3648, %v3631, %v3633
  %v3672 = vsel %vm3648, %v3633, %v3635
  %v3673 = vsel %vm3648, %v3635, %v3637
  %v3674 = vsel %vm3648, %v3637, %v3639
  %v3675 = vsel %vm3648, %v3639, %v3641
  %v3676 = vsel %vm3648, %v3641, %v3643
  %v3677 = vsel %vm3648, %v3643, %v3645
  %v3678 = vsel %vm3648, %v3645, %v3647
  %vm3709 = vcmask 949248
  %v3712 = vsel %vm3709, %v3615, %v3585
  %v3716 = vsel %vm3709, %v3647, %v3617
  %3718 = vrot.lane.b32.xlu0 %v2052, 115
  %v3719 = vpop.permute.xlu0 %3718
  %3720 = vrot.lane.b32.xlu0 %v2053, 115
  %v3721 = vpop.permute.xlu0 %3720
  %3722 = vrot.lane.b32.xlu0 %v2054, 115
  %v3723 = vpop.permute.xlu0 %3722
  %3724 = vrot.lane.b32.xlu0 %v2055, 115
  %v3725 = vpop.permute.xlu0 %3724
  %3726 = vrot.lane.b32.xlu0 %v2056, 115
  %v3727 = vpop.permute.xlu0 %3726
  %3728 = vrot.lane.b32.xlu0 %v2057, 115
  %v3729 = vpop.permute.xlu0 %3728
  %3730 = vrot.lane.b32.xlu0 %v2058, 115
  %v3731 = vpop.permute.xlu0 %3730
  %3732 = vrot.lane.b32.xlu0 %v2059, 115
  %v3733 = vpop.permute.xlu0 %3732
  %3734 = vrot.lane.b32.xlu0 %v2060, 115
  %v3735 = vpop.permute.xlu0 %3734
  %3736 = vrot.lane.b32.xlu0 %v2061, 115
  %v3737 = vpop.permute.xlu0 %3736
  %3738 = vrot.lane.b32.xlu0 %v2062, 115
  %v3739 = vpop.permute.xlu0 %3738
  %3740 = vrot.lane.b32.xlu0 %v2063, 115
  %v3741 = vpop.permute.xlu0 %3740
  %3742 = vrot.lane.b32.xlu0 %v2064, 115
  %v3743 = vpop.permute.xlu0 %3742
  %3744 = vrot.lane.b32.xlu0 %v2065, 115
  %v3745 = vpop.permute.xlu0 %3744
  %3746 = vrot.lane.b32.xlu0 %v2066, 115
  %v3747 = vpop.permute.xlu0 %3746
  %3748 = vrot.lane.b32.xlu0 %v2067, 115
  %v3749 = vpop.permute.xlu0 %3748
  %3750 = vrot.lane.b32.xlu0 %v2068, 115
  %v3751 = vpop.permute.xlu0 %3750
  %3752 = vrot.lane.b32.xlu0 %v2069, 115
  %v3753 = vpop.permute.xlu0 %3752
  %3754 = vrot.lane.b32.xlu0 %v2070, 115
  %v3755 = vpop.permute.xlu0 %3754
  %3756 = vrot.lane.b32.xlu0 %v2071, 115
  %v3757 = vpop.permute.xlu0 %3756
  %3758 = vrot.lane.b32.xlu0 %v2072, 115
  %v3759 = vpop.permute.xlu0 %3758
  %3760 = vrot.lane.b32.xlu0 %v2073, 115
  %v3761 = vpop.permute.xlu0 %3760
  %3762 = vrot.lane.b32.xlu0 %v2074, 115
  %v3763 = vpop.permute.xlu0 %3762
  %3764 = vrot.lane.b32.xlu0 %v2075, 115
  %v3765 = vpop.permute.xlu0 %3764
  %3766 = vrot.lane.b32.xlu0 %v2076, 115
  %v3767 = vpop.permute.xlu0 %3766
  %3768 = vrot.lane.b32.xlu0 %v2077, 115
  %v3769 = vpop.permute.xlu0 %3768
  %3770 = vrot.lane.b32.xlu0 %v2078, 115
  %v3771 = vpop.permute.xlu0 %3770
  %3772 = vrot.lane.b32.xlu0 %v2079, 115
  %v3773 = vpop.permute.xlu0 %3772
  %3774 = vrot.lane.b32.xlu0 %v2080, 115
  %v3775 = vpop.permute.xlu0 %3774
  %3776 = vrot.lane.b32.xlu0 %v2081, 115
  %v3777 = vpop.permute.xlu0 %3776
  %3778 = vrot.lane.b32.xlu0 %v2082, 115
  %v3779 = vpop.permute.xlu0 %3778
  %3780 = vrot.lane.b32.xlu0 %v2083, 115
  %v3781 = vpop.permute.xlu0 %3780
  %vm3782 = vcmask 941056
  %v3783 = vsel %vm3782, %v3719, %v3721
  %v3784 = vsel %vm3782, %v3721, %v3723
  %v3785 = vsel %vm3782, %v3723, %v3725
  %v3786 = vsel %vm3782, %v3725, %v3727
  %v3787 = vsel %vm3782, %v3727, %v3729
  %v3788 = vsel %vm3782, %v3729, %v3731
  %v3789 = vsel %vm3782, %v3731, %v3733
  %v3790 = vsel %vm3782, %v3733, %v3735
  %v3791 = vsel %vm3782, %v3735, %v3737
  %v3792 = vsel %vm3782, %v3737, %v3739
  %v3793 = vsel %vm3782, %v3739, %v3741
  %v3794 = vsel %vm3782, %v3741, %v3743
  %v3795 = vsel %vm3782, %v3743, %v3745
  %v3796 = vsel %vm3782, %v3745, %v3747
  %v3797 = vsel %vm3782, %v3747, %v3749
  %v3798 = vsel %vm3782, %v3751, %v3753
  %v3799 = vsel %vm3782, %v3753, %v3755
  %v3800 = vsel %vm3782, %v3755, %v3757
  %v3801 = vsel %vm3782, %v3757, %v3759
  %v3802 = vsel %vm3782, %v3759, %v3761
  %v3803 = vsel %vm3782, %v3761, %v3763
  %v3804 = vsel %vm3782, %v3763, %v3765
  %v3805 = vsel %vm3782, %v3765, %v3767
  %v3806 = vsel %vm3782, %v3767, %v3769
  %v3807 = vsel %vm3782, %v3769, %v3771
  %v3808 = vsel %vm3782, %v3771, %v3773
  %v3809 = vsel %vm3782, %v3773, %v3775
  %v3810 = vsel %vm3782, %v3775, %v3777
  %v3811 = vsel %vm3782, %v3777, %v3779
  %v3812 = vsel %vm3782, %v3779, %v3781
  %vm3843 = vcmask 941056
  %v3846 = vsel %vm3843, %v3749, %v3719
  %v3850 = vsel %vm3843, %v3781, %v3751
  %3852 = vrot.lane.b32.xlu0 %v2052, 114
  %v3853 = vpop.permute.xlu0 %3852
  %3854 = vrot.lane.b32.xlu0 %v2053, 114
  %v3855 = vpop.permute.xlu0 %3854
  %3856 = vrot.lane.b32.xlu0 %v2054, 114
  %v3857 = vpop.permute.xlu0 %3856
  %3858 = vrot.lane.b32.xlu0 %v2055, 114
  %v3859 = vpop.permute.xlu0 %3858
  %3860 = vrot.lane.b32.xlu0 %v2056, 114
  %v3861 = vpop.permute.xlu0 %3860
  %3862 = vrot.lane.b32.xlu0 %v2057, 114
  %v3863 = vpop.permute.xlu0 %3862
  %3864 = vrot.lane.b32.xlu0 %v2058, 114
  %v3865 = vpop.permute.xlu0 %3864
  %3866 = vrot.lane.b32.xlu0 %v2059, 114
  %v3867 = vpop.permute.xlu0 %3866
  %3868 = vrot.lane.b32.xlu0 %v2060, 114
  %v3869 = vpop.permute.xlu0 %3868
  %3870 = vrot.lane.b32.xlu0 %v2061, 114
  %v3871 = vpop.permute.xlu0 %3870
  %3872 = vrot.lane.b32.xlu0 %v2062, 114
  %v3873 = vpop.permute.xlu0 %3872
  %3874 = vrot.lane.b32.xlu0 %v2063, 114
  %v3875 = vpop.permute.xlu0 %3874
  %3876 = vrot.lane.b32.xlu0 %v2064, 114
  %v3877 = vpop.permute.xlu0 %3876
  %3878 = vrot.lane.b32.xlu0 %v2065, 114
  %v3879 = vpop.permute.xlu0 %3878
  %3880 = vrot.lane.b32.xlu0 %v2066, 114
  %v3881 = vpop.permute.xlu0 %3880
  %3882 = vrot.lane.b32.xlu0 %v2067, 114
  %v3883 = vpop.permute.xlu0 %3882
  %3884 = vrot.lane.b32.xlu0 %v2068, 114
  %v3885 = vpop.permute.xlu0 %3884
  %3886 = vrot.lane.b32.xlu0 %v2069, 114
  %v3887 = vpop.permute.xlu0 %3886
  %3888 = vrot.lane.b32.xlu0 %v2070, 114
  %v3889 = vpop.permute.xlu0 %3888
  %3890 = vrot.lane.b32.xlu0 %v2071, 114
  %v3891 = vpop.permute.xlu0 %3890
  %3892 = vrot.lane.b32.xlu0 %v2072, 114
  %v3893 = vpop.permute.xlu0 %3892
  %3894 = vrot.lane.b32.xlu0 %v2073, 114
  %v3895 = vpop.permute.xlu0 %3894
  %3896 = vrot.lane.b32.xlu0 %v2074, 114
  %v3897 = vpop.permute.xlu0 %3896
  %3898 = vrot.lane.b32.xlu0 %v2075, 114
  %v3899 = vpop.permute.xlu0 %3898
  %3900 = vrot.lane.b32.xlu0 %v2076, 114
  %v3901 = vpop.permute.xlu0 %3900
  %3902 = vrot.lane.b32.xlu0 %v2077, 114
  %v3903 = vpop.permute.xlu0 %3902
  %3904 = vrot.lane.b32.xlu0 %v2078, 114
  %v3905 = vpop.permute.xlu0 %3904
  %3906 = vrot.lane.b32.xlu0 %v2079, 114
  %v3907 = vpop.permute.xlu0 %3906
  %3908 = vrot.lane.b32.xlu0 %v2080, 114
  %v3909 = vpop.permute.xlu0 %3908
  %3910 = vrot.lane.b32.xlu0 %v2081, 114
  %v3911 = vpop.permute.xlu0 %3910
  %3912 = vrot.lane.b32.xlu0 %v2082, 114
  %v3913 = vpop.permute.xlu0 %3912
  %3914 = vrot.lane.b32.xlu0 %v2083, 114
  %v3915 = vpop.permute.xlu0 %3914
  %vm3916 = vcmask 932864
  %v3917 = vsel %vm3916, %v3853, %v3855
  %v3918 = vsel %vm3916, %v3855, %v3857
  %v3919 = vsel %vm3916, %v3857, %v3859
  %v3920 = vsel %vm3916, %v3859, %v3861
  %v3921 = vsel %vm3916, %v3861, %v3863
  %v3922 = vsel %vm3916, %v3863, %v3865
  %v3923 = vsel %vm3916, %v3865, %v3867
  %v3924 = vsel %vm3916, %v3867, %v3869
  %v3925 = vsel %vm3916, %v3869, %v3871
  %v3926 = vsel %vm3916, %v3871, %v3873
  %v3927 = vsel %vm3916, %v3873, %v3875
  %v3928 = vsel %vm3916, %v3875, %v3877
  %v3929 = vsel %vm3916, %v3877, %v3879
  %v3930 = vsel %vm3916, %v3879, %v3881
  %v3931 = vsel %vm3916, %v3881, %v3883
  %v3932 = vsel %vm3916, %v3885, %v3887
  %v3933 = vsel %vm3916, %v3887, %v3889
  %v3934 = vsel %vm3916, %v3889, %v3891
  %v3935 = vsel %vm3916, %v3891, %v3893
  %v3936 = vsel %vm3916, %v3893, %v3895
  %v3937 = vsel %vm3916, %v3895, %v3897
  %v3938 = vsel %vm3916, %v3897, %v3899
  %v3939 = vsel %vm3916, %v3899, %v3901
  %v3940 = vsel %vm3916, %v3901, %v3903
  %v3941 = vsel %vm3916, %v3903, %v3905
  %v3942 = vsel %vm3916, %v3905, %v3907
  %v3943 = vsel %vm3916, %v3907, %v3909
  %v3944 = vsel %vm3916, %v3909, %v3911
  %v3945 = vsel %vm3916, %v3911, %v3913
  %v3946 = vsel %vm3916, %v3913, %v3915
  %vm3977 = vcmask 932864
  %v3980 = vsel %vm3977, %v3883, %v3853
  %v3984 = vsel %vm3977, %v3915, %v3885
  %3986 = vrot.lane.b32.xlu0 %v2052, 113
  %v3987 = vpop.permute.xlu0 %3986
  %3988 = vrot.lane.b32.xlu0 %v2053, 113
  %v3989 = vpop.permute.xlu0 %3988
  %3990 = vrot.lane.b32.xlu0 %v2054, 113
  %v3991 = vpop.permute.xlu0 %3990
  %3992 = vrot.lane.b32.xlu0 %v2055, 113
  %v3993 = vpop.permute.xlu0 %3992
  %3994 = vrot.lane.b32.xlu0 %v2056, 113
  %v3995 = vpop.permute.xlu0 %3994
  %3996 = vrot.lane.b32.xlu0 %v2057, 113
  %v3997 = vpop.permute.xlu0 %3996
  %3998 = vrot.lane.b32.xlu0 %v2058, 113
  %v3999 = vpop.permute.xlu0 %3998
  %4000 = vrot.lane.b32.xlu0 %v2059, 113
  %v4001 = vpop.permute.xlu0 %4000
  %4002 = vrot.lane.b32.xlu0 %v2060, 113
  %v4003 = vpop.permute.xlu0 %4002
  %4004 = vrot.lane.b32.xlu0 %v2061, 113
  %v4005 = vpop.permute.xlu0 %4004
  %4006 = vrot.lane.b32.xlu0 %v2062, 113
  %v4007 = vpop.permute.xlu0 %4006
  %4008 = vrot.lane.b32.xlu0 %v2063, 113
  %v4009 = vpop.permute.xlu0 %4008
  %4010 = vrot.lane.b32.xlu0 %v2064, 113
  %v4011 = vpop.permute.xlu0 %4010
  %4012 = vrot.lane.b32.xlu0 %v2065, 113
  %v4013 = vpop.permute.xlu0 %4012
  %4014 = vrot.lane.b32.xlu0 %v2066, 113
  %v4015 = vpop.permute.xlu0 %4014
  %4016 = vrot.lane.b32.xlu0 %v2067, 113
  %v4017 = vpop.permute.xlu0 %4016
  %4018 = vrot.lane.b32.xlu0 %v2068, 113
  %v4019 = vpop.permute.xlu0 %4018
  %4020 = vrot.lane.b32.xlu0 %v2069, 113
  %v4021 = vpop.permute.xlu0 %4020
  %4022 = vrot.lane.b32.xlu0 %v2070, 113
  %v4023 = vpop.permute.xlu0 %4022
  %4024 = vrot.lane.b32.xlu0 %v2071, 113
  %v4025 = vpop.permute.xlu0 %4024
  %4026 = vrot.lane.b32.xlu0 %v2072, 113
  %v4027 = vpop.permute.xlu0 %4026
  %4028 = vrot.lane.b32.xlu0 %v2073, 113
  %v4029 = vpop.permute.xlu0 %4028
  %4030 = vrot.lane.b32.xlu0 %v2074, 113
  %v4031 = vpop.permute.xlu0 %4030
  %4032 = vrot.lane.b32.xlu0 %v2075, 113
  %v4033 = vpop.permute.xlu0 %4032
  %4034 = vrot.lane.b32.xlu0 %v2076, 113
  %v4035 = vpop.permute.xlu0 %4034
  %4036 = vrot.lane.b32.xlu0 %v2077, 113
  %v4037 = vpop.permute.xlu0 %4036
  %4038 = vrot.lane.b32.xlu0 %v2078, 113
  %v4039 = vpop.permute.xlu0 %4038
  %4040 = vrot.lane.b32.xlu0 %v2079, 113
  %v4041 = vpop.permute.xlu0 %4040
  %4042 = vrot.lane.b32.xlu0 %v2080, 113
  %v4043 = vpop.permute.xlu0 %4042
  %4044 = vrot.lane.b32.xlu0 %v2081, 113
  %v4045 = vpop.permute.xlu0 %4044
  %4046 = vrot.lane.b32.xlu0 %v2082, 113
  %v4047 = vpop.permute.xlu0 %4046
  %4048 = vrot.lane.b32.xlu0 %v2083, 113
  %v4049 = vpop.permute.xlu0 %4048
  %vm4050 = vcmask 924672
  %v4051 = vsel %vm4050, %v3987, %v3989
  %v4052 = vsel %vm4050, %v3989, %v3991
  %v4053 = vsel %vm4050, %v3991, %v3993
  %v4054 = vsel %vm4050, %v3993, %v3995
  %v4055 = vsel %vm4050, %v3995, %v3997
  %v4056 = vsel %vm4050, %v3997, %v3999
  %v4057 = vsel %vm4050, %v3999, %v4001
  %v4058 = vsel %vm4050, %v4001, %v4003
  %v4059 = vsel %vm4050, %v4003, %v4005
  %v4060 = vsel %vm4050, %v4005, %v4007
  %v4061 = vsel %vm4050, %v4007, %v4009
  %v4062 = vsel %vm4050, %v4009, %v4011
  %v4063 = vsel %vm4050, %v4011, %v4013
  %v4064 = vsel %vm4050, %v4013, %v4015
  %v4065 = vsel %vm4050, %v4015, %v4017
  %v4066 = vsel %vm4050, %v4019, %v4021
  %v4067 = vsel %vm4050, %v4021, %v4023
  %v4068 = vsel %vm4050, %v4023, %v4025
  %v4069 = vsel %vm4050, %v4025, %v4027
  %v4070 = vsel %vm4050, %v4027, %v4029
  %v4071 = vsel %vm4050, %v4029, %v4031
  %v4072 = vsel %vm4050, %v4031, %v4033
  %v4073 = vsel %vm4050, %v4033, %v4035
  %v4074 = vsel %vm4050, %v4035, %v4037
  %v4075 = vsel %vm4050, %v4037, %v4039
  %v4076 = vsel %vm4050, %v4039, %v4041
  %v4077 = vsel %vm4050, %v4041, %v4043
  %v4078 = vsel %vm4050, %v4043, %v4045
  %v4079 = vsel %vm4050, %v4045, %v4047
  %v4080 = vsel %vm4050, %v4047, %v4049
  %vm4111 = vcmask 924672
  %v4114 = vsel %vm4111, %v4017, %v3987
  %v4118 = vsel %vm4111, %v4049, %v4019
  %v4120 = vld [vmem:[%s4] sm:$0xff]
  %v4121 = vld [vmem:[%s4 + $0x8] sm:$0xff]
  %v4122 = vld [vmem:[%s4 + $0x10] sm:$0xff]
  %v4123 = vld [vmem:[%s4 + $0x18] sm:$0xff]
  %v4124 = vld [vmem:[%s4 + $0x20] sm:$0xff]
  %v4125 = vld [vmem:[%s4 + $0x28] sm:$0xff]
  %v4126 = vld [vmem:[%s4 + $0x30] sm:$0xff]
  %v4127 = vld [vmem:[%s4 + $0x38] sm:$0xff]
  %v4136 = vunpack.c.l.b16 %v4120
  %v4137 = vunpack.c.h.b16 %v4120
  %v4138 = vunpack.c.l.b16 %v4121
  %v4139 = vunpack.c.h.b16 %v4121
  %v4140 = vunpack.c.l.b16 %v4122
  %v4141 = vunpack.c.h.b16 %v4122
  %v4142 = vunpack.c.l.b16 %v4123
  %v4143 = vunpack.c.h.b16 %v4123
  %v4144 = vunpack.c.l.b16 %v4124
  %v4145 = vunpack.c.h.b16 %v4124
  %v4146 = vunpack.c.l.b16 %v4125
  %v4147 = vunpack.c.h.b16 %v4125
  %v4148 = vunpack.c.l.b16 %v4126
  %v4149 = vunpack.c.h.b16 %v4126
  %v4150 = vunpack.c.l.b16 %v4127
  %v4151 = vunpack.c.h.b16 %v4127
  %v4152 = vpack.c.b16 %v4140, %v4136
  %v4153 = vpack.c.b16 %v4141, %v4137
  %v4154 = vpack.c.b16 %v4142, %v4138
  %v4155 = vpack.c.b16 %v4143, %v4139
  %v4156 = vpack.c.b16 %v4148, %v4144
  %v4157 = vpack.c.b16 %v4149, %v4145
  %v4158 = vpack.c.b16 %v4150, %v4146
  %v4159 = vpack.c.b16 %v4151, %v4147
  %4168 = vmatprep.subr.bf16.mxu0 %v2460
  %4169 = vmatpush1.bf16.msra.mxu0 %v2459
  %4170 = vmatprep.subr.bf16.mxu0 %v2445
  %4171 = vmatpush1.bf16.msra.mxu0 %v2444
  %4172 = vmatprep.subr.bf16.mxu0 %v2328
  %4173 = vmatpush1.bf16.msra.mxu0 %v2327
  %4174 = vmatprep.subr.bf16.mxu0 %v2313
  %4175 = vmatpush1.bf16.msra.mxu0 %v2312
  %4176 = vmatprep.subr.bf16.mxu0 %v2196
  %4177 = vmatpush1.bf16.msra.mxu0 %v2195
  %4178 = vmatprep.subr.bf16.mxu0 %v2181
  %4179 = vmatpush1.bf16.msra.mxu0 %v2180
  %4180 = vmatprep.subr.bf16.mxu0 %v2069
  %4181 = vmatpush1.bf16.msra.mxu0 %v2068
  %4182 = vmatprep.subr.bf16.mxu0 %v2053
  %4183 = vmatpush1.bf16.msra.mxu0 %v2052
  %4184 = vmatprep.subr.bf16.mxu0 %v2995
  %4185 = vmatpush2.bf16.msra.mxu0 %v2994
  %4186 = vmatprep.subr.bf16.mxu0 %v2980
  %4187 = vmatpush2.bf16.msra.mxu0 %v2979
  %4188 = vmatprep.subr.bf16.mxu0 %v2861
  %4189 = vmatpush2.bf16.msra.mxu0 %v2860
  %4190 = vmatprep.subr.bf16.mxu0 %v2846
  %4191 = vmatpush2.bf16.msra.mxu0 %v2845
  %4192 = vmatprep.subr.bf16.mxu0 %v2727
  %4193 = vmatpush2.bf16.msra.mxu0 %v2726
  %4194 = vmatprep.subr.bf16.mxu0 %v2712
  %4195 = vmatpush2.bf16.msra.mxu0 %v2711
  %4196 = vmatprep.subr.bf16.mxu0 %v2593
  %4197 = vmatpush2.bf16.msra.mxu0 %v2592
  %4198 = vmatprep.subr.bf16.mxu0 %v2578
  %4199 = vmatpush2.bf16.msra.mxu0 %v2577
  %4200 = vmatprep.mubr.bf16.mxu0 %v4153
  %4201 = vmatmul.mubr.bf16.gmra.mxu0 %v4152
  %v4202 = vpop.f32.mrf.mxu0
  %v4203 = vadd.f32 0.0, %v4202
  %v4204 = vpop.f32.mrf.mxu0
  %v4205 = vadd.f32 0.0, %v4204
  %v4206 = vpop.f32.mrf.mxu0
  %v4207 = vadd.f32 0.0, %v4206
  %v4208 = vpop.f32.mrf.mxu0
  %v4209 = vadd.f32 0.0, %v4208
  %4210 = vmatprep.mubr.bf16.mxu0 %v4157
  %4211 = vmatmul.mubr.bf16.gmra.mxu0 %v4156
  %v4212 = vpop.f32.mrf.mxu0
  %v4213 = vadd.f32 0.0, %v4212
  %v4214 = vpop.f32.mrf.mxu0
  %v4215 = vadd.f32 0.0, %v4214
  %v4216 = vpop.f32.mrf.mxu0
  %v4217 = vadd.f32 0.0, %v4216
  %v4218 = vpop.f32.mrf.mxu0
  %v4219 = vadd.f32 0.0, %v4218
  %4220 = vdwg.mxu0
  %4221 = vmatprep.subr.bf16.mxu0 %v3531
  %4222 = vmatpush1.bf16.msra.mxu0 %v3530
  %4223 = vmatprep.subr.bf16.mxu0 %v3516
  %4224 = vmatpush1.bf16.msra.mxu0 %v3515
  %4225 = vmatprep.subr.bf16.mxu0 %v3397
  %4226 = vmatpush1.bf16.msra.mxu0 %v3396
  %4227 = vmatprep.subr.bf16.mxu0 %v3382
  %4228 = vmatpush1.bf16.msra.mxu0 %v3381
  %4229 = vmatprep.subr.bf16.mxu0 %v3263
  %4230 = vmatpush1.bf16.msra.mxu0 %v3262
  %4231 = vmatprep.subr.bf16.mxu0 %v3248
  %4232 = vmatpush1.bf16.msra.mxu0 %v3247
  %4233 = vmatprep.subr.bf16.mxu0 %v3129
  %4234 = vmatpush1.bf16.msra.mxu0 %v3128
  %4235 = vmatprep.subr.bf16.mxu0 %v3114
  %4236 = vmatpush1.bf16.msra.mxu0 %v3113
  %4237 = vmatprep.subr.bf16.mxu0 %v4067
  %4238 = vmatpush2.bf16.msra.mxu0 %v4066
  %4239 = vmatprep.subr.bf16.mxu0 %v4052
  %4240 = vmatpush2.bf16.msra.mxu0 %v4051
  %4241 = vmatprep.subr.bf16.mxu0 %v3933
  %4242 = vmatpush2.bf16.msra.mxu0 %v3932
  %4243 = vmatprep.subr.bf16.mxu0 %v3918
  %4244 = vmatpush2.bf16.msra.mxu0 %v3917
  %4245 = vmatprep.subr.bf16.mxu0 %v3799
  %4246 = vmatpush2.bf16.msra.mxu0 %v3798
  %4247 = vmatprep.subr.bf16.mxu0 %v3784
  %4248 = vmatpush2.bf16.msra.mxu0 %v3783
  %4249 = vmatprep.subr.bf16.mxu0 %v3665
  %4250 = vmatpush2.bf16.msra.mxu0 %v3664
  %4251 = vmatprep.subr.bf16.mxu0 %v3650
  %4252 = vmatpush2.bf16.msra.mxu0 %v3649
  %4253 = vmatprep.mubr.bf16.mxu0 %v4155
  %4254 = vmatmul.mubr.bf16.gmra.mxu0 %v4154
  %v4255 = vpop.f32.mrf.mxu0
  %v4256 = vadd.f32 %v4203, %v4255
  %v4257 = vpop.f32.mrf.mxu0
  %v4258 = vadd.f32 %v4205, %v4257
  %v4259 = vpop.f32.mrf.mxu0
  %v4260 = vadd.f32 %v4207, %v4259
  %v4261 = vpop.f32.mrf.mxu0
  %v4262 = vadd.f32 %v4209, %v4261
  %4263 = vmatprep.mubr.bf16.mxu0 %v4159
  %4264 = vmatmul.mubr.bf16.gmra.mxu0 %v4158
  %v4265 = vpop.f32.mrf.mxu0
  %v4266 = vadd.f32 %v4213, %v4265
  %v4267 = vpop.f32.mrf.mxu0
  %v4268 = vadd.f32 %v4215, %v4267
  %v4269 = vpop.f32.mrf.mxu0
  %v4270 = vadd.f32 %v4217, %v4269
  %v4271 = vpop.f32.mrf.mxu0
  %v4272 = vadd.f32 %v4219, %v4271
  %4273 = vdwg.mxu0
  %4274 = vmatprep.subr.bf16.mxu0 %v2462
  %4275 = vmatpush1.bf16.msra.mxu0 %v2461
  %4276 = vmatprep.subr.bf16.mxu0 %v2447
  %4277 = vmatpush1.bf16.msra.mxu0 %v2446
  %4278 = vmatprep.subr.bf16.mxu0 %v2330
  %4279 = vmatpush1.bf16.msra.mxu0 %v2329
  %4280 = vmatprep.subr.bf16.mxu0 %v2315
  %4281 = vmatpush1.bf16.msra.mxu0 %v2314
  %4282 = vmatprep.subr.bf16.mxu0 %v2198
  %4283 = vmatpush1.bf16.msra.mxu0 %v2197
  %4284 = vmatprep.subr.bf16.mxu0 %v2183
  %4285 = vmatpush1.bf16.msra.mxu0 %v2182
  %4286 = vmatprep.subr.bf16.mxu0 %v2071
  %4287 = vmatpush1.bf16.msra.mxu0 %v2070
  %4288 = vmatprep.subr.bf16.mxu0 %v2055
  %4289 = vmatpush1.bf16.msra.mxu0 %v2054
  %4290 = vmatprep.subr.bf16.mxu0 %v2997
  %4291 = vmatpush2.bf16.msra.mxu0 %v2996
  %4292 = vmatprep.subr.bf16.mxu0 %v2982
  %4293 = vmatpush2.bf16.msra.mxu0 %v2981
  %4294 = vmatprep.subr.bf16.mxu0 %v2863
  %4295 = vmatpush2.bf16.msra.mxu0 %v2862
  %4296 = vmatprep.subr.bf16.mxu0 %v2848
  %4297 = vmatpush2.bf16.msra.mxu0 %v2847
  %4298 = vmatprep.subr.bf16.mxu0 %v2729
  %4299 = vmatpush2.bf16.msra.mxu0 %v2728
  %4300 = vmatprep.subr.bf16.mxu0 %v2714
  %4301 = vmatpush2.bf16.msra.mxu0 %v2713
  %4302 = vmatprep.subr.bf16.mxu0 %v2595
  %4303 = vmatpush2.bf16.msra.mxu0 %v2594
  %4304 = vmatprep.subr.bf16.mxu0 %v2580
  %4305 = vmatpush2.bf16.msra.mxu0 %v2579
  %4306 = vmatprep.mubr.bf16.mxu0 %v4153
  %4307 = vmatmul.mubr.bf16.gmra.mxu0 %v4152
  %v4308 = vpop.f32.mrf.mxu0
  %v4309 = vadd.f32 0.0, %v4308
  %v4310 = vpop.f32.mrf.mxu0
  %v4311 = vadd.f32 0.0, %v4310
  %v4312 = vpop.f32.mrf.mxu0
  %v4313 = vadd.f32 0.0, %v4312
  %v4314 = vpop.f32.mrf.mxu0
  %v4315 = vadd.f32 0.0, %v4314
  %4316 = vmatprep.mubr.bf16.mxu0 %v4157
  %4317 = vmatmul.mubr.bf16.gmra.mxu0 %v4156
  %v4318 = vpop.f32.mrf.mxu0
  %v4319 = vadd.f32 0.0, %v4318
  %v4320 = vpop.f32.mrf.mxu0
  %v4321 = vadd.f32 0.0, %v4320
  %v4322 = vpop.f32.mrf.mxu0
  %v4323 = vadd.f32 0.0, %v4322
  %v4324 = vpop.f32.mrf.mxu0
  %v4325 = vadd.f32 0.0, %v4324
  %4326 = vdwg.mxu0
  %4327 = vmatprep.subr.bf16.mxu0 %v3533
  %4328 = vmatpush1.bf16.msra.mxu0 %v3532
  %4329 = vmatprep.subr.bf16.mxu0 %v3518
  %4330 = vmatpush1.bf16.msra.mxu0 %v3517
  %4331 = vmatprep.subr.bf16.mxu0 %v3399
  %4332 = vmatpush1.bf16.msra.mxu0 %v3398
  %4333 = vmatprep.subr.bf16.mxu0 %v3384
  %4334 = vmatpush1.bf16.msra.mxu0 %v3383
  %4335 = vmatprep.subr.bf16.mxu0 %v3265
  %4336 = vmatpush1.bf16.msra.mxu0 %v3264
  %4337 = vmatprep.subr.bf16.mxu0 %v3250
  %4338 = vmatpush1.bf16.msra.mxu0 %v3249
  %4339 = vmatprep.subr.bf16.mxu0 %v3131
  %4340 = vmatpush1.bf16.msra.mxu0 %v3130
  %4341 = vmatprep.subr.bf16.mxu0 %v3116
  %4342 = vmatpush1.bf16.msra.mxu0 %v3115
  %4343 = vmatprep.subr.bf16.mxu0 %v4069
  %4344 = vmatpush2.bf16.msra.mxu0 %v4068
  %4345 = vmatprep.subr.bf16.mxu0 %v4054
  %4346 = vmatpush2.bf16.msra.mxu0 %v4053
  %4347 = vmatprep.subr.bf16.mxu0 %v3935
  %4348 = vmatpush2.bf16.msra.mxu0 %v3934
  %4349 = vmatprep.subr.bf16.mxu0 %v3920
  %4350 = vmatpush2.bf16.msra.mxu0 %v3919
  %4351 = vmatprep.subr.bf16.mxu0 %v3801
  %4352 = vmatpush2.bf16.msra.mxu0 %v3800
  %4353 = vmatprep.subr.bf16.mxu0 %v3786
  %4354 = vmatpush2.bf16.msra.mxu0 %v3785
  %4355 = vmatprep.subr.bf16.mxu0 %v3667
  %4356 = vmatpush2.bf16.msra.mxu0 %v3666
  %4357 = vmatprep.subr.bf16.mxu0 %v3652
  %4358 = vmatpush2.bf16.msra.mxu0 %v3651
  %4359 = vmatprep.mubr.bf16.mxu0 %v4155
  %4360 = vmatmul.mubr.bf16.gmra.mxu0 %v4154
  %v4361 = vpop.f32.mrf.mxu0
  %v4362 = vadd.f32 %v4309, %v4361
  %v4363 = vpop.f32.mrf.mxu0
  %v4364 = vadd.f32 %v4311, %v4363
  %v4365 = vpop.f32.mrf.mxu0
  %v4366 = vadd.f32 %v4313, %v4365
  %v4367 = vpop.f32.mrf.mxu0
  %v4368 = vadd.f32 %v4315, %v4367
  %4369 = vmatprep.mubr.bf16.mxu0 %v4159
  %4370 = vmatmul.mubr.bf16.gmra.mxu0 %v4158
  %v4371 = vpop.f32.mrf.mxu0
  %v4372 = vadd.f32 %v4319, %v4371
  %v4373 = vpop.f32.mrf.mxu0
  %v4374 = vadd.f32 %v4321, %v4373
  %v4375 = vpop.f32.mrf.mxu0
  %v4376 = vadd.f32 %v4323, %v4375
  %v4377 = vpop.f32.mrf.mxu0
  %v4378 = vadd.f32 %v4325, %v4377
  %4379 = vdwg.mxu0
  %4380 = vmatprep.subr.bf16.mxu0 %v2464
  %4381 = vmatpush1.bf16.msra.mxu0 %v2463
  %4382 = vmatprep.subr.bf16.mxu0 %v2449
  %4383 = vmatpush1.bf16.msra.mxu0 %v2448
  %4384 = vmatprep.subr.bf16.mxu0 %v2332
  %4385 = vmatpush1.bf16.msra.mxu0 %v2331
  %4386 = vmatprep.subr.bf16.mxu0 %v2317
  %4387 = vmatpush1.bf16.msra.mxu0 %v2316
  %4388 = vmatprep.subr.bf16.mxu0 %v2200
  %4389 = vmatpush1.bf16.msra.mxu0 %v2199
  %4390 = vmatprep.subr.bf16.mxu0 %v2185
  %4391 = vmatpush1.bf16.msra.mxu0 %v2184
  %4392 = vmatprep.subr.bf16.mxu0 %v2073
  %4393 = vmatpush1.bf16.msra.mxu0 %v2072
  %4394 = vmatprep.subr.bf16.mxu0 %v2057
  %4395 = vmatpush1.bf16.msra.mxu0 %v2056
  %4396 = vmatprep.subr.bf16.mxu0 %v2999
  %4397 = vmatpush2.bf16.msra.mxu0 %v2998
  %4398 = vmatprep.subr.bf16.mxu0 %v2984
  %4399 = vmatpush2.bf16.msra.mxu0 %v2983
  %4400 = vmatprep.subr.bf16.mxu0 %v2865
  %4401 = vmatpush2.bf16.msra.mxu0 %v2864
  %4402 = vmatprep.subr.bf16.mxu0 %v2850
  %4403 = vmatpush2.bf16.msra.mxu0 %v2849
  %4404 = vmatprep.subr.bf16.mxu0 %v2731
  %4405 = vmatpush2.bf16.msra.mxu0 %v2730
  %4406 = vmatprep.subr.bf16.mxu0 %v2716
  %4407 = vmatpush2.bf16.msra.mxu0 %v2715
  %4408 = vmatprep.subr.bf16.mxu0 %v2597
  %4409 = vmatpush2.bf16.msra.mxu0 %v2596
  %4410 = vmatprep.subr.bf16.mxu0 %v2582
  %4411 = vmatpush2.bf16.msra.mxu0 %v2581
  %4412 = vmatprep.mubr.bf16.mxu0 %v4153
  %4413 = vmatmul.mubr.bf16.gmra.mxu0 %v4152
  %v4414 = vpop.f32.mrf.mxu0
  %v4415 = vadd.f32 0.0, %v4414
  %v4416 = vpop.f32.mrf.mxu0
  %v4417 = vadd.f32 0.0, %v4416
  %v4418 = vpop.f32.mrf.mxu0
  %v4419 = vadd.f32 0.0, %v4418
  %v4420 = vpop.f32.mrf.mxu0
  %v4421 = vadd.f32 0.0, %v4420
  %4422 = vmatprep.mubr.bf16.mxu0 %v4157
  %4423 = vmatmul.mubr.bf16.gmra.mxu0 %v4156
  %v4424 = vpop.f32.mrf.mxu0
  %v4425 = vadd.f32 0.0, %v4424
  %v4426 = vpop.f32.mrf.mxu0
  %v4427 = vadd.f32 0.0, %v4426
  %v4428 = vpop.f32.mrf.mxu0
  %v4429 = vadd.f32 0.0, %v4428
  %v4430 = vpop.f32.mrf.mxu0
  %v4431 = vadd.f32 0.0, %v4430
  %4432 = vdwg.mxu0
  %4433 = vmatprep.subr.bf16.mxu0 %v3535
  %4434 = vmatpush1.bf16.msra.mxu0 %v3534
  %4435 = vmatprep.subr.bf16.mxu0 %v3520
  %4436 = vmatpush1.bf16.msra.mxu0 %v3519
  %4437 = vmatprep.subr.bf16.mxu0 %v3401
  %4438 = vmatpush1.bf16.msra.mxu0 %v3400
  %4439 = vmatprep.subr.bf16.mxu0 %v3386
  %4440 = vmatpush1.bf16.msra.mxu0 %v3385
  %4441 = vmatprep.subr.bf16.mxu0 %v3267
  %4442 = vmatpush1.bf16.msra.mxu0 %v3266
  %4443 = vmatprep.subr.bf16.mxu0 %v3252
  %4444 = vmatpush1.bf16.msra.mxu0 %v3251
  %4445 = vmatprep.subr.bf16.mxu0 %v3133
  %4446 = vmatpush1.bf16.msra.mxu0 %v3132
  %4447 = vmatprep.subr.bf16.mxu0 %v3118
  %4448 = vmatpush1.bf16.msra.mxu0 %v3117
  %4449 = vmatprep.subr.bf16.mxu0 %v4071
  %4450 = vmatpush2.bf16.msra.mxu0 %v4070
  %4451 = vmatprep.subr.bf16.mxu0 %v4056
  %4452 = vmatpush2.bf16.msra.mxu0 %v4055
  %4453 = vmatprep.subr.bf16.mxu0 %v3937
  %4454 = vmatpush2.bf16.msra.mxu0 %v3936
  %4455 = vmatprep.subr.bf16.mxu0 %v3922
  %4456 = vmatpush2.bf16.msra.mxu0 %v3921
  %4457 = vmatprep.subr.bf16.mxu0 %v3803
  %4458 = vmatpush2.bf16.msra.mxu0 %v3802
  %4459 = vmatprep.subr.bf16.mxu0 %v3788
  %4460 = vmatpush2.bf16.msra.mxu0 %v3787
  %4461 = vmatprep.subr.bf16.mxu0 %v3669
  %4462 = vmatpush2.bf16.msra.mxu0 %v3668
  %4463 = vmatprep.subr.bf16.mxu0 %v3654
  %4464 = vmatpush2.bf16.msra.mxu0 %v3653
  %4465 = vmatprep.mubr.bf16.mxu0 %v4155
  %4466 = vmatmul.mubr.bf16.gmra.mxu0 %v4154
  %v4467 = vpop.f32.mrf.mxu0
  %v4468 = vadd.f32 %v4415, %v4467
  %v4469 = vpop.f32.mrf.mxu0
  %v4470 = vadd.f32 %v4417, %v4469
  %v4471 = vpop.f32.mrf.mxu0
  %v4472 = vadd.f32 %v4419, %v4471
  %v4473 = vpop.f32.mrf.mxu0
  %v4474 = vadd.f32 %v4421, %v4473
  %4475 = vmatprep.mubr.bf16.mxu0 %v4159
  %4476 = vmatmul.mubr.bf16.gmra.mxu0 %v4158
  %v4477 = vpop.f32.mrf.mxu0
  %v4478 = vadd.f32 %v4425, %v4477
  %v4479 = vpop.f32.mrf.mxu0
  %v4480 = vadd.f32 %v4427, %v4479
  %v4481 = vpop.f32.mrf.mxu0
  %v4482 = vadd.f32 %v4429, %v4481
  %v4483 = vpop.f32.mrf.mxu0
  %v4484 = vadd.f32 %v4431, %v4483
  %4485 = vdwg.mxu0
  %4486 = vmatprep.subr.bf16.mxu0 %v2466
  %4487 = vmatpush1.bf16.msra.mxu0 %v2465
  %4488 = vmatprep.subr.bf16.mxu0 %v2451
  %4489 = vmatpush1.bf16.msra.mxu0 %v2450
  %4490 = vmatprep.subr.bf16.mxu0 %v2334
  %4491 = vmatpush1.bf16.msra.mxu0 %v2333
  %4492 = vmatprep.subr.bf16.mxu0 %v2319
  %4493 = vmatpush1.bf16.msra.mxu0 %v2318
  %4494 = vmatprep.subr.bf16.mxu0 %v2202
  %4495 = vmatpush1.bf16.msra.mxu0 %v2201
  %4496 = vmatprep.subr.bf16.mxu0 %v2187
  %4497 = vmatpush1.bf16.msra.mxu0 %v2186
  %4498 = vmatprep.subr.bf16.mxu0 %v2075
  %4499 = vmatpush1.bf16.msra.mxu0 %v2074
  %4500 = vmatprep.subr.bf16.mxu0 %v2059
  %4501 = vmatpush1.bf16.msra.mxu0 %v2058
  %4502 = vmatprep.subr.bf16.mxu0 %v3001
  %4503 = vmatpush2.bf16.msra.mxu0 %v3000
  %4504 = vmatprep.subr.bf16.mxu0 %v2986
  %4505 = vmatpush2.bf16.msra.mxu0 %v2985
  %4506 = vmatprep.subr.bf16.mxu0 %v2867
  %4507 = vmatpush2.bf16.msra.mxu0 %v2866
  %4508 = vmatprep.subr.bf16.mxu0 %v2852
  %4509 = vmatpush2.bf16.msra.mxu0 %v2851
  %4510 = vmatprep.subr.bf16.mxu0 %v2733
  %4511 = vmatpush2.bf16.msra.mxu0 %v2732
  %4512 = vmatprep.subr.bf16.mxu0 %v2718
  %4513 = vmatpush2.bf16.msra.mxu0 %v2717
  %4514 = vmatprep.subr.bf16.mxu0 %v2599
  %4515 = vmatpush2.bf16.msra.mxu0 %v2598
  %4516 = vmatprep.subr.bf16.mxu0 %v2584
  %4517 = vmatpush2.bf16.msra.mxu0 %v2583
  %4518 = vmatprep.mubr.bf16.mxu0 %v4153
  %4519 = vmatmul.mubr.bf16.gmra.mxu0 %v4152
  %v4520 = vpop.f32.mrf.mxu0
  %v4521 = vadd.f32 0.0, %v4520
  %v4522 = vpop.f32.mrf.mxu0
  %v4523 = vadd.f32 0.0, %v4522
  %v4524 = vpop.f32.mrf.mxu0
  %v4525 = vadd.f32 0.0, %v4524
  %v4526 = vpop.f32.mrf.mxu0
  %v4527 = vadd.f32 0.0, %v4526
  %4528 = vmatprep.mubr.bf16.mxu0 %v4157
  %4529 = vmatmul.mubr.bf16.gmra.mxu0 %v4156
  %v4530 = vpop.f32.mrf.mxu0
  %v4531 = vadd.f32 0.0, %v4530
  %v4532 = vpop.f32.mrf.mxu0
  %v4533 = vadd.f32 0.0, %v4532
  %v4534 = vpop.f32.mrf.mxu0
  %v4535 = vadd.f32 0.0, %v4534
  %v4536 = vpop.f32.mrf.mxu0
  %v4537 = vadd.f32 0.0, %v4536
  %4538 = vdwg.mxu0
  %4539 = vmatprep.subr.bf16.mxu0 %v3537
  %4540 = vmatpush1.bf16.msra.mxu0 %v3536
  %4541 = vmatprep.subr.bf16.mxu0 %v3522
  %4542 = vmatpush1.bf16.msra.mxu0 %v3521
  %4543 = vmatprep.subr.bf16.mxu0 %v3403
  %4544 = vmatpush1.bf16.msra.mxu0 %v3402
  %4545 = vmatprep.subr.bf16.mxu0 %v3388
  %4546 = vmatpush1.bf16.msra.mxu0 %v3387
  %4547 = vmatprep.subr.bf16.mxu0 %v3269
  %4548 = vmatpush1.bf16.msra.mxu0 %v3268
  %4549 = vmatprep.subr.bf16.mxu0 %v3254
  %4550 = vmatpush1.bf16.msra.mxu0 %v3253
  %4551 = vmatprep.subr.bf16.mxu0 %v3135
  %4552 = vmatpush1.bf16.msra.mxu0 %v3134
  %4553 = vmatprep.subr.bf16.mxu0 %v3120
  %4554 = vmatpush1.bf16.msra.mxu0 %v3119
  %4555 = vmatprep.subr.bf16.mxu0 %v4073
  %4556 = vmatpush2.bf16.msra.mxu0 %v4072
  %4557 = vmatprep.subr.bf16.mxu0 %v4058
  %4558 = vmatpush2.bf16.msra.mxu0 %v4057
  %4559 = vmatprep.subr.bf16.mxu0 %v3939
  %4560 = vmatpush2.bf16.msra.mxu0 %v3938
  %4561 = vmatprep.subr.bf16.mxu0 %v3924
  %4562 = vmatpush2.bf16.msra.mxu0 %v3923
  %4563 = vmatprep.subr.bf16.mxu0 %v3805
  %4564 = vmatpush2.bf16.msra.mxu0 %v3804
  %4565 = vmatprep.subr.bf16.mxu0 %v3790
  %4566 = vmatpush2.bf16.msra.mxu0 %v3789
  %4567 = vmatprep.subr.bf16.mxu0 %v3671
  %4568 = vmatpush2.bf16.msra.mxu0 %v3670
  %4569 = vmatprep.subr.bf16.mxu0 %v3656
  %4570 = vmatpush2.bf16.msra.mxu0 %v3655
  %4571 = vmatprep.mubr.bf16.mxu0 %v4155
  %4572 = vmatmul.mubr.bf16.gmra.mxu0 %v4154
  %v4573 = vpop.f32.mrf.mxu0
  %v4574 = vadd.f32 %v4521, %v4573
  %v4575 = vpop.f32.mrf.mxu0
  %v4576 = vadd.f32 %v4523, %v4575
  %v4577 = vpop.f32.mrf.mxu0
  %v4578 = vadd.f32 %v4525, %v4577
  %v4579 = vpop.f32.mrf.mxu0
  %v4580 = vadd.f32 %v4527, %v4579
  %4581 = vmatprep.mubr.bf16.mxu0 %v4159
  %4582 = vmatmul.mubr.bf16.gmra.mxu0 %v4158
  %v4583 = vpop.f32.mrf.mxu0
  %v4584 = vadd.f32 %v4531, %v4583
  %v4585 = vpop.f32.mrf.mxu0
  %v4586 = vadd.f32 %v4533, %v4585
  %v4587 = vpop.f32.mrf.mxu0
  %v4588 = vadd.f32 %v4535, %v4587
  %v4589 = vpop.f32.mrf.mxu0
  %v4590 = vadd.f32 %v4537, %v4589
  %4591 = vdwg.mxu0
  %4592 = vmatprep.subr.bf16.mxu0 %v2468
  %4593 = vmatpush1.bf16.msra.mxu0 %v2467
  %4594 = vmatprep.subr.bf16.mxu0 %v2453
  %4595 = vmatpush1.bf16.msra.mxu0 %v2452
  %4596 = vmatprep.subr.bf16.mxu0 %v2336
  %4597 = vmatpush1.bf16.msra.mxu0 %v2335
  %4598 = vmatprep.subr.bf16.mxu0 %v2321
  %4599 = vmatpush1.bf16.msra.mxu0 %v2320
  %4600 = vmatprep.subr.bf16.mxu0 %v2204
  %4601 = vmatpush1.bf16.msra.mxu0 %v2203
  %4602 = vmatprep.subr.bf16.mxu0 %v2189
  %4603 = vmatpush1.bf16.msra.mxu0 %v2188
  %4604 = vmatprep.subr.bf16.mxu0 %v2077
  %4605 = vmatpush1.bf16.msra.mxu0 %v2076
  %4606 = vmatprep.subr.bf16.mxu0 %v2061
  %4607 = vmatpush1.bf16.msra.mxu0 %v2060
  %4608 = vmatprep.subr.bf16.mxu0 %v3003
  %4609 = vmatpush2.bf16.msra.mxu0 %v3002
  %4610 = vmatprep.subr.bf16.mxu0 %v2988
  %4611 = vmatpush2.bf16.msra.mxu0 %v2987
  %4612 = vmatprep.subr.bf16.mxu0 %v2869
  %4613 = vmatpush2.bf16.msra.mxu0 %v2868
  %4614 = vmatprep.subr.bf16.mxu0 %v2854
  %4615 = vmatpush2.bf16.msra.mxu0 %v2853
  %4616 = vmatprep.subr.bf16.mxu0 %v2735
  %4617 = vmatpush2.bf16.msra.mxu0 %v2734
  %4618 = vmatprep.subr.bf16.mxu0 %v2720
  %4619 = vmatpush2.bf16.msra.mxu0 %v2719
  %4620 = vmatprep.subr.bf16.mxu0 %v2601
  %4621 = vmatpush2.bf16.msra.mxu0 %v2600
  %4622 = vmatprep.subr.bf16.mxu0 %v2586
  %4623 = vmatpush2.bf16.msra.mxu0 %v2585
  %4624 = vmatprep.mubr.bf16.mxu0 %v4153
  %4625 = vmatmul.mubr.bf16.gmra.mxu0 %v4152
  %v4626 = vpop.f32.mrf.mxu0
  %v4627 = vadd.f32 0.0, %v4626
  %v4628 = vpop.f32.mrf.mxu0
  %v4629 = vadd.f32 0.0, %v4628
  %v4630 = vpop.f32.mrf.mxu0
  %v4631 = vadd.f32 0.0, %v4630
  %v4632 = vpop.f32.mrf.mxu0
  %v4633 = vadd.f32 0.0, %v4632
  %4634 = vmatprep.mubr.bf16.mxu0 %v4157
  %4635 = vmatmul.mubr.bf16.gmra.mxu0 %v4156
  %v4636 = vpop.f32.mrf.mxu0
  %v4637 = vadd.f32 0.0, %v4636
  %v4638 = vpop.f32.mrf.mxu0
  %v4639 = vadd.f32 0.0, %v4638
  %v4640 = vpop.f32.mrf.mxu0
  %v4641 = vadd.f32 0.0, %v4640
  %v4642 = vpop.f32.mrf.mxu0
  %v4643 = vadd.f32 0.0, %v4642
  %4644 = vdwg.mxu0
  %4645 = vmatprep.subr.bf16.mxu0 %v3539
  %4646 = vmatpush1.bf16.msra.mxu0 %v3538
  %4647 = vmatprep.subr.bf16.mxu0 %v3524
  %4648 = vmatpush1.bf16.msra.mxu0 %v3523
  %4649 = vmatprep.subr.bf16.mxu0 %v3405
  %4650 = vmatpush1.bf16.msra.mxu0 %v3404
  %4651 = vmatprep.subr.bf16.mxu0 %v3390
  %4652 = vmatpush1.bf16.msra.mxu0 %v3389
  %4653 = vmatprep.subr.bf16.mxu0 %v3271
  %4654 = vmatpush1.bf16.msra.mxu0 %v3270
  %4655 = vmatprep.subr.bf16.mxu0 %v3256
  %4656 = vmatpush1.bf16.msra.mxu0 %v3255
  %4657 = vmatprep.subr.bf16.mxu0 %v3137
  %4658 = vmatpush1.bf16.msra.mxu0 %v3136
  %4659 = vmatprep.subr.bf16.mxu0 %v3122
  %4660 = vmatpush1.bf16.msra.mxu0 %v3121
  %4661 = vmatprep.subr.bf16.mxu0 %v4075
  %4662 = vmatpush2.bf16.msra.mxu0 %v4074
  %4663 = vmatprep.subr.bf16.mxu0 %v4060
  %4664 = vmatpush2.bf16.msra.mxu0 %v4059
  %4665 = vmatprep.subr.bf16.mxu0 %v3941
  %4666 = vmatpush2.bf16.msra.mxu0 %v3940
  %4667 = vmatprep.subr.bf16.mxu0 %v3926
  %4668 = vmatpush2.bf16.msra.mxu0 %v3925
  %4669 = vmatprep.subr.bf16.mxu0 %v3807
  %4670 = vmatpush2.bf16.msra.mxu0 %v3806
  %4671 = vmatprep.subr.bf16.mxu0 %v3792
  %4672 = vmatpush2.bf16.msra.mxu0 %v3791
  %4673 = vmatprep.subr.bf16.mxu0 %v3673
  %4674 = vmatpush2.bf16.msra.mxu0 %v3672
  %4675 = vmatprep.subr.bf16.mxu0 %v3658
  %4676 = vmatpush2.bf16.msra.mxu0 %v3657
  %4677 = vmatprep.mubr.bf16.mxu0 %v4155
  %4678 = vmatmul.mubr.bf16.gmra.mxu0 %v4154
  %v4679 = vpop.f32.mrf.mxu0
  %v4680 = vadd.f32 %v4627, %v4679
  %v4681 = vpop.f32.mrf.mxu0
  %v4682 = vadd.f32 %v4629, %v4681
  %v4683 = vpop.f32.mrf.mxu0
  %v4684 = vadd.f32 %v4631, %v4683
  %v4685 = vpop.f32.mrf.mxu0
  %v4686 = vadd.f32 %v4633, %v4685
  %4687 = vmatprep.mubr.bf16.mxu0 %v4159
  %4688 = vmatmul.mubr.bf16.gmra.mxu0 %v4158
  %v4689 = vpop.f32.mrf.mxu0
  %v4690 = vadd.f32 %v4637, %v4689
  %v4691 = vpop.f32.mrf.mxu0
  %v4692 = vadd.f32 %v4639, %v4691
  %v4693 = vpop.f32.mrf.mxu0
  %v4694 = vadd.f32 %v4641, %v4693
  %v4695 = vpop.f32.mrf.mxu0
  %v4696 = vadd.f32 %v4643, %v4695
  %4697 = vdwg.mxu0
  %4698 = vmatprep.subr.bf16.mxu0 %v2470
  %4699 = vmatpush1.bf16.msra.mxu0 %v2469
  %4700 = vmatprep.subr.bf16.mxu0 %v2455
  %4701 = vmatpush1.bf16.msra.mxu0 %v2454
  %4702 = vmatprep.subr.bf16.mxu0 %v2338
  %4703 = vmatpush1.bf16.msra.mxu0 %v2337
  %4704 = vmatprep.subr.bf16.mxu0 %v2323
  %4705 = vmatpush1.bf16.msra.mxu0 %v2322
  %4706 = vmatprep.subr.bf16.mxu0 %v2206
  %4707 = vmatpush1.bf16.msra.mxu0 %v2205
  %4708 = vmatprep.subr.bf16.mxu0 %v2191
  %4709 = vmatpush1.bf16.msra.mxu0 %v2190
  %4710 = vmatprep.subr.bf16.mxu0 %v2079
  %4711 = vmatpush1.bf16.msra.mxu0 %v2078
  %4712 = vmatprep.subr.bf16.mxu0 %v2063
  %4713 = vmatpush1.bf16.msra.mxu0 %v2062
  %4714 = vmatprep.subr.bf16.mxu0 %v3005
  %4715 = vmatpush2.bf16.msra.mxu0 %v3004
  %4716 = vmatprep.subr.bf16.mxu0 %v2990
  %4717 = vmatpush2.bf16.msra.mxu0 %v2989
  %4718 = vmatprep.subr.bf16.mxu0 %v2871
  %4719 = vmatpush2.bf16.msra.mxu0 %v2870
  %4720 = vmatprep.subr.bf16.mxu0 %v2856
  %4721 = vmatpush2.bf16.msra.mxu0 %v2855
  %4722 = vmatprep.subr.bf16.mxu0 %v2737
  %4723 = vmatpush2.bf16.msra.mxu0 %v2736
  %4724 = vmatprep.subr.bf16.mxu0 %v2722
  %4725 = vmatpush2.bf16.msra.mxu0 %v2721
  %4726 = vmatprep.subr.bf16.mxu0 %v2603
  %4727 = vmatpush2.bf16.msra.mxu0 %v2602
  %4728 = vmatprep.subr.bf16.mxu0 %v2588
  %4729 = vmatpush2.bf16.msra.mxu0 %v2587
  %4730 = vmatprep.mubr.bf16.mxu0 %v4153
  %4731 = vmatmul.mubr.bf16.gmra.mxu0 %v4152
  %v4732 = vpop.f32.mrf.mxu0
  %v4733 = vadd.f32 0.0, %v4732
  %v4734 = vpop.f32.mrf.mxu0
  %v4735 = vadd.f32 0.0, %v4734
  %v4736 = vpop.f32.mrf.mxu0
  %v4737 = vadd.f32 0.0, %v4736
  %v4738 = vpop.f32.mrf.mxu0
  %v4739 = vadd.f32 0.0, %v4738
  %4740 = vmatprep.mubr.bf16.mxu0 %v4157
  %4741 = vmatmul.mubr.bf16.gmra.mxu0 %v4156
  %v4742 = vpop.f32.mrf.mxu0
  %v4743 = vadd.f32 0.0, %v4742
  %v4744 = vpop.f32.mrf.mxu0
  %v4745 = vadd.f32 0.0, %v4744
  %v4746 = vpop.f32.mrf.mxu0
  %v4747 = vadd.f32 0.0, %v4746
  %v4748 = vpop.f32.mrf.mxu0
  %v4749 = vadd.f32 0.0, %v4748
  %4750 = vdwg.mxu0
  %4751 = vmatprep.subr.bf16.mxu0 %v3541
  %4752 = vmatpush1.bf16.msra.mxu0 %v3540
  %4753 = vmatprep.subr.bf16.mxu0 %v3526
  %4754 = vmatpush1.bf16.msra.mxu0 %v3525
  %4755 = vmatprep.subr.bf16.mxu0 %v3407
  %4756 = vmatpush1.bf16.msra.mxu0 %v3406
  %4757 = vmatprep.subr.bf16.mxu0 %v3392
  %4758 = vmatpush1.bf16.msra.mxu0 %v3391
  %4759 = vmatprep.subr.bf16.mxu0 %v3273
  %4760 = vmatpush1.bf16.msra.mxu0 %v3272
  %4761 = vmatprep.subr.bf16.mxu0 %v3258
  %4762 = vmatpush1.bf16.msra.mxu0 %v3257
  %4763 = vmatprep.subr.bf16.mxu0 %v3139
  %4764 = vmatpush1.bf16.msra.mxu0 %v3138
  %4765 = vmatprep.subr.bf16.mxu0 %v3124
  %4766 = vmatpush1.bf16.msra.mxu0 %v3123
  %4767 = vmatprep.subr.bf16.mxu0 %v4077
  %4768 = vmatpush2.bf16.msra.mxu0 %v4076
  %4769 = vmatprep.subr.bf16.mxu0 %v4062
  %4770 = vmatpush2.bf16.msra.mxu0 %v4061
  %4771 = vmatprep.subr.bf16.mxu0 %v3943
  %4772 = vmatpush2.bf16.msra.mxu0 %v3942
  %4773 = vmatprep.subr.bf16.mxu0 %v3928
  %4774 = vmatpush2.bf16.msra.mxu0 %v3927
  %4775 = vmatprep.subr.bf16.mxu0 %v3809
  %4776 = vmatpush2.bf16.msra.mxu0 %v3808
  %4777 = vmatprep.subr.bf16.mxu0 %v3794
  %4778 = vmatpush2.bf16.msra.mxu0 %v3793
  %4779 = vmatprep.subr.bf16.mxu0 %v3675
  %4780 = vmatpush2.bf16.msra.mxu0 %v3674
  %4781 = vmatprep.subr.bf16.mxu0 %v3660
  %4782 = vmatpush2.bf16.msra.mxu0 %v3659
  %4783 = vmatprep.mubr.bf16.mxu0 %v4155
  %4784 = vmatmul.mubr.bf16.gmra.mxu0 %v4154
  %v4785 = vpop.f32.mrf.mxu0
  %v4786 = vadd.f32 %v4733, %v4785
  %v4787 = vpop.f32.mrf.mxu0
  %v4788 = vadd.f32 %v4735, %v4787
  %v4789 = vpop.f32.mrf.mxu0
  %v4790 = vadd.f32 %v4737, %v4789
  %v4791 = vpop.f32.mrf.mxu0
  %v4792 = vadd.f32 %v4739, %v4791
  %4793 = vmatprep.mubr.bf16.mxu0 %v4159
  %4794 = vmatmul.mubr.bf16.gmra.mxu0 %v4158
  %v4795 = vpop.f32.mrf.mxu0
  %v4796 = vadd.f32 %v4743, %v4795
  %v4797 = vpop.f32.mrf.mxu0
  %v4798 = vadd.f32 %v4745, %v4797
  %v4799 = vpop.f32.mrf.mxu0
  %v4800 = vadd.f32 %v4747, %v4799
  %v4801 = vpop.f32.mrf.mxu0
  %v4802 = vadd.f32 %v4749, %v4801
  %4803 = vdwg.mxu0
  %4804 = vmatprep.subr.bf16.mxu0 %v2472
  %4805 = vmatpush1.bf16.msra.mxu0 %v2471
  %4806 = vmatprep.subr.bf16.mxu0 %v2457
  %4807 = vmatpush1.bf16.msra.mxu0 %v2456
  %4808 = vmatprep.subr.bf16.mxu0 %v2340
  %4809 = vmatpush1.bf16.msra.mxu0 %v2339
  %4810 = vmatprep.subr.bf16.mxu0 %v2325
  %4811 = vmatpush1.bf16.msra.mxu0 %v2324
  %4812 = vmatprep.subr.bf16.mxu0 %v2208
  %4813 = vmatpush1.bf16.msra.mxu0 %v2207
  %4814 = vmatprep.subr.bf16.mxu0 %v2193
  %4815 = vmatpush1.bf16.msra.mxu0 %v2192
  %4816 = vmatprep.subr.bf16.mxu0 %v2081
  %4817 = vmatpush1.bf16.msra.mxu0 %v2080
  %4818 = vmatprep.subr.bf16.mxu0 %v2065
  %4819 = vmatpush1.bf16.msra.mxu0 %v2064
  %4820 = vmatprep.subr.bf16.mxu0 %v3007
  %4821 = vmatpush2.bf16.msra.mxu0 %v3006
  %4822 = vmatprep.subr.bf16.mxu0 %v2992
  %4823 = vmatpush2.bf16.msra.mxu0 %v2991
  %4824 = vmatprep.subr.bf16.mxu0 %v2873
  %4825 = vmatpush2.bf16.msra.mxu0 %v2872
  %4826 = vmatprep.subr.bf16.mxu0 %v2858
  %4827 = vmatpush2.bf16.msra.mxu0 %v2857
  %4828 = vmatprep.subr.bf16.mxu0 %v2739
  %4829 = vmatpush2.bf16.msra.mxu0 %v2738
  %4830 = vmatprep.subr.bf16.mxu0 %v2724
  %4831 = vmatpush2.bf16.msra.mxu0 %v2723
  %4832 = vmatprep.subr.bf16.mxu0 %v2605
  %4833 = vmatpush2.bf16.msra.mxu0 %v2604
  %4834 = vmatprep.subr.bf16.mxu0 %v2590
  %4835 = vmatpush2.bf16.msra.mxu0 %v2589
  %4836 = vmatprep.mubr.bf16.mxu0 %v4153
  %4837 = vmatmul.mubr.bf16.gmra.mxu0 %v4152
  %v4838 = vpop.f32.mrf.mxu0
  %v4839 = vadd.f32 0.0, %v4838
  %v4840 = vpop.f32.mrf.mxu0
  %v4841 = vadd.f32 0.0, %v4840
  %v4842 = vpop.f32.mrf.mxu0
  %v4843 = vadd.f32 0.0, %v4842
  %v4844 = vpop.f32.mrf.mxu0
  %v4845 = vadd.f32 0.0, %v4844
  %4846 = vmatprep.mubr.bf16.mxu0 %v4157
  %4847 = vmatmul.mubr.bf16.gmra.mxu0 %v4156
  %v4848 = vpop.f32.mrf.mxu0
  %v4849 = vadd.f32 0.0, %v4848
  %v4850 = vpop.f32.mrf.mxu0
  %v4851 = vadd.f32 0.0, %v4850
  %v4852 = vpop.f32.mrf.mxu0
  %v4853 = vadd.f32 0.0, %v4852
  %v4854 = vpop.f32.mrf.mxu0
  %v4855 = vadd.f32 0.0, %v4854
  %4856 = vdwg.mxu0
  %4857 = vmatprep.subr.bf16.mxu0 %v3543
  %4858 = vmatpush1.bf16.msra.mxu0 %v3542
  %4859 = vmatprep.subr.bf16.mxu0 %v3528
  %4860 = vmatpush1.bf16.msra.mxu0 %v3527
  %4861 = vmatprep.subr.bf16.mxu0 %v3409
  %4862 = vmatpush1.bf16.msra.mxu0 %v3408
  %4863 = vmatprep.subr.bf16.mxu0 %v3394
  %4864 = vmatpush1.bf16.msra.mxu0 %v3393
  %4865 = vmatprep.subr.bf16.mxu0 %v3275
  %4866 = vmatpush1.bf16.msra.mxu0 %v3274
  %4867 = vmatprep.subr.bf16.mxu0 %v3260
  %4868 = vmatpush1.bf16.msra.mxu0 %v3259
  %4869 = vmatprep.subr.bf16.mxu0 %v3141
  %4870 = vmatpush1.bf16.msra.mxu0 %v3140
  %4871 = vmatprep.subr.bf16.mxu0 %v3126
  %4872 = vmatpush1.bf16.msra.mxu0 %v3125
  %4873 = vmatprep.subr.bf16.mxu0 %v4079
  %4874 = vmatpush2.bf16.msra.mxu0 %v4078
  %4875 = vmatprep.subr.bf16.mxu0 %v4064
  %4876 = vmatpush2.bf16.msra.mxu0 %v4063
  %4877 = vmatprep.subr.bf16.mxu0 %v3945
  %4878 = vmatpush2.bf16.msra.mxu0 %v3944
  %4879 = vmatprep.subr.bf16.mxu0 %v3930
  %4880 = vmatpush2.bf16.msra.mxu0 %v3929
  %4881 = vmatprep.subr.bf16.mxu0 %v3811
  %4882 = vmatpush2.bf16.msra.mxu0 %v3810
  %4883 = vmatprep.subr.bf16.mxu0 %v3796
  %4884 = vmatpush2.bf16.msra.mxu0 %v3795
  %4885 = vmatprep.subr.bf16.mxu0 %v3677
  %4886 = vmatpush2.bf16.msra.mxu0 %v3676
  %4887 = vmatprep.subr.bf16.mxu0 %v3662
  %4888 = vmatpush2.bf16.msra.mxu0 %v3661
  %4889 = vmatprep.mubr.bf16.mxu0 %v4155
  %4890 = vmatmul.mubr.bf16.gmra.mxu0 %v4154
  %v4891 = vpop.f32.mrf.mxu0
  %v4892 = vadd.f32 %v4839, %v4891
  %v4893 = vpop.f32.mrf.mxu0
  %v4894 = vadd.f32 %v4841, %v4893
  %v4895 = vpop.f32.mrf.mxu0
  %v4896 = vadd.f32 %v4843, %v4895
  %v4897 = vpop.f32.mrf.mxu0
  %v4898 = vadd.f32 %v4845, %v4897
  %4899 = vmatprep.mubr.bf16.mxu0 %v4159
  %4900 = vmatmul.mubr.bf16.gmra.mxu0 %v4158
  %v4901 = vpop.f32.mrf.mxu0
  %v4902 = vadd.f32 %v4849, %v4901
  %v4903 = vpop.f32.mrf.mxu0
  %v4904 = vadd.f32 %v4851, %v4903
  %v4905 = vpop.f32.mrf.mxu0
  %v4906 = vadd.f32 %v4853, %v4905
  %v4907 = vpop.f32.mrf.mxu0
  %v4908 = vadd.f32 %v4855, %v4907
  %4909 = vdwg.mxu0
  %4910 = vmatprep.subr.bf16.mxu0 %v2510
  %4911 = vmatpush1.bf16.msra.mxu0 %v2473
  %4912 = vmatprep.subr.bf16.mxu0 %v2506
  %4913 = vmatpush1.bf16.msra.mxu0 %v2458
  %4914 = vmatprep.subr.bf16.mxu0 %v2378
  %4915 = vmatpush1.bf16.msra.mxu0 %v2341
  %4916 = vmatprep.subr.bf16.mxu0 %v2374
  %4917 = vmatpush1.bf16.msra.mxu0 %v2326
  %4918 = vmatprep.subr.bf16.mxu0 %v2246
  %4919 = vmatpush1.bf16.msra.mxu0 %v2209
  %4920 = vmatprep.subr.bf16.mxu0 %v2242
  %4921 = vmatpush1.bf16.msra.mxu0 %v2194
  %4922 = vmatprep.subr.bf16.mxu0 %v2083
  %4923 = vmatpush1.bf16.msra.mxu0 %v2082
  %4924 = vmatprep.subr.bf16.mxu0 %v2067
  %4925 = vmatpush1.bf16.msra.mxu0 %v2066
  %4926 = vmatprep.subr.bf16.mxu0 %v3046
  %4927 = vmatpush2.bf16.msra.mxu0 %v3008
  %4928 = vmatprep.subr.bf16.mxu0 %v3042
  %4929 = vmatpush2.bf16.msra.mxu0 %v2993
  %4930 = vmatprep.subr.bf16.mxu0 %v2912
  %4931 = vmatpush2.bf16.msra.mxu0 %v2874
  %4932 = vmatprep.subr.bf16.mxu0 %v2908
  %4933 = vmatpush2.bf16.msra.mxu0 %v2859
  %4934 = vmatprep.subr.bf16.mxu0 %v2778
  %4935 = vmatpush2.bf16.msra.mxu0 %v2740
  %4936 = vmatprep.subr.bf16.mxu0 %v2774
  %4937 = vmatpush2.bf16.msra.mxu0 %v2725
  %4938 = vmatprep.subr.bf16.mxu0 %v2644
  %4939 = vmatpush2.bf16.msra.mxu0 %v2606
  %4940 = vmatprep.subr.bf16.mxu0 %v2640
  %4941 = vmatpush2.bf16.msra.mxu0 %v2591
  %4942 = vmatprep.mubr.bf16.mxu0 %v4153
  %4943 = vmatmul.mubr.bf16.gmra.mxu0 %v4152
  %v4944 = vpop.f32.mrf.mxu0
  %v4945 = vadd.f32 0.0, %v4944
  %v4946 = vpop.f32.mrf.mxu0
  %v4947 = vadd.f32 0.0, %v4946
  %v4948 = vpop.f32.mrf.mxu0
  %v4949 = vadd.f32 0.0, %v4948
  %v4950 = vpop.f32.mrf.mxu0
  %v4951 = vadd.f32 0.0, %v4950
  %4952 = vmatprep.mubr.bf16.mxu0 %v4157
  %4953 = vmatmul.mubr.bf16.gmra.mxu0 %v4156
  %v4954 = vpop.f32.mrf.mxu0
  %v4955 = vadd.f32 0.0, %v4954
  %v4956 = vpop.f32.mrf.mxu0
  %v4957 = vadd.f32 0.0, %v4956
  %v4958 = vpop.f32.mrf.mxu0
  %v4959 = vadd.f32 0.0, %v4958
  %v4960 = vpop.f32.mrf.mxu0
  %v4961 = vadd.f32 0.0, %v4960
  %4962 = vdwg.mxu0
  %4963 = vmatprep.subr.bf16.mxu0 %v3582
  %4964 = vmatpush1.bf16.msra.mxu0 %v3544
  %4965 = vmatprep.subr.bf16.mxu0 %v3578
  %4966 = vmatpush1.bf16.msra.mxu0 %v3529
  %4967 = vmatprep.subr.bf16.mxu0 %v3448
  %4968 = vmatpush1.bf16.msra.mxu0 %v3410
  %4969 = vmatprep.subr.bf16.mxu0 %v3444
  %4970 = vmatpush1.bf16.msra.mxu0 %v3395
  %4971 = vmatprep.subr.bf16.mxu0 %v3314
  %4972 = vmatpush1.bf16.msra.mxu0 %v3276
  %4973 = vmatprep.subr.bf16.mxu0 %v3310
  %4974 = vmatpush1.bf16.msra.mxu0 %v3261
  %4975 = vmatprep.subr.bf16.mxu0 %v3180
  %4976 = vmatpush1.bf16.msra.mxu0 %v3142
  %4977 = vmatprep.subr.bf16.mxu0 %v3176
  %4978 = vmatpush1.bf16.msra.mxu0 %v3127
  %4979 = vmatprep.subr.bf16.mxu0 %v4118
  %4980 = vmatpush2.bf16.msra.mxu0 %v4080
  %4981 = vmatprep.subr.bf16.mxu0 %v4114
  %4982 = vmatpush2.bf16.msra.mxu0 %v4065
  %4983 = vmatprep.subr.bf16.mxu0 %v3984
  %4984 = vmatpush2.bf16.msra.mxu0 %v3946
  %4985 = vmatprep.subr.bf16.mxu0 %v3980
  %4986 = vmatpush2.bf16.msra.mxu0 %v3931
  %4987 = vmatprep.subr.bf16.mxu0 %v3850
  %4988 = vmatpush2.bf16.msra.mxu0 %v3812
  %4989 = vmatprep.subr.bf16.mxu0 %v3846
  %4990 = vmatpush2.bf16.msra.mxu0 %v3797
  %4991 = vmatprep.subr.bf16.mxu0 %v3716
  %4992 = vmatpush2.bf16.msra.mxu0 %v3678
  %4993 = vmatprep.subr.bf16.mxu0 %v3712
  %4994 = vmatpush2.bf16.msra.mxu0 %v3663
  %4995 = vmatprep.mubr.bf16.mxu0 %v4155
  %4996 = vmatmul.mubr.bf16.gmra.mxu0 %v4154
  %v4997 = vpop.f32.mrf.mxu0
  %v4998 = vadd.f32 %v4945, %v4997
  %v4999 = vpop.f32.mrf.mxu0
  %v5000 = vadd.f32 %v4947, %v4999
  %v5001 = vpop.f32.mrf.mxu0
  %v5002 = vadd.f32 %v4949, %v5001
  %v5003 = vpop.f32.mrf.mxu0
  %v5004 = vadd.f32 %v4951, %v5003
  %5005 = vmatprep.mubr.bf16.mxu0 %v4159
  %5006 = vmatmul.mubr.bf16.gmra.mxu0 %v4158
  %v5007 = vpop.f32.mrf.mxu0
  %v5008 = vadd.f32 %v4955, %v5007
  %v5009 = vpop.f32.mrf.mxu0
  %v5010 = vadd.f32 %v4957, %v5009
  %v5011 = vpop.f32.mrf.mxu0
  %v5012 = vadd.f32 %v4959, %v5011
  %v5013 = vpop.f32.mrf.mxu0
  %v5014 = vadd.f32 %v4961, %v5013
  %5015 = vdwg.mxu0
  %v5016 = vld [vmem:[%s5] sm:$0xff]
  %v5017 = vld [vmem:[%s5 + $0x8] sm:$0xff]
  %v5018 = vld [vmem:[%s5 + $0x10] sm:$0xff]
  %v5019 = vld [vmem:[%s5 + $0x18] sm:$0xff]
  %5021 = vset.pattern.permute.xlu0 0
  %5022 = vperm.xlu0 %5021, %v5016
  %v5023 = vpop.permute.xlu0 %5022
  %5026 = vset.pattern.permute.xlu0 0
  %5027 = vperm.xlu0 %5026, %v5017
  %v5028 = vpop.permute.xlu0 %5027
  %5031 = vset.pattern.permute.xlu0 0
  %5032 = vperm.xlu0 %5031, %v5018
  %v5033 = vpop.permute.xlu0 %5032
  %5036 = vset.pattern.permute.xlu0 0
  %5037 = vperm.xlu0 %5036, %v5019
  %v5038 = vpop.permute.xlu0 %5037
  %v5040 = vmul.f32 %v4256, %v5023
  %v5041 = vmul.f32 %v4258, %v5023
  %v5042 = vmul.f32 %v4362, %v5023
  %v5043 = vmul.f32 %v4364, %v5023
  %v5044 = vmul.f32 %v4468, %v5023
  %v5045 = vmul.f32 %v4470, %v5023
  %v5046 = vmul.f32 %v4574, %v5023
  %v5047 = vmul.f32 %v4576, %v5023
  %v5048 = vmul.f32 %v4680, %v5023
  %v5049 = vmul.f32 %v4682, %v5023
  %v5050 = vmul.f32 %v4786, %v5023
  %v5051 = vmul.f32 %v4788, %v5023
  %v5052 = vmul.f32 %v4892, %v5023
  %v5053 = vmul.f32 %v4894, %v5023
  %v5054 = vmul.f32 %v4998, %v5023
  %v5055 = vmul.f32 %v5000, %v5023
  %v5056 = vmul.f32 %v4260, %v5028
  %v5057 = vmul.f32 %v4262, %v5028
  %v5058 = vmul.f32 %v4366, %v5028
  %v5059 = vmul.f32 %v4368, %v5028
  %v5060 = vmul.f32 %v4472, %v5028
  %v5061 = vmul.f32 %v4474, %v5028
  %v5062 = vmul.f32 %v4578, %v5028
  %v5063 = vmul.f32 %v4580, %v5028
  %v5064 = vmul.f32 %v4684, %v5028
  %v5065 = vmul.f32 %v4686, %v5028
  %v5066 = vmul.f32 %v4790, %v5028
  %v5067 = vmul.f32 %v4792, %v5028
  %v5068 = vmul.f32 %v4896, %v5028
  %v5069 = vmul.f32 %v4898, %v5028
  %v5070 = vmul.f32 %v5002, %v5028
  %v5071 = vmul.f32 %v5004, %v5028
  %v5072 = vmul.f32 %v4266, %v5033
  %v5073 = vmul.f32 %v4268, %v5033
  %v5074 = vmul.f32 %v4372, %v5033
  %v5075 = vmul.f32 %v4374, %v5033
  %v5076 = vmul.f32 %v4478, %v5033
  %v5077 = vmul.f32 %v4480, %v5033
  %v5078 = vmul.f32 %v4584, %v5033
  %v5079 = vmul.f32 %v4586, %v5033
  %v5080 = vmul.f32 %v4690, %v5033
  %v5081 = vmul.f32 %v4692, %v5033
  %v5082 = vmul.f32 %v4796, %v5033
  %v5083 = vmul.f32 %v4798, %v5033
  %v5084 = vmul.f32 %v4902, %v5033
  %v5085 = vmul.f32 %v4904, %v5033
  %v5086 = vmul.f32 %v5008, %v5033
  %v5087 = vmul.f32 %v5010, %v5033
  %v5088 = vmul.f32 %v4270, %v5038
  %v5089 = vmul.f32 %v4272, %v5038
  %v5090 = vmul.f32 %v4376, %v5038
  %v5091 = vmul.f32 %v4378, %v5038
  %v5092 = vmul.f32 %v4482, %v5038
  %v5093 = vmul.f32 %v4484, %v5038
  %v5094 = vmul.f32 %v4588, %v5038
  %v5095 = vmul.f32 %v4590, %v5038
  %v5096 = vmul.f32 %v4694, %v5038
  %v5097 = vmul.f32 %v4696, %v5038
  %v5098 = vmul.f32 %v4800, %v5038
  %v5099 = vmul.f32 %v4802, %v5038
  %v5100 = vmul.f32 %v4906, %v5038
  %v5101 = vmul.f32 %v4908, %v5038
  %v5102 = vmul.f32 %v5012, %v5038
  %v5103 = vmul.f32 %v5014, %v5038
  %v5104 = vld [vmem:[%s6] sm:$0xff]
  %v5105 = vld [vmem:[%s6 + $0x8] sm:$0xff]
  %v5106 = vld [vmem:[%s6 + $0x10] sm:$0xff]
  %v5107 = vld [vmem:[%s6 + $0x18] sm:$0xff]
  %5109 = vset.pattern.permute.xlu0 0
  %5110 = vperm.xlu0 %5109, %v5104
  %v5111 = vpop.permute.xlu0 %5110
  %5114 = vset.pattern.permute.xlu0 0
  %5115 = vperm.xlu0 %5114, %v5105
  %v5116 = vpop.permute.xlu0 %5115
  %5119 = vset.pattern.permute.xlu0 0
  %5120 = vperm.xlu0 %5119, %v5106
  %v5121 = vpop.permute.xlu0 %5120
  %5124 = vset.pattern.permute.xlu0 0
  %5125 = vperm.xlu0 %5124, %v5107
  %v5126 = vpop.permute.xlu0 %5125
  %v5128 = vadd.f32 %v5040, %v5111
  %v5129 = vadd.f32 %v5041, %v5111
  %v5130 = vadd.f32 %v5042, %v5111
  %v5131 = vadd.f32 %v5043, %v5111
  %v5132 = vadd.f32 %v5044, %v5111
  %v5133 = vadd.f32 %v5045, %v5111
  %v5134 = vadd.f32 %v5046, %v5111
  %v5135 = vadd.f32 %v5047, %v5111
  %v5136 = vadd.f32 %v5048, %v5111
  %v5137 = vadd.f32 %v5049, %v5111
  %v5138 = vadd.f32 %v5050, %v5111
  %v5139 = vadd.f32 %v5051, %v5111
  %v5140 = vadd.f32 %v5052, %v5111
  %v5141 = vadd.f32 %v5053, %v5111
  %v5142 = vadd.f32 %v5054, %v5111
  %v5143 = vadd.f32 %v5055, %v5111
  %v5144 = vadd.f32 %v5056, %v5116
  %v5145 = vadd.f32 %v5057, %v5116
  %v5146 = vadd.f32 %v5058, %v5116
  %v5147 = vadd.f32 %v5059, %v5116
  %v5148 = vadd.f32 %v5060, %v5116
  %v5149 = vadd.f32 %v5061, %v5116
  %v5150 = vadd.f32 %v5062, %v5116
  %v5151 = vadd.f32 %v5063, %v5116
  %v5152 = vadd.f32 %v5064, %v5116
  %v5153 = vadd.f32 %v5065, %v5116
  %v5154 = vadd.f32 %v5066, %v5116
  %v5155 = vadd.f32 %v5067, %v5116
  %v5156 = vadd.f32 %v5068, %v5116
  %v5157 = vadd.f32 %v5069, %v5116
  %v5158 = vadd.f32 %v5070, %v5116
  %v5159 = vadd.f32 %v5071, %v5116
  %v5160 = vadd.f32 %v5072, %v5121
  %v5161 = vadd.f32 %v5073, %v5121
  %v5162 = vadd.f32 %v5074, %v5121
  %v5163 = vadd.f32 %v5075, %v5121
  %v5164 = vadd.f32 %v5076, %v5121
  %v5165 = vadd.f32 %v5077, %v5121
  %v5166 = vadd.f32 %v5078, %v5121
  %v5167 = vadd.f32 %v5079, %v5121
  %v5168 = vadd.f32 %v5080, %v5121
  %v5169 = vadd.f32 %v5081, %v5121
  %v5170 = vadd.f32 %v5082, %v5121
  %v5171 = vadd.f32 %v5083, %v5121
  %v5172 = vadd.f32 %v5084, %v5121
  %v5173 = vadd.f32 %v5085, %v5121
  %v5174 = vadd.f32 %v5086, %v5121
  %v5175 = vadd.f32 %v5087, %v5121
  %v5176 = vadd.f32 %v5088, %v5126
  %v5177 = vadd.f32 %v5089, %v5126
  %v5178 = vadd.f32 %v5090, %v5126
  %v5179 = vadd.f32 %v5091, %v5126
  %v5180 = vadd.f32 %v5092, %v5126
  %v5181 = vadd.f32 %v5093, %v5126
  %v5182 = vadd.f32 %v5094, %v5126
  %v5183 = vadd.f32 %v5095, %v5126
  %v5184 = vadd.f32 %v5096, %v5126
  %v5185 = vadd.f32 %v5097, %v5126
  %v5186 = vadd.f32 %v5098, %v5126
  %v5187 = vadd.f32 %v5099, %v5126
  %v5188 = vadd.f32 %v5100, %v5126
  %v5189 = vadd.f32 %v5101, %v5126
  %v5190 = vadd.f32 %v5102, %v5126
  %v5191 = vadd.f32 %v5103, %v5126
  %v5192 = vpack.c.bf16 %v5144, %v5128
  %v5193 = vpack.c.bf16 %v5145, %v5129
  %v5194 = vpack.c.bf16 %v5146, %v5130
  %v5195 = vpack.c.bf16 %v5147, %v5131
  %v5196 = vpack.c.bf16 %v5148, %v5132
  %v5197 = vpack.c.bf16 %v5149, %v5133
  %v5198 = vpack.c.bf16 %v5150, %v5134
  %v5199 = vpack.c.bf16 %v5151, %v5135
  %v5200 = vpack.c.bf16 %v5152, %v5136
  %v5201 = vpack.c.bf16 %v5153, %v5137
  %v5202 = vpack.c.bf16 %v5154, %v5138
  %v5203 = vpack.c.bf16 %v5155, %v5139
  %v5204 = vpack.c.bf16 %v5156, %v5140
  %v5205 = vpack.c.bf16 %v5157, %v5141
  %v5206 = vpack.c.bf16 %v5158, %v5142
  %v5207 = vpack.c.bf16 %v5159, %v5143
  %v5208 = vpack.c.bf16 %v5176, %v5160
  %v5209 = vpack.c.bf16 %v5177, %v5161
  %v5210 = vpack.c.bf16 %v5178, %v5162
  %v5211 = vpack.c.bf16 %v5179, %v5163
  %v5212 = vpack.c.bf16 %v5180, %v5164
  %v5213 = vpack.c.bf16 %v5181, %v5165
  %v5214 = vpack.c.bf16 %v5182, %v5166
  %v5215 = vpack.c.bf16 %v5183, %v5167
  %v5216 = vpack.c.bf16 %v5184, %v5168
  %v5217 = vpack.c.bf16 %v5185, %v5169
  %v5218 = vpack.c.bf16 %v5186, %v5170
  %v5219 = vpack.c.bf16 %v5187, %v5171
  %v5220 = vpack.c.bf16 %v5188, %v5172
  %v5221 = vpack.c.bf16 %v5189, %v5173
  %v5222 = vpack.c.bf16 %v5190, %v5174
  %v5223 = vpack.c.bf16 %v5191, %v5175
  %5256 = vrot.lane.b32.xlu0 %v5192, 127
  %v5257 = vpop.permute.xlu0 %5256
  %5258 = vrot.lane.b32.xlu0 %v5193, 127
  %v5259 = vpop.permute.xlu0 %5258
  %5260 = vrot.lane.b32.xlu0 %v5194, 127
  %v5261 = vpop.permute.xlu0 %5260
  %5262 = vrot.lane.b32.xlu0 %v5195, 127
  %v5263 = vpop.permute.xlu0 %5262
  %5264 = vrot.lane.b32.xlu0 %v5196, 127
  %v5265 = vpop.permute.xlu0 %5264
  %5266 = vrot.lane.b32.xlu0 %v5197, 127
  %v5267 = vpop.permute.xlu0 %5266
  %5268 = vrot.lane.b32.xlu0 %v5198, 127
  %v5269 = vpop.permute.xlu0 %5268
  %5270 = vrot.lane.b32.xlu0 %v5199, 127
  %v5271 = vpop.permute.xlu0 %5270
  %5272 = vrot.lane.b32.xlu0 %v5200, 127
  %v5273 = vpop.permute.xlu0 %5272
  %5274 = vrot.lane.b32.xlu0 %v5201, 127
  %v5275 = vpop.permute.xlu0 %5274
  %5276 = vrot.lane.b32.xlu0 %v5202, 127
  %v5277 = vpop.permute.xlu0 %5276
  %5278 = vrot.lane.b32.xlu0 %v5203, 127
  %v5279 = vpop.permute.xlu0 %5278
  %5280 = vrot.lane.b32.xlu0 %v5204, 127
  %v5281 = vpop.permute.xlu0 %5280
  %5282 = vrot.lane.b32.xlu0 %v5205, 127
  %v5283 = vpop.permute.xlu0 %5282
  %5284 = vrot.lane.b32.xlu0 %v5206, 127
  %v5285 = vpop.permute.xlu0 %5284
  %5286 = vrot.lane.b32.xlu0 %v5207, 127
  %v5287 = vpop.permute.xlu0 %5286
  %5288 = vrot.lane.b32.xlu0 %v5208, 127
  %v5289 = vpop.permute.xlu0 %5288
  %5290 = vrot.lane.b32.xlu0 %v5209, 127
  %v5291 = vpop.permute.xlu0 %5290
  %5292 = vrot.lane.b32.xlu0 %v5210, 127
  %v5293 = vpop.permute.xlu0 %5292
  %5294 = vrot.lane.b32.xlu0 %v5211, 127
  %v5295 = vpop.permute.xlu0 %5294
  %5296 = vrot.lane.b32.xlu0 %v5212, 127
  %v5297 = vpop.permute.xlu0 %5296
  %5298 = vrot.lane.b32.xlu0 %v5213, 127
  %v5299 = vpop.permute.xlu0 %5298
  %5300 = vrot.lane.b32.xlu0 %v5214, 127
  %v5301 = vpop.permute.xlu0 %5300
  %5302 = vrot.lane.b32.xlu0 %v5215, 127
  %v5303 = vpop.permute.xlu0 %5302
  %5304 = vrot.lane.b32.xlu0 %v5216, 127
  %v5305 = vpop.permute.xlu0 %5304
  %5306 = vrot.lane.b32.xlu0 %v5217, 127
  %v5307 = vpop.permute.xlu0 %5306
  %5308 = vrot.lane.b32.xlu0 %v5218, 127
  %v5309 = vpop.permute.xlu0 %5308
  %5310 = vrot.lane.b32.xlu0 %v5219, 127
  %v5311 = vpop.permute.xlu0 %5310
  %5312 = vrot.lane.b32.xlu0 %v5220, 127
  %v5313 = vpop.permute.xlu0 %5312
  %5314 = vrot.lane.b32.xlu0 %v5221, 127
  %v5315 = vpop.permute.xlu0 %5314
  %5316 = vrot.lane.b32.xlu0 %v5222, 127
  %v5317 = vpop.permute.xlu0 %5316
  %5318 = vrot.lane.b32.xlu0 %v5223, 127
  %v5319 = vpop.permute.xlu0 %5318
  %v5320 = vsel %vm1108, %v5257, %v5259
  %v5321 = vsel %vm1108, %v5259, %v5261
  %v5322 = vsel %vm1108, %v5261, %v5263
  %v5323 = vsel %vm1108, %v5263, %v5265
  %v5324 = vsel %vm1108, %v5265, %v5267
  %v5325 = vsel %vm1108, %v5267, %v5269
  %v5326 = vsel %vm1108, %v5269, %v5271
  %v5327 = vsel %vm1108, %v5271, %v5273
  %v5328 = vsel %vm1108, %v5273, %v5275
  %v5329 = vsel %vm1108, %v5275, %v5277
  %v5330 = vsel %vm1108, %v5277, %v5279
  %v5331 = vsel %vm1108, %v5279, %v5281
  %v5332 = vsel %vm1108, %v5281, %v5283
  %v5333 = vsel %vm1108, %v5283, %v5285
  %v5334 = vsel %vm1108, %v5285, %v5287
  %v5335 = vsel %vm1108, %v5289, %v5291
  %v5336 = vsel %vm1108, %v5291, %v5293
  %v5337 = vsel %vm1108, %v5293, %v5295
  %v5338 = vsel %vm1108, %v5295, %v5297
  %v5339 = vsel %vm1108, %v5297, %v5299
  %v5340 = vsel %vm1108, %v5299, %v5301
  %v5341 = vsel %vm1108, %v5301, %v5303
  %v5342 = vsel %vm1108, %v5303, %v5305
  %v5343 = vsel %vm1108, %v5305, %v5307
  %v5344 = vsel %vm1108, %v5307, %v5309
  %v5345 = vsel %vm1108, %v5309, %v5311
  %v5346 = vsel %vm1108, %v5311, %v5313
  %v5347 = vsel %vm1108, %v5313, %v5315
  %v5348 = vsel %vm1108, %v5315, %v5317
  %v5349 = vsel %vm1108, %v5317, %v5319
  %v5382 = vsel %vm1124, %v5287, %v5257
  %v5386 = vsel %vm1124, %v5319, %v5289
  %5388 = vrot.lane.b32.xlu0 %v5192, 126
  %v5389 = vpop.permute.xlu0 %5388
  %5390 = vrot.lane.b32.xlu0 %v5193, 126
  %v5391 = vpop.permute.xlu0 %5390
  %5392 = vrot.lane.b32.xlu0 %v5194, 126
  %v5393 = vpop.permute.xlu0 %5392
  %5394 = vrot.lane.b32.xlu0 %v5195, 126
  %v5395 = vpop.permute.xlu0 %5394
  %5396 = vrot.lane.b32.xlu0 %v5196, 126
  %v5397 = vpop.permute.xlu0 %5396
  %5398 = vrot.lane.b32.xlu0 %v5197, 126
  %v5399 = vpop.permute.xlu0 %5398
  %5400 = vrot.lane.b32.xlu0 %v5198, 126
  %v5401 = vpop.permute.xlu0 %5400
  %5402 = vrot.lane.b32.xlu0 %v5199, 126
  %v5403 = vpop.permute.xlu0 %5402
  %5404 = vrot.lane.b32.xlu0 %v5200, 126
  %v5405 = vpop.permute.xlu0 %5404
  %5406 = vrot.lane.b32.xlu0 %v5201, 126
  %v5407 = vpop.permute.xlu0 %5406
  %5408 = vrot.lane.b32.xlu0 %v5202, 126
  %v5409 = vpop.permute.xlu0 %5408
  %5410 = vrot.lane.b32.xlu0 %v5203, 126
  %v5411 = vpop.permute.xlu0 %5410
  %5412 = vrot.lane.b32.xlu0 %v5204, 126
  %v5413 = vpop.permute.xlu0 %5412
  %5414 = vrot.lane.b32.xlu0 %v5205, 126
  %v5415 = vpop.permute.xlu0 %5414
  %5416 = vrot.lane.b32.xlu0 %v5206, 126
  %v5417 = vpop.permute.xlu0 %5416
  %5418 = vrot.lane.b32.xlu0 %v5207, 126
  %v5419 = vpop.permute.xlu0 %5418
  %5420 = vrot.lane.b32.xlu0 %v5208, 126
  %v5421 = vpop.permute.xlu0 %5420
  %5422 = vrot.lane.b32.xlu0 %v5209, 126
  %v5423 = vpop.permute.xlu0 %5422
  %5424 = vrot.lane.b32.xlu0 %v5210, 126
  %v5425 = vpop.permute.xlu0 %5424
  %5426 = vrot.lane.b32.xlu0 %v5211, 126
  %v5427 = vpop.permute.xlu0 %5426
  %5428 = vrot.lane.b32.xlu0 %v5212, 126
  %v5429 = vpop.permute.xlu0 %5428
  %5430 = vrot.lane.b32.xlu0 %v5213, 126
  %v5431 = vpop.permute.xlu0 %5430
  %5432 = vrot.lane.b32.xlu0 %v5214, 126
  %v5433 = vpop.permute.xlu0 %5432
  %5434 = vrot.lane.b32.xlu0 %v5215, 126
  %v5435 = vpop.permute.xlu0 %5434
  %5436 = vrot.lane.b32.xlu0 %v5216, 126
  %v5437 = vpop.permute.xlu0 %5436
  %5438 = vrot.lane.b32.xlu0 %v5217, 126
  %v5439 = vpop.permute.xlu0 %5438
  %5440 = vrot.lane.b32.xlu0 %v5218, 126
  %v5441 = vpop.permute.xlu0 %5440
  %5442 = vrot.lane.b32.xlu0 %v5219, 126
  %v5443 = vpop.permute.xlu0 %5442
  %5444 = vrot.lane.b32.xlu0 %v5220, 126
  %v5445 = vpop.permute.xlu0 %5444
  %5446 = vrot.lane.b32.xlu0 %v5221, 126
  %v5447 = vpop.permute.xlu0 %5446
  %5448 = vrot.lane.b32.xlu0 %v5222, 126
  %v5449 = vpop.permute.xlu0 %5448
  %5450 = vrot.lane.b32.xlu0 %v5223, 126
  %v5451 = vpop.permute.xlu0 %5450
  %v5452 = vsel %vm1160, %v5389, %v5391
  %v5453 = vsel %vm1160, %v5391, %v5393
  %v5454 = vsel %vm1160, %v5393, %v5395
  %v5455 = vsel %vm1160, %v5395, %v5397
  %v5456 = vsel %vm1160, %v5397, %v5399
  %v5457 = vsel %vm1160, %v5399, %v5401
  %v5458 = vsel %vm1160, %v5401, %v5403
  %v5459 = vsel %vm1160, %v5403, %v5405
  %v5460 = vsel %vm1160, %v5405, %v5407
  %v5461 = vsel %vm1160, %v5407, %v5409
  %v5462 = vsel %vm1160, %v5409, %v5411
  %v5463 = vsel %vm1160, %v5411, %v5413
  %v5464 = vsel %vm1160, %v5413, %v5415
  %v5465 = vsel %vm1160, %v5415, %v5417
  %v5466 = vsel %vm1160, %v5417, %v5419
  %v5467 = vsel %vm1160, %v5421, %v5423
  %v5468 = vsel %vm1160, %v5423, %v5425
  %v5469 = vsel %vm1160, %v5425, %v5427
  %v5470 = vsel %vm1160, %v5427, %v5429
  %v5471 = vsel %vm1160, %v5429, %v5431
  %v5472 = vsel %vm1160, %v5431, %v5433
  %v5473 = vsel %vm1160, %v5433, %v5435
  %v5474 = vsel %vm1160, %v5435, %v5437
  %v5475 = vsel %vm1160, %v5437, %v5439
  %v5476 = vsel %vm1160, %v5439, %v5441
  %v5477 = vsel %vm1160, %v5441, %v5443
  %v5478 = vsel %vm1160, %v5443, %v5445
  %v5479 = vsel %vm1160, %v5445, %v5447
  %v5480 = vsel %vm1160, %v5447, %v5449
  %v5481 = vsel %vm1160, %v5449, %v5451
  %v5514 = vsel %vm1176, %v5419, %v5389
  %v5518 = vsel %vm1176, %v5451, %v5421
  %5520 = vrot.lane.b32.xlu0 %v5192, 125
  %v5521 = vpop.permute.xlu0 %5520
  %5522 = vrot.lane.b32.xlu0 %v5193, 125
  %v5523 = vpop.permute.xlu0 %5522
  %5524 = vrot.lane.b32.xlu0 %v5194, 125
  %v5525 = vpop.permute.xlu0 %5524
  %5526 = vrot.lane.b32.xlu0 %v5195, 125
  %v5527 = vpop.permute.xlu0 %5526
  %5528 = vrot.lane.b32.xlu0 %v5196, 125
  %v5529 = vpop.permute.xlu0 %5528
  %5530 = vrot.lane.b32.xlu0 %v5197, 125
  %v5531 = vpop.permute.xlu0 %5530
  %5532 = vrot.lane.b32.xlu0 %v5198, 125
  %v5533 = vpop.permute.xlu0 %5532
  %5534 = vrot.lane.b32.xlu0 %v5199, 125
  %v5535 = vpop.permute.xlu0 %5534
  %5536 = vrot.lane.b32.xlu0 %v5200, 125
  %v5537 = vpop.permute.xlu0 %5536
  %5538 = vrot.lane.b32.xlu0 %v5201, 125
  %v5539 = vpop.permute.xlu0 %5538
  %5540 = vrot.lane.b32.xlu0 %v5202, 125
  %v5541 = vpop.permute.xlu0 %5540
  %5542 = vrot.lane.b32.xlu0 %v5203, 125
  %v5543 = vpop.permute.xlu0 %5542
  %5544 = vrot.lane.b32.xlu0 %v5204, 125
  %v5545 = vpop.permute.xlu0 %5544
  %5546 = vrot.lane.b32.xlu0 %v5205, 125
  %v5547 = vpop.permute.xlu0 %5546
  %5548 = vrot.lane.b32.xlu0 %v5206, 125
  %v5549 = vpop.permute.xlu0 %5548
  %5550 = vrot.lane.b32.xlu0 %v5207, 125
  %v5551 = vpop.permute.xlu0 %5550
  %5552 = vrot.lane.b32.xlu0 %v5208, 125
  %v5553 = vpop.permute.xlu0 %5552
  %5554 = vrot.lane.b32.xlu0 %v5209, 125
  %v5555 = vpop.permute.xlu0 %5554
  %5556 = vrot.lane.b32.xlu0 %v5210, 125
  %v5557 = vpop.permute.xlu0 %5556
  %5558 = vrot.lane.b32.xlu0 %v5211, 125
  %v5559 = vpop.permute.xlu0 %5558
  %5560 = vrot.lane.b32.xlu0 %v5212, 125
  %v5561 = vpop.permute.xlu0 %5560
  %5562 = vrot.lane.b32.xlu0 %v5213, 125
  %v5563 = vpop.permute.xlu0 %5562
  %5564 = vrot.lane.b32.xlu0 %v5214, 125
  %v5565 = vpop.permute.xlu0 %5564
  %5566 = vrot.lane.b32.xlu0 %v5215, 125
  %v5567 = vpop.permute.xlu0 %5566
  %5568 = vrot.lane.b32.xlu0 %v5216, 125
  %v5569 = vpop.permute.xlu0 %5568
  %5570 = vrot.lane.b32.xlu0 %v5217, 125
  %v5571 = vpop.permute.xlu0 %5570
  %5572 = vrot.lane.b32.xlu0 %v5218, 125
  %v5573 = vpop.permute.xlu0 %5572
  %5574 = vrot.lane.b32.xlu0 %v5219, 125
  %v5575 = vpop.permute.xlu0 %5574
  %5576 = vrot.lane.b32.xlu0 %v5220, 125
  %v5577 = vpop.permute.xlu0 %5576
  %5578 = vrot.lane.b32.xlu0 %v5221, 125
  %v5579 = vpop.permute.xlu0 %5578
  %5580 = vrot.lane.b32.xlu0 %v5222, 125
  %v5581 = vpop.permute.xlu0 %5580
  %5582 = vrot.lane.b32.xlu0 %v5223, 125
  %v5583 = vpop.permute.xlu0 %5582
  %v5584 = vsel %vm1212, %v5521, %v5523
  %v5585 = vsel %vm1212, %v5523, %v5525
  %v5586 = vsel %vm1212, %v5525, %v5527
  %v5587 = vsel %vm1212, %v5527, %v5529
  %v5588 = vsel %vm1212, %v5529, %v5531
  %v5589 = vsel %vm1212, %v5531, %v5533
  %v5590 = vsel %vm1212, %v5533, %v5535
  %v5591 = vsel %vm1212, %v5535, %v5537
  %v5592 = vsel %vm1212, %v5537, %v5539
  %v5593 = vsel %vm1212, %v5539, %v5541
  %v5594 = vsel %vm1212, %v5541, %v5543
  %v5595 = vsel %vm1212, %v5543, %v5545
  %v5596 = vsel %vm1212, %v5545, %v5547
  %v5597 = vsel %vm1212, %v5547, %v5549
  %v5598 = vsel %vm1212, %v5549, %v5551
  %v5599 = vsel %vm1212, %v5553, %v5555
  %v5600 = vsel %vm1212, %v5555, %v5557
  %v5601 = vsel %vm1212, %v5557, %v5559
  %v5602 = vsel %vm1212, %v5559, %v5561
  %v5603 = vsel %vm1212, %v5561, %v5563
  %v5604 = vsel %vm1212, %v5563, %v5565
  %v5605 = vsel %vm1212, %v5565, %v5567
  %v5606 = vsel %vm1212, %v5567, %v5569
  %v5607 = vsel %vm1212, %v5569, %v5571
  %v5608 = vsel %vm1212, %v5571, %v5573
  %v5609 = vsel %vm1212, %v5573, %v5575
  %v5610 = vsel %vm1212, %v5575, %v5577
  %v5611 = vsel %vm1212, %v5577, %v5579
  %v5612 = vsel %vm1212, %v5579, %v5581
  %v5613 = vsel %vm1212, %v5581, %v5583
  %v5646 = vsel %vm1228, %v5551, %v5521
  %v5650 = vsel %vm1228, %v5583, %v5553
  %5652 = vrot.lane.b32.xlu0 %v5192, 124
  %v5653 = vpop.permute.xlu0 %5652
  %5654 = vrot.lane.b32.xlu0 %v5193, 124
  %v5655 = vpop.permute.xlu0 %5654
  %5656 = vrot.lane.b32.xlu0 %v5194, 124
  %v5657 = vpop.permute.xlu0 %5656
  %5658 = vrot.lane.b32.xlu0 %v5195, 124
  %v5659 = vpop.permute.xlu0 %5658
  %5660 = vrot.lane.b32.xlu0 %v5196, 124
  %v5661 = vpop.permute.xlu0 %5660
  %5662 = vrot.lane.b32.xlu0 %v5197, 124
  %v5663 = vpop.permute.xlu0 %5662
  %5664 = vrot.lane.b32.xlu0 %v5198, 124
  %v5665 = vpop.permute.xlu0 %5664
  %5666 = vrot.lane.b32.xlu0 %v5199, 124
  %v5667 = vpop.permute.xlu0 %5666
  %5668 = vrot.lane.b32.xlu0 %v5200, 124
  %v5669 = vpop.permute.xlu0 %5668
  %5670 = vrot.lane.b32.xlu0 %v5201, 124
  %v5671 = vpop.permute.xlu0 %5670
  %5672 = vrot.lane.b32.xlu0 %v5202, 124
  %v5673 = vpop.permute.xlu0 %5672
  %5674 = vrot.lane.b32.xlu0 %v5203, 124
  %v5675 = vpop.permute.xlu0 %5674
  %5676 = vrot.lane.b32.xlu0 %v5204, 124
  %v5677 = vpop.permute.xlu0 %5676
  %5678 = vrot.lane.b32.xlu0 %v5205, 124
  %v5679 = vpop.permute.xlu0 %5678
  %5680 = vrot.lane.b32.xlu0 %v5206, 124
  %v5681 = vpop.permute.xlu0 %5680
  %5682 = vrot.lane.b32.xlu0 %v5207, 124
  %v5683 = vpop.permute.xlu0 %5682
  %5684 = vrot.lane.b32.xlu0 %v5208, 124
  %v5685 = vpop.permute.xlu0 %5684
  %5686 = vrot.lane.b32.xlu0 %v5209, 124
  %v5687 = vpop.permute.xlu0 %5686
  %5688 = vrot.lane.b32.xlu0 %v5210, 124
  %v5689 = vpop.permute.xlu0 %5688
  %5690 = vrot.lane.b32.xlu0 %v5211, 124
  %v5691 = vpop.permute.xlu0 %5690
  %5692 = vrot.lane.b32.xlu0 %v5212, 124
  %v5693 = vpop.permute.xlu0 %5692
  %5694 = vrot.lane.b32.xlu0 %v5213, 124
  %v5695 = vpop.permute.xlu0 %5694
  %5696 = vrot.lane.b32.xlu0 %v5214, 124
  %v5697 = vpop.permute.xlu0 %5696
  %5698 = vrot.lane.b32.xlu0 %v5215, 124
  %v5699 = vpop.permute.xlu0 %5698
  %5700 = vrot.lane.b32.xlu0 %v5216, 124
  %v5701 = vpop.permute.xlu0 %5700
  %5702 = vrot.lane.b32.xlu0 %v5217, 124
  %v5703 = vpop.permute.xlu0 %5702
  %5704 = vrot.lane.b32.xlu0 %v5218, 124
  %v5705 = vpop.permute.xlu0 %5704
  %5706 = vrot.lane.b32.xlu0 %v5219, 124
  %v5707 = vpop.permute.xlu0 %5706
  %5708 = vrot.lane.b32.xlu0 %v5220, 124
  %v5709 = vpop.permute.xlu0 %5708
  %5710 = vrot.lane.b32.xlu0 %v5221, 124
  %v5711 = vpop.permute.xlu0 %5710
  %5712 = vrot.lane.b32.xlu0 %v5222, 124
  %v5713 = vpop.permute.xlu0 %5712
  %5714 = vrot.lane.b32.xlu0 %v5223, 124
  %v5715 = vpop.permute.xlu0 %5714
  %v5716 = vsel %vm2576, %v5653, %v5655
  %v5717 = vsel %vm2576, %v5655, %v5657
  %v5718 = vsel %vm2576, %v5657, %v5659
  %v5719 = vsel %vm2576, %v5659, %v5661
  %v5720 = vsel %vm2576, %v5661, %v5663
  %v5721 = vsel %vm2576, %v5663, %v5665
  %v5722 = vsel %vm2576, %v5665, %v5667
  %v5723 = vsel %vm2576, %v5667, %v5669
  %v5724 = vsel %vm2576, %v5669, %v5671
  %v5725 = vsel %vm2576, %v5671, %v5673
  %v5726 = vsel %vm2576, %v5673, %v5675
  %v5727 = vsel %vm2576, %v5675, %v5677
  %v5728 = vsel %vm2576, %v5677, %v5679
  %v5729 = vsel %vm2576, %v5679, %v5681
  %v5730 = vsel %vm2576, %v5681, %v5683
  %v5731 = vsel %vm2576, %v5685, %v5687
  %v5732 = vsel %vm2576, %v5687, %v5689
  %v5733 = vsel %vm2576, %v5689, %v5691
  %v5734 = vsel %vm2576, %v5691, %v5693
  %v5735 = vsel %vm2576, %v5693, %v5695
  %v5736 = vsel %vm2576, %v5695, %v5697
  %v5737 = vsel %vm2576, %v5697, %v5699
  %v5738 = vsel %vm2576, %v5699, %v5701
  %v5739 = vsel %vm2576, %v5701, %v5703
  %v5740 = vsel %vm2576, %v5703, %v5705
  %v5741 = vsel %vm2576, %v5705, %v5707
  %v5742 = vsel %vm2576, %v5707, %v5709
  %v5743 = vsel %vm2576, %v5709, %v5711
  %v5744 = vsel %vm2576, %v5711, %v5713
  %v5745 = vsel %vm2576, %v5713, %v5715
  %v5778 = vsel %vm2637, %v5683, %v5653
  %v5782 = vsel %vm2637, %v5715, %v5685
  %5784 = vrot.lane.b32.xlu0 %v5192, 123
  %v5785 = vpop.permute.xlu0 %5784
  %5786 = vrot.lane.b32.xlu0 %v5193, 123
  %v5787 = vpop.permute.xlu0 %5786
  %5788 = vrot.lane.b32.xlu0 %v5194, 123
  %v5789 = vpop.permute.xlu0 %5788
  %5790 = vrot.lane.b32.xlu0 %v5195, 123
  %v5791 = vpop.permute.xlu0 %5790
  %5792 = vrot.lane.b32.xlu0 %v5196, 123
  %v5793 = vpop.permute.xlu0 %5792
  %5794 = vrot.lane.b32.xlu0 %v5197, 123
  %v5795 = vpop.permute.xlu0 %5794
  %5796 = vrot.lane.b32.xlu0 %v5198, 123
  %v5797 = vpop.permute.xlu0 %5796
  %5798 = vrot.lane.b32.xlu0 %v5199, 123
  %v5799 = vpop.permute.xlu0 %5798
  %5800 = vrot.lane.b32.xlu0 %v5200, 123
  %v5801 = vpop.permute.xlu0 %5800
  %5802 = vrot.lane.b32.xlu0 %v5201, 123
  %v5803 = vpop.permute.xlu0 %5802
  %5804 = vrot.lane.b32.xlu0 %v5202, 123
  %v5805 = vpop.permute.xlu0 %5804
  %5806 = vrot.lane.b32.xlu0 %v5203, 123
  %v5807 = vpop.permute.xlu0 %5806
  %5808 = vrot.lane.b32.xlu0 %v5204, 123
  %v5809 = vpop.permute.xlu0 %5808
  %5810 = vrot.lane.b32.xlu0 %v5205, 123
  %v5811 = vpop.permute.xlu0 %5810
  %5812 = vrot.lane.b32.xlu0 %v5206, 123
  %v5813 = vpop.permute.xlu0 %5812
  %5814 = vrot.lane.b32.xlu0 %v5207, 123
  %v5815 = vpop.permute.xlu0 %5814
  %5816 = vrot.lane.b32.xlu0 %v5208, 123
  %v5817 = vpop.permute.xlu0 %5816
  %5818 = vrot.lane.b32.xlu0 %v5209, 123
  %v5819 = vpop.permute.xlu0 %5818
  %5820 = vrot.lane.b32.xlu0 %v5210, 123
  %v5821 = vpop.permute.xlu0 %5820
  %5822 = vrot.lane.b32.xlu0 %v5211, 123
  %v5823 = vpop.permute.xlu0 %5822
  %5824 = vrot.lane.b32.xlu0 %v5212, 123
  %v5825 = vpop.permute.xlu0 %5824
  %5826 = vrot.lane.b32.xlu0 %v5213, 123
  %v5827 = vpop.permute.xlu0 %5826
  %5828 = vrot.lane.b32.xlu0 %v5214, 123
  %v5829 = vpop.permute.xlu0 %5828
  %5830 = vrot.lane.b32.xlu0 %v5215, 123
  %v5831 = vpop.permute.xlu0 %5830
  %5832 = vrot.lane.b32.xlu0 %v5216, 123
  %v5833 = vpop.permute.xlu0 %5832
  %5834 = vrot.lane.b32.xlu0 %v5217, 123
  %v5835 = vpop.permute.xlu0 %5834
  %5836 = vrot.lane.b32.xlu0 %v5218, 123
  %v5837 = vpop.permute.xlu0 %5836
  %5838 = vrot.lane.b32.xlu0 %v5219, 123
  %v5839 = vpop.permute.xlu0 %5838
  %5840 = vrot.lane.b32.xlu0 %v5220, 123
  %v5841 = vpop.permute.xlu0 %5840
  %5842 = vrot.lane.b32.xlu0 %v5221, 123
  %v5843 = vpop.permute.xlu0 %5842
  %5844 = vrot.lane.b32.xlu0 %v5222, 123
  %v5845 = vpop.permute.xlu0 %5844
  %5846 = vrot.lane.b32.xlu0 %v5223, 123
  %v5847 = vpop.permute.xlu0 %5846
  %v5848 = vsel %vm2710, %v5785, %v5787
  %v5849 = vsel %vm2710, %v5787, %v5789
  %v5850 = vsel %vm2710, %v5789, %v5791
  %v5851 = vsel %vm2710, %v5791, %v5793
  %v5852 = vsel %vm2710, %v5793, %v5795
  %v5853 = vsel %vm2710, %v5795, %v5797
  %v5854 = vsel %vm2710, %v5797, %v5799
  %v5855 = vsel %vm2710, %v5799, %v5801
  %v5856 = vsel %vm2710, %v5801, %v5803
  %v5857 = vsel %vm2710, %v5803, %v5805
  %v5858 = vsel %vm2710, %v5805, %v5807
  %v5859 = vsel %vm2710, %v5807, %v5809
  %v5860 = vsel %vm2710, %v5809, %v5811
  %v5861 = vsel %vm2710, %v5811, %v5813
  %v5862 = vsel %vm2710, %v5813, %v5815
  %v5863 = vsel %vm2710, %v5817, %v5819
  %v5864 = vsel %vm2710, %v5819, %v5821
  %v5865 = vsel %vm2710, %v5821, %v5823
  %v5866 = vsel %vm2710, %v5823, %v5825
  %v5867 = vsel %vm2710, %v5825, %v5827
  %v5868 = vsel %vm2710, %v5827, %v5829
  %v5869 = vsel %vm2710, %v5829, %v5831
  %v5870 = vsel %vm2710, %v5831, %v5833
  %v5871 = vsel %vm2710, %v5833, %v5835
  %v5872 = vsel %vm2710, %v5835, %v5837
  %v5873 = vsel %vm2710, %v5837, %v5839
  %v5874 = vsel %vm2710, %v5839, %v5841
  %v5875 = vsel %vm2710, %v5841, %v5843
  %v5876 = vsel %vm2710, %v5843, %v5845
  %v5877 = vsel %vm2710, %v5845, %v5847
  %v5910 = vsel %vm2771, %v5815, %v5785
  %v5914 = vsel %vm2771, %v5847, %v5817
  %5916 = vrot.lane.b32.xlu0 %v5192, 122
  %v5917 = vpop.permute.xlu0 %5916
  %5918 = vrot.lane.b32.xlu0 %v5193, 122
  %v5919 = vpop.permute.xlu0 %5918
  %5920 = vrot.lane.b32.xlu0 %v5194, 122
  %v5921 = vpop.permute.xlu0 %5920
  %5922 = vrot.lane.b32.xlu0 %v5195, 122
  %v5923 = vpop.permute.xlu0 %5922
  %5924 = vrot.lane.b32.xlu0 %v5196, 122
  %v5925 = vpop.permute.xlu0 %5924
  %5926 = vrot.lane.b32.xlu0 %v5197, 122
  %v5927 = vpop.permute.xlu0 %5926
  %5928 = vrot.lane.b32.xlu0 %v5198, 122
  %v5929 = vpop.permute.xlu0 %5928
  %5930 = vrot.lane.b32.xlu0 %v5199, 122
  %v5931 = vpop.permute.xlu0 %5930
  %5932 = vrot.lane.b32.xlu0 %v5200, 122
  %v5933 = vpop.permute.xlu0 %5932
  %5934 = vrot.lane.b32.xlu0 %v5201, 122
  %v5935 = vpop.permute.xlu0 %5934
  %5936 = vrot.lane.b32.xlu0 %v5202, 122
  %v5937 = vpop.permute.xlu0 %5936
  %5938 = vrot.lane.b32.xlu0 %v5203, 122
  %v5939 = vpop.permute.xlu0 %5938
  %5940 = vrot.lane.b32.xlu0 %v5204, 122
  %v5941 = vpop.permute.xlu0 %5940
  %5942 = vrot.lane.b32.xlu0 %v5205, 122
  %v5943 = vpop.permute.xlu0 %5942
  %5944 = vrot.lane.b32.xlu0 %v5206, 122
  %v5945 = vpop.permute.xlu0 %5944
  %5946 = vrot.lane.b32.xlu0 %v5207, 122
  %v5947 = vpop.permute.xlu0 %5946
  %5948 = vrot.lane.b32.xlu0 %v5208, 122
  %v5949 = vpop.permute.xlu0 %5948
  %5950 = vrot.lane.b32.xlu0 %v5209, 122
  %v5951 = vpop.permute.xlu0 %5950
  %5952 = vrot.lane.b32.xlu0 %v5210, 122
  %v5953 = vpop.permute.xlu0 %5952
  %5954 = vrot.lane.b32.xlu0 %v5211, 122
  %v5955 = vpop.permute.xlu0 %5954
  %5956 = vrot.lane.b32.xlu0 %v5212, 122
  %v5957 = vpop.permute.xlu0 %5956
  %5958 = vrot.lane.b32.xlu0 %v5213, 122
  %v5959 = vpop.permute.xlu0 %5958
  %5960 = vrot.lane.b32.xlu0 %v5214, 122
  %v5961 = vpop.permute.xlu0 %5960
  %5962 = vrot.lane.b32.xlu0 %v5215, 122
  %v5963 = vpop.permute.xlu0 %5962
  %5964 = vrot.lane.b32.xlu0 %v5216, 122
  %v5965 = vpop.permute.xlu0 %5964
  %5966 = vrot.lane.b32.xlu0 %v5217, 122
  %v5967 = vpop.permute.xlu0 %5966
  %5968 = vrot.lane.b32.xlu0 %v5218, 122
  %v5969 = vpop.permute.xlu0 %5968
  %5970 = vrot.lane.b32.xlu0 %v5219, 122
  %v5971 = vpop.permute.xlu0 %5970
  %5972 = vrot.lane.b32.xlu0 %v5220, 122
  %v5973 = vpop.permute.xlu0 %5972
  %5974 = vrot.lane.b32.xlu0 %v5221, 122
  %v5975 = vpop.permute.xlu0 %5974
  %5976 = vrot.lane.b32.xlu0 %v5222, 122
  %v5977 = vpop.permute.xlu0 %5976
  %5978 = vrot.lane.b32.xlu0 %v5223, 122
  %v5979 = vpop.permute.xlu0 %5978
  %v5980 = vsel %vm2844, %v5917, %v5919
  %v5981 = vsel %vm2844, %v5919, %v5921
  %v5982 = vsel %vm2844, %v5921, %v5923
  %v5983 = vsel %vm2844, %v5923, %v5925
  %v5984 = vsel %vm2844, %v5925, %v5927
  %v5985 = vsel %vm2844, %v5927, %v5929
  %v5986 = vsel %vm2844, %v5929, %v5931
  %v5987 = vsel %vm2844, %v5931, %v5933
  %v5988 = vsel %vm2844, %v5933, %v5935
  %v5989 = vsel %vm2844, %v5935, %v5937
  %v5990 = vsel %vm2844, %v5937, %v5939
  %v5991 = vsel %vm2844, %v5939, %v5941
  %v5992 = vsel %vm2844, %v5941, %v5943
  %v5993 = vsel %vm2844, %v5943, %v5945
  %v5994 = vsel %vm2844, %v5945, %v5947
  %v5995 = vsel %vm2844, %v5949, %v5951
  %v5996 = vsel %vm2844, %v5951, %v5953
  %v5997 = vsel %vm2844, %v5953, %v5955
  %v5998 = vsel %vm2844, %v5955, %v5957
  %v5999 = vsel %vm2844, %v5957, %v5959
  %v6000 = vsel %vm2844, %v5959, %v5961
  %v6001 = vsel %vm2844, %v5961, %v5963
  %v6002 = vsel %vm2844, %v5963, %v5965
  %v6003 = vsel %vm2844, %v5965, %v5967
  %v6004 = vsel %vm2844, %v5967, %v5969
  %v6005 = vsel %vm2844, %v5969, %v5971
  %v6006 = vsel %vm2844, %v5971, %v5973
  %v6007 = vsel %vm2844, %v5973, %v5975
  %v6008 = vsel %vm2844, %v5975, %v5977
  %v6009 = vsel %vm2844, %v5977, %v5979
  %v6042 = vsel %vm2905, %v5947, %v5917
  %v6046 = vsel %vm2905, %v5979, %v5949
  %6048 = vrot.lane.b32.xlu0 %v5192, 121
  %v6049 = vpop.permute.xlu0 %6048
  %6050 = vrot.lane.b32.xlu0 %v5193, 121
  %v6051 = vpop.permute.xlu0 %6050
  %6052 = vrot.lane.b32.xlu0 %v5194, 121
  %v6053 = vpop.permute.xlu0 %6052
  %6054 = vrot.lane.b32.xlu0 %v5195, 121
  %v6055 = vpop.permute.xlu0 %6054
  %6056 = vrot.lane.b32.xlu0 %v5196, 121
  %v6057 = vpop.permute.xlu0 %6056
  %6058 = vrot.lane.b32.xlu0 %v5197, 121
  %v6059 = vpop.permute.xlu0 %6058
  %6060 = vrot.lane.b32.xlu0 %v5198, 121
  %v6061 = vpop.permute.xlu0 %6060
  %6062 = vrot.lane.b32.xlu0 %v5199, 121
  %v6063 = vpop.permute.xlu0 %6062
  %6064 = vrot.lane.b32.xlu0 %v5200, 121
  %v6065 = vpop.permute.xlu0 %6064
  %6066 = vrot.lane.b32.xlu0 %v5201, 121
  %v6067 = vpop.permute.xlu0 %6066
  %6068 = vrot.lane.b32.xlu0 %v5202, 121
  %v6069 = vpop.permute.xlu0 %6068
  %6070 = vrot.lane.b32.xlu0 %v5203, 121
  %v6071 = vpop.permute.xlu0 %6070
  %6072 = vrot.lane.b32.xlu0 %v5204, 121
  %v6073 = vpop.permute.xlu0 %6072
  %6074 = vrot.lane.b32.xlu0 %v5205, 121
  %v6075 = vpop.permute.xlu0 %6074
  %6076 = vrot.lane.b32.xlu0 %v5206, 121
  %v6077 = vpop.permute.xlu0 %6076
  %6078 = vrot.lane.b32.xlu0 %v5207, 121
  %v6079 = vpop.permute.xlu0 %6078
  %6080 = vrot.lane.b32.xlu0 %v5208, 121
  %v6081 = vpop.permute.xlu0 %6080
  %6082 = vrot.lane.b32.xlu0 %v5209, 121
  %v6083 = vpop.permute.xlu0 %6082
  %6084 = vrot.lane.b32.xlu0 %v5210, 121
  %v6085 = vpop.permute.xlu0 %6084
  %6086 = vrot.lane.b32.xlu0 %v5211, 121
  %v6087 = vpop.permute.xlu0 %6086
  %6088 = vrot.lane.b32.xlu0 %v5212, 121
  %v6089 = vpop.permute.xlu0 %6088
  %6090 = vrot.lane.b32.xlu0 %v5213, 121
  %v6091 = vpop.permute.xlu0 %6090
  %6092 = vrot.lane.b32.xlu0 %v5214, 121
  %v6093 = vpop.permute.xlu0 %6092
  %6094 = vrot.lane.b32.xlu0 %v5215, 121
  %v6095 = vpop.permute.xlu0 %6094
  %6096 = vrot.lane.b32.xlu0 %v5216, 121
  %v6097 = vpop.permute.xlu0 %6096
  %6098 = vrot.lane.b32.xlu0 %v5217, 121
  %v6099 = vpop.permute.xlu0 %6098
  %6100 = vrot.lane.b32.xlu0 %v5218, 121
  %v6101 = vpop.permute.xlu0 %6100
  %6102 = vrot.lane.b32.xlu0 %v5219, 121
  %v6103 = vpop.permute.xlu0 %6102
  %6104 = vrot.lane.b32.xlu0 %v5220, 121
  %v6105 = vpop.permute.xlu0 %6104
  %6106 = vrot.lane.b32.xlu0 %v5221, 121
  %v6107 = vpop.permute.xlu0 %6106
  %6108 = vrot.lane.b32.xlu0 %v5222, 121
  %v6109 = vpop.permute.xlu0 %6108
  %6110 = vrot.lane.b32.xlu0 %v5223, 121
  %v6111 = vpop.permute.xlu0 %6110
  %v6112 = vsel %vm2978, %v6049, %v6051
  %v6113 = vsel %vm2978, %v6051, %v6053
  %v6114 = vsel %vm2978, %v6053, %v6055
  %v6115 = vsel %vm2978, %v6055, %v6057
  %v6116 = vsel %vm2978, %v6057, %v6059
  %v6117 = vsel %vm2978, %v6059, %v6061
  %v6118 = vsel %vm2978, %v6061, %v6063
  %v6119 = vsel %vm2978, %v6063, %v6065
  %v6120 = vsel %vm2978, %v6065, %v6067
  %v6121 = vsel %vm2978, %v6067, %v6069
  %v6122 = vsel %vm2978, %v6069, %v6071
  %v6123 = vsel %vm2978, %v6071, %v6073
  %v6124 = vsel %vm2978, %v6073, %v6075
  %v6125 = vsel %vm2978, %v6075, %v6077
  %v6126 = vsel %vm2978, %v6077, %v6079
  %v6127 = vsel %vm2978, %v6081, %v6083
  %v6128 = vsel %vm2978, %v6083, %v6085
  %v6129 = vsel %vm2978, %v6085, %v6087
  %v6130 = vsel %vm2978, %v6087, %v6089
  %v6131 = vsel %vm2978, %v6089, %v6091
  %v6132 = vsel %vm2978, %v6091, %v6093
  %v6133 = vsel %vm2978, %v6093, %v6095
  %v6134 = vsel %vm2978, %v6095, %v6097
  %v6135 = vsel %vm2978, %v6097, %v6099
  %v6136 = vsel %vm2978, %v6099, %v6101
  %v6137 = vsel %vm2978, %v6101, %v6103
  %v6138 = vsel %vm2978, %v6103, %v6105
  %v6139 = vsel %vm2978, %v6105, %v6107
  %v6140 = vsel %vm2978, %v6107, %v6109
  %v6141 = vsel %vm2978, %v6109, %v6111
  %v6174 = vsel %vm3039, %v6079, %v6049
  %v6178 = vsel %vm3039, %v6111, %v6081
  %v6180 = vld [vmem:[%s7] sm:$0xff]
  %v6181 = vld [vmem:[%s7 + $0x8] sm:$0xff]
  %v6184 = vunpack.c.l.b16 %v6180
  %v6185 = vunpack.c.h.b16 %v6180
  %v6186 = vunpack.c.l.b16 %v6181
  %v6187 = vunpack.c.h.b16 %v6181
  %v6188 = vpack.c.b16 %v6186, %v6184
  %v6189 = vpack.c.b16 %v6187, %v6185
  %6192 = vmatprep.subr.bf16.mxu0 %v5600
  %6193 = vmatpush1.bf16.msra.mxu0 %v5599
  %6194 = vmatprep.subr.bf16.mxu0 %v5585
  %6195 = vmatpush1.bf16.msra.mxu0 %v5584
  %6196 = vmatprep.subr.bf16.mxu0 %v5468
  %6197 = vmatpush1.bf16.msra.mxu0 %v5467
  %6198 = vmatprep.subr.bf16.mxu0 %v5453
  %6199 = vmatpush1.bf16.msra.mxu0 %v5452
  %6200 = vmatprep.subr.bf16.mxu0 %v5336
  %6201 = vmatpush1.bf16.msra.mxu0 %v5335
  %6202 = vmatprep.subr.bf16.mxu0 %v5321
  %6203 = vmatpush1.bf16.msra.mxu0 %v5320
  %6204 = vmatprep.subr.bf16.mxu0 %v5209
  %6205 = vmatpush1.bf16.msra.mxu0 %v5208
  %6206 = vmatprep.subr.bf16.mxu0 %v5193
  %6207 = vmatpush1.bf16.msra.mxu0 %v5192
  %6208 = vmatprep.subr.bf16.mxu0 %v6128
  %6209 = vmatpush2.bf16.msra.mxu0 %v6127
  %6210 = vmatprep.subr.bf16.mxu0 %v6113
  %6211 = vmatpush2.bf16.msra.mxu0 %v6112
  %6212 = vmatprep.subr.bf16.mxu0 %v5996
  %6213 = vmatpush2.bf16.msra.mxu0 %v5995
  %6214 = vmatprep.subr.bf16.mxu0 %v5981
  %6215 = vmatpush2.bf16.msra.mxu0 %v5980
  %6216 = vmatprep.subr.bf16.mxu0 %v5864
  %6217 = vmatpush2.bf16.msra.mxu0 %v5863
  %6218 = vmatprep.subr.bf16.mxu0 %v5849
  %6219 = vmatpush2.bf16.msra.mxu0 %v5848
  %6220 = vmatprep.subr.bf16.mxu0 %v5732
  %6221 = vmatpush2.bf16.msra.mxu0 %v5731
  %6222 = vmatprep.subr.bf16.mxu0 %v5717
  %6223 = vmatpush2.bf16.msra.mxu0 %v5716
  %6224 = vmatprep.mubr.bf16.mxu0 %v6189
  %6225 = vmatmul.mubr.bf16.gmra.mxu0 %v6188
  %v6226 = vpop.f32.mrf.mxu0
  %v6227 = vadd.f32 0.0, %v6226
  %v6228 = vpop.f32.mrf.mxu0
  %v6229 = vadd.f32 0.0, %v6228
  %v6230 = vpop.f32.mrf.mxu0
  %v6231 = vadd.f32 0.0, %v6230
  %v6232 = vpop.f32.mrf.mxu0
  %v6233 = vadd.f32 0.0, %v6232
  %6234 = vdwg.mxu0
  %6235 = vmatprep.subr.bf16.mxu0 %v5602
  %6236 = vmatpush1.bf16.msra.mxu0 %v5601
  %6237 = vmatprep.subr.bf16.mxu0 %v5587
  %6238 = vmatpush1.bf16.msra.mxu0 %v5586
  %6239 = vmatprep.subr.bf16.mxu0 %v5470
  %6240 = vmatpush1.bf16.msra.mxu0 %v5469
  %6241 = vmatprep.subr.bf16.mxu0 %v5455
  %6242 = vmatpush1.bf16.msra.mxu0 %v5454
  %6243 = vmatprep.subr.bf16.mxu0 %v5338
  %6244 = vmatpush1.bf16.msra.mxu0 %v5337
  %6245 = vmatprep.subr.bf16.mxu0 %v5323
  %6246 = vmatpush1.bf16.msra.mxu0 %v5322
  %6247 = vmatprep.subr.bf16.mxu0 %v5211
  %6248 = vmatpush1.bf16.msra.mxu0 %v5210
  %6249 = vmatprep.subr.bf16.mxu0 %v5195
  %6250 = vmatpush1.bf16.msra.mxu0 %v5194
  %6251 = vmatprep.subr.bf16.mxu0 %v6130
  %6252 = vmatpush2.bf16.msra.mxu0 %v6129
  %6253 = vmatprep.subr.bf16.mxu0 %v6115
  %6254 = vmatpush2.bf16.msra.mxu0 %v6114
  %6255 = vmatprep.subr.bf16.mxu0 %v5998
  %6256 = vmatpush2.bf16.msra.mxu0 %v5997
  %6257 = vmatprep.subr.bf16.mxu0 %v5983
  %6258 = vmatpush2.bf16.msra.mxu0 %v5982
  %6259 = vmatprep.subr.bf16.mxu0 %v5866
  %6260 = vmatpush2.bf16.msra.mxu0 %v5865
  %6261 = vmatprep.subr.bf16.mxu0 %v5851
  %6262 = vmatpush2.bf16.msra.mxu0 %v5850
  %6263 = vmatprep.subr.bf16.mxu0 %v5734
  %6264 = vmatpush2.bf16.msra.mxu0 %v5733
  %6265 = vmatprep.subr.bf16.mxu0 %v5719
  %6266 = vmatpush2.bf16.msra.mxu0 %v5718
  %6267 = vmatprep.mubr.bf16.mxu0 %v6189
  %6268 = vmatmul.mubr.bf16.gmra.mxu0 %v6188
  %v6269 = vpop.f32.mrf.mxu0
  %v6270 = vadd.f32 0.0, %v6269
  %v6271 = vpop.f32.mrf.mxu0
  %v6272 = vadd.f32 0.0, %v6271
  %v6273 = vpop.f32.mrf.mxu0
  %v6274 = vadd.f32 0.0, %v6273
  %v6275 = vpop.f32.mrf.mxu0
  %v6276 = vadd.f32 0.0, %v6275
  %6277 = vdwg.mxu0
  %6278 = vmatprep.subr.bf16.mxu0 %v5604
  %6279 = vmatpush1.bf16.msra.mxu0 %v5603
  %6280 = vmatprep.subr.bf16.mxu0 %v5589
  %6281 = vmatpush1.bf16.msra.mxu0 %v5588
  %6282 = vmatprep.subr.bf16.mxu0 %v5472
  %6283 = vmatpush1.bf16.msra.mxu0 %v5471
  %6284 = vmatprep.subr.bf16.mxu0 %v5457
  %6285 = vmatpush1.bf16.msra.mxu0 %v5456
  %6286 = vmatprep.subr.bf16.mxu0 %v5340
  %6287 = vmatpush1.bf16.msra.mxu0 %v5339
  %6288 = vmatprep.subr.bf16.mxu0 %v5325
  %6289 = vmatpush1.bf16.msra.mxu0 %v5324
  %6290 = vmatprep.subr.bf16.mxu0 %v5213
  %6291 = vmatpush1.bf16.msra.mxu0 %v5212
  %6292 = vmatprep.subr.bf16.mxu0 %v5197
  %6293 = vmatpush1.bf16.msra.mxu0 %v5196
  %6294 = vmatprep.subr.bf16.mxu0 %v6132
  %6295 = vmatpush2.bf16.msra.mxu0 %v6131
  %6296 = vmatprep.subr.bf16.mxu0 %v6117
  %6297 = vmatpush2.bf16.msra.mxu0 %v6116
  %6298 = vmatprep.subr.bf16.mxu0 %v6000
  %6299 = vmatpush2.bf16.msra.mxu0 %v5999
  %6300 = vmatprep.subr.bf16.mxu0 %v5985
  %6301 = vmatpush2.bf16.msra.mxu0 %v5984
  %6302 = vmatprep.subr.bf16.mxu0 %v5868
  %6303 = vmatpush2.bf16.msra.mxu0 %v5867
  %6304 = vmatprep.subr.bf16.mxu0 %v5853
  %6305 = vmatpush2.bf16.msra.mxu0 %v5852
  %6306 = vmatprep.subr.bf16.mxu0 %v5736
  %6307 = vmatpush2.bf16.msra.mxu0 %v5735
  %6308 = vmatprep.subr.bf16.mxu0 %v5721
  %6309 = vmatpush2.bf16.msra.mxu0 %v5720
  %6310 = vmatprep.mubr.bf16.mxu0 %v6189
  %6311 = vmatmul.mubr.bf16.gmra.mxu0 %v6188
  %v6312 = vpop.f32.mrf.mxu0
  %v6313 = vadd.f32 0.0, %v6312
  %v6314 = vpop.f32.mrf.mxu0
  %v6315 = vadd.f32 0.0, %v6314
  %v6316 = vpop.f32.mrf.mxu0
  %v6317 = vadd.f32 0.0, %v6316
  %v6318 = vpop.f32.mrf.mxu0
  %v6319 = vadd.f32 0.0, %v6318
  %6320 = vdwg.mxu0
  %6321 = vmatprep.subr.bf16.mxu0 %v5606
  %6322 = vmatpush1.bf16.msra.mxu0 %v5605
  %6323 = vmatprep.subr.bf16.mxu0 %v5591
  %6324 = vmatpush1.bf16.msra.mxu0 %v5590
  %6325 = vmatprep.subr.bf16.mxu0 %v5474
  %6326 = vmatpush1.bf16.msra.mxu0 %v5473
  %6327 = vmatprep.subr.bf16.mxu0 %v5459
  %6328 = vmatpush1.bf16.msra.mxu0 %v5458
  %6329 = vmatprep.subr.bf16.mxu0 %v5342
  %6330 = vmatpush1.bf16.msra.mxu0 %v5341
  %6331 = vmatprep.subr.bf16.mxu0 %v5327
  %6332 = vmatpush1.bf16.msra.mxu0 %v5326
  %6333 = vmatprep.subr.bf16.mxu0 %v5215
  %6334 = vmatpush1.bf16.msra.mxu0 %v5214
  %6335 = vmatprep.subr.bf16.mxu0 %v5199
  %6336 = vmatpush1.bf16.msra.mxu0 %v5198
  %6337 = vmatprep.subr.bf16.mxu0 %v6134
  %6338 = vmatpush2.bf16.msra.mxu0 %v6133
  %6339 = vmatprep.subr.bf16.mxu0 %v6119
  %6340 = vmatpush2.bf16.msra.mxu0 %v6118
  %6341 = vmatprep.subr.bf16.mxu0 %v6002
  %6342 = vmatpush2.bf16.msra.mxu0 %v6001
  %6343 = vmatprep.subr.bf16.mxu0 %v5987
  %6344 = vmatpush2.bf16.msra.mxu0 %v5986
  %6345 = vmatprep.subr.bf16.mxu0 %v5870
  %6346 = vmatpush2.bf16.msra.mxu0 %v5869
  %6347 = vmatprep.subr.bf16.mxu0 %v5855
  %6348 = vmatpush2.bf16.msra.mxu0 %v5854
  %6349 = vmatprep.subr.bf16.mxu0 %v5738
  %6350 = vmatpush2.bf16.msra.mxu0 %v5737
  %6351 = vmatprep.subr.bf16.mxu0 %v5723
  %6352 = vmatpush2.bf16.msra.mxu0 %v5722
  %6353 = vmatprep.mubr.bf16.mxu0 %v6189
  %6354 = vmatmul.mubr.bf16.gmra.mxu0 %v6188
  %v6355 = vpop.f32.mrf.mxu0
  %v6356 = vadd.f32 0.0, %v6355
  %v6357 = vpop.f32.mrf.mxu0
  %v6358 = vadd.f32 0.0, %v6357
  %v6359 = vpop.f32.mrf.mxu0
  %v6360 = vadd.f32 0.0, %v6359
  %v6361 = vpop.f32.mrf.mxu0
  %v6362 = vadd.f32 0.0, %v6361
  %6363 = vdwg.mxu0
  %6364 = vmatprep.subr.bf16.mxu0 %v5608
  %6365 = vmatpush1.bf16.msra.mxu0 %v5607
  %6366 = vmatprep.subr.bf16.mxu0 %v5593
  %6367 = vmatpush1.bf16.msra.mxu0 %v5592
  %6368 = vmatprep.subr.bf16.mxu0 %v5476
  %6369 = vmatpush1.bf16.msra.mxu0 %v5475
  %6370 = vmatprep.subr.bf16.mxu0 %v5461
  %6371 = vmatpush1.bf16.msra.mxu0 %v5460
  %6372 = vmatprep.subr.bf16.mxu0 %v5344
  %6373 = vmatpush1.bf16.msra.mxu0 %v5343
  %6374 = vmatprep.subr.bf16.mxu0 %v5329
  %6375 = vmatpush1.bf16.msra.mxu0 %v5328
  %6376 = vmatprep.subr.bf16.mxu0 %v5217
  %6377 = vmatpush1.bf16.msra.mxu0 %v5216
  %6378 = vmatprep.subr.bf16.mxu0 %v5201
  %6379 = vmatpush1.bf16.msra.mxu0 %v5200
  %6380 = vmatprep.subr.bf16.mxu0 %v6136
  %6381 = vmatpush2.bf16.msra.mxu0 %v6135
  %6382 = vmatprep.subr.bf16.mxu0 %v6121
  %6383 = vmatpush2.bf16.msra.mxu0 %v6120
  %6384 = vmatprep.subr.bf16.mxu0 %v6004
  %6385 = vmatpush2.bf16.msra.mxu0 %v6003
  %6386 = vmatprep.subr.bf16.mxu0 %v5989
  %6387 = vmatpush2.bf16.msra.mxu0 %v5988
  %6388 = vmatprep.subr.bf16.mxu0 %v5872
  %6389 = vmatpush2.bf16.msra.mxu0 %v5871
  %6390 = vmatprep.subr.bf16.mxu0 %v5857
  %6391 = vmatpush2.bf16.msra.mxu0 %v5856
  %6392 = vmatprep.subr.bf16.mxu0 %v5740
  %6393 = vmatpush2.bf16.msra.mxu0 %v5739
  %6394 = vmatprep.subr.bf16.mxu0 %v5725
  %6395 = vmatpush2.bf16.msra.mxu0 %v5724
  %6396 = vmatprep.mubr.bf16.mxu0 %v6189
  %6397 = vmatmul.mubr.bf16.gmra.mxu0 %v6188
  %v6398 = vpop.f32.mrf.mxu0
  %v6399 = vadd.f32 0.0, %v6398
  %v6400 = vpop.f32.mrf.mxu0
  %v6401 = vadd.f32 0.0, %v6400
  %v6402 = vpop.f32.mrf.mxu0
  %v6403 = vadd.f32 0.0, %v6402
  %v6404 = vpop.f32.mrf.mxu0
  %v6405 = vadd.f32 0.0, %v6404
  %6406 = vdwg.mxu0
  %6407 = vmatprep.subr.bf16.mxu0 %v5610
  %6408 = vmatpush1.bf16.msra.mxu0 %v5609
  %6409 = vmatprep.subr.bf16.mxu0 %v5595
  %6410 = vmatpush1.bf16.msra.mxu0 %v5594
  %6411 = vmatprep.subr.bf16.mxu0 %v5478
  %6412 = vmatpush1.bf16.msra.mxu0 %v5477
  %6413 = vmatprep.subr.bf16.mxu0 %v5463
  %6414 = vmatpush1.bf16.msra.mxu0 %v5462
  %6415 = vmatprep.subr.bf16.mxu0 %v5346
  %6416 = vmatpush1.bf16.msra.mxu0 %v5345
  %6417 = vmatprep.subr.bf16.mxu0 %v5331
  %6418 = vmatpush1.bf16.msra.mxu0 %v5330
  %6419 = vmatprep.subr.bf16.mxu0 %v5219
  %6420 = vmatpush1.bf16.msra.mxu0 %v5218
  %6421 = vmatprep.subr.bf16.mxu0 %v5203
  %6422 = vmatpush1.bf16.msra.mxu0 %v5202
  %6423 = vmatprep.subr.bf16.mxu0 %v6138
  %6424 = vmatpush2.bf16.msra.mxu0 %v6137
  %6425 = vmatprep.subr.bf16.mxu0 %v6123
  %6426 = vmatpush2.bf16.msra.mxu0 %v6122
  %6427 = vmatprep.subr.bf16.mxu0 %v6006
  %6428 = vmatpush2.bf16.msra.mxu0 %v6005
  %6429 = vmatprep.subr.bf16.mxu0 %v5991
  %6430 = vmatpush2.bf16.msra.mxu0 %v5990
  %6431 = vmatprep.subr.bf16.mxu0 %v5874
  %6432 = vmatpush2.bf16.msra.mxu0 %v5873
  %6433 = vmatprep.subr.bf16.mxu0 %v5859
  %6434 = vmatpush2.bf16.msra.mxu0 %v5858
  %6435 = vmatprep.subr.bf16.mxu0 %v5742
  %6436 = vmatpush2.bf16.msra.mxu0 %v5741
  %6437 = vmatprep.subr.bf16.mxu0 %v5727
  %6438 = vmatpush2.bf16.msra.mxu0 %v5726
  %6439 = vmatprep.mubr.bf16.mxu0 %v6189
  %6440 = vmatmul.mubr.bf16.gmra.mxu0 %v6188
  %v6441 = vpop.f32.mrf.mxu0
  %v6442 = vadd.f32 0.0, %v6441
  %v6443 = vpop.f32.mrf.mxu0
  %v6444 = vadd.f32 0.0, %v6443
  %v6445 = vpop.f32.mrf.mxu0
  %v6446 = vadd.f32 0.0, %v6445
  %v6447 = vpop.f32.mrf.mxu0
  %v6448 = vadd.f32 0.0, %v6447
  %6449 = vdwg.mxu0
  %6450 = vmatprep.subr.bf16.mxu0 %v5612
  %6451 = vmatpush1.bf16.msra.mxu0 %v5611
  %6452 = vmatprep.subr.bf16.mxu0 %v5597
  %6453 = vmatpush1.bf16.msra.mxu0 %v5596
  %6454 = vmatprep.subr.bf16.mxu0 %v5480
  %6455 = vmatpush1.bf16.msra.mxu0 %v5479
  %6456 = vmatprep.subr.bf16.mxu0 %v5465
  %6457 = vmatpush1.bf16.msra.mxu0 %v5464
  %6458 = vmatprep.subr.bf16.mxu0 %v5348
  %6459 = vmatpush1.bf16.msra.mxu0 %v5347
  %6460 = vmatprep.subr.bf16.mxu0 %v5333
  %6461 = vmatpush1.bf16.msra.mxu0 %v5332
  %6462 = vmatprep.subr.bf16.mxu0 %v5221
  %6463 = vmatpush1.bf16.msra.mxu0 %v5220
  %6464 = vmatprep.subr.bf16.mxu0 %v5205
  %6465 = vmatpush1.bf16.msra.mxu0 %v5204
  %6466 = vmatprep.subr.bf16.mxu0 %v6140
  %6467 = vmatpush2.bf16.msra.mxu0 %v6139
  %6468 = vmatprep.subr.bf16.mxu0 %v6125
  %6469 = vmatpush2.bf16.msra.mxu0 %v6124
  %6470 = vmatprep.subr.bf16.mxu0 %v6008
  %6471 = vmatpush2.bf16.msra.mxu0 %v6007
  %6472 = vmatprep.subr.bf16.mxu0 %v5993
  %6473 = vmatpush2.bf16.msra.mxu0 %v5992
  %6474 = vmatprep.subr.bf16.mxu0 %v5876
  %6475 = vmatpush2.bf16.msra.mxu0 %v5875
  %6476 = vmatprep.subr.bf16.mxu0 %v5861
  %6477 = vmatpush2.bf16.msra.mxu0 %v5860
  %6478 = vmatprep.subr.bf16.mxu0 %v5744
  %6479 = vmatpush2.bf16.msra.mxu0 %v5743
  %6480 = vmatprep.subr.bf16.mxu0 %v5729
  %6481 = vmatpush2.bf16.msra.mxu0 %v5728
  %6482 = vmatprep.mubr.bf16.mxu0 %v6189
  %6483 = vmatmul.mubr.bf16.gmra.mxu0 %v6188
  %v6484 = vpop.f32.mrf.mxu0
  %v6485 = vadd.f32 0.0, %v6484
  %v6486 = vpop.f32.mrf.mxu0
  %v6487 = vadd.f32 0.0, %v6486
  %v6488 = vpop.f32.mrf.mxu0
  %v6489 = vadd.f32 0.0, %v6488
  %v6490 = vpop.f32.mrf.mxu0
  %v6491 = vadd.f32 0.0, %v6490
  %6492 = vdwg.mxu0
  %6493 = vmatprep.subr.bf16.mxu0 %v5650
  %6494 = vmatpush1.bf16.msra.mxu0 %v5613
  %6495 = vmatprep.subr.bf16.mxu0 %v5646
  %6496 = vmatpush1.bf16.msra.mxu0 %v5598
  %6497 = vmatprep.subr.bf16.mxu0 %v5518
  %6498 = vmatpush1.bf16.msra.mxu0 %v5481
  %6499 = vmatprep.subr.bf16.mxu0 %v5514
  %6500 = vmatpush1.bf16.msra.mxu0 %v5466
  %6501 = vmatprep.subr.bf16.mxu0 %v5386
  %6502 = vmatpush1.bf16.msra.mxu0 %v5349
  %6503 = vmatprep.subr.bf16.mxu0 %v5382
  %6504 = vmatpush1.bf16.msra.mxu0 %v5334
  %6505 = vmatprep.subr.bf16.mxu0 %v5223
  %6506 = vmatpush1.bf16.msra.mxu0 %v5222
  %6507 = vmatprep.subr.bf16.mxu0 %v5207
  %6508 = vmatpush1.bf16.msra.mxu0 %v5206
  %6509 = vmatprep.subr.bf16.mxu0 %v6178
  %6510 = vmatpush2.bf16.msra.mxu0 %v6141
  %6511 = vmatprep.subr.bf16.mxu0 %v6174
  %6512 = vmatpush2.bf16.msra.mxu0 %v6126
  %6513 = vmatprep.subr.bf16.mxu0 %v6046
  %6514 = vmatpush2.bf16.msra.mxu0 %v6009
  %6515 = vmatprep.subr.bf16.mxu0 %v6042
  %6516 = vmatpush2.bf16.msra.mxu0 %v5994
  %6517 = vmatprep.subr.bf16.mxu0 %v5914
  %6518 = vmatpush2.bf16.msra.mxu0 %v5877
  %6519 = vmatprep.subr.bf16.mxu0 %v5910
  %6520 = vmatpush2.bf16.msra.mxu0 %v5862
  %6521 = vmatprep.subr.bf16.mxu0 %v5782
  %6522 = vmatpush2.bf16.msra.mxu0 %v5745
  %6523 = vmatprep.subr.bf16.mxu0 %v5778
  %6524 = vmatpush2.bf16.msra.mxu0 %v5730
  %6525 = vmatprep.mubr.bf16.mxu0 %v6189
  %6526 = vmatmul.mubr.bf16.gmra.mxu0 %v6188
  %v6527 = vpop.f32.mrf.mxu0
  %v6528 = vadd.f32 0.0, %v6527
  %v6529 = vpop.f32.mrf.mxu0
  %v6530 = vadd.f32 0.0, %v6529
  %v6531 = vpop.f32.mrf.mxu0
  %v6532 = vadd.f32 0.0, %v6531
  %v6533 = vpop.f32.mrf.mxu0
  %v6534 = vadd.f32 0.0, %v6533
  %6535 = vdwg.mxu0
  %v6536 = vld [vmem:[%s8] sm:$0xff]
  %v6537 = vld [vmem:[%s8 + $0x8] sm:$0xff]
  %6539 = vset.pattern.permute.xlu0 0
  %6540 = vperm.xlu0 %6539, %v6536
  %v6541 = vpop.permute.xlu0 %6540
  %6544 = vset.pattern.permute.xlu0 0
  %6545 = vperm.xlu0 %6544, %v6537
  %v6546 = vpop.permute.xlu0 %6545
  %v6548 = vmul.f32 %v6227, %v6541
  %v6549 = vmul.f32 %v6229, %v6541
  %v6550 = vmul.f32 %v6270, %v6541
  %v6551 = vmul.f32 %v6272, %v6541
  %v6552 = vmul.f32 %v6313, %v6541
  %v6553 = vmul.f32 %v6315, %v6541
  %v6554 = vmul.f32 %v6356, %v6541
  %v6555 = vmul.f32 %v6358, %v6541
  %v6556 = vmul.f32 %v6399, %v6541
  %v6557 = vmul.f32 %v6401, %v6541
  %v6558 = vmul.f32 %v6442, %v6541
  %v6559 = vmul.f32 %v6444, %v6541
  %v6560 = vmul.f32 %v6485, %v6541
  %v6561 = vmul.f32 %v6487, %v6541
  %v6562 = vmul.f32 %v6528, %v6541
  %v6563 = vmul.f32 %v6530, %v6541
  %v6564 = vmul.f32 %v6231, %v6546
  %v6565 = vmul.f32 %v6233, %v6546
  %v6566 = vmul.f32 %v6274, %v6546
  %v6567 = vmul.f32 %v6276, %v6546
  %v6568 = vmul.f32 %v6317, %v6546
  %v6569 = vmul.f32 %v6319, %v6546
  %v6570 = vmul.f32 %v6360, %v6546
  %v6571 = vmul.f32 %v6362, %v6546
  %v6572 = vmul.f32 %v6403, %v6546
  %v6573 = vmul.f32 %v6405, %v6546
  %v6574 = vmul.f32 %v6446, %v6546
  %v6575 = vmul.f32 %v6448, %v6546
  %v6576 = vmul.f32 %v6489, %v6546
  %v6577 = vmul.f32 %v6491, %v6546
  %v6578 = vmul.f32 %v6532, %v6546
  %v6579 = vmul.f32 %v6534, %v6546
  %v6580 = vld [vmem:[%s9] sm:$0xff]
  %v6581 = vld [vmem:[%s9 + $0x8] sm:$0xff]
  %6583 = vset.pattern.permute.xlu0 0
  %6584 = vperm.xlu0 %6583, %v6580
  %v6585 = vpop.permute.xlu0 %6584
  %6588 = vset.pattern.permute.xlu0 0
  %6589 = vperm.xlu0 %6588, %v6581
  %v6590 = vpop.permute.xlu0 %6589
  %v6592 = vadd.f32 %v6548, %v6585
  %v6593 = vadd.f32 %v6549, %v6585
  %v6594 = vadd.f32 %v6550, %v6585
  %v6595 = vadd.f32 %v6551, %v6585
  %v6596 = vadd.f32 %v6552, %v6585
  %v6597 = vadd.f32 %v6553, %v6585
  %v6598 = vadd.f32 %v6554, %v6585
  %v6599 = vadd.f32 %v6555, %v6585
  %v6600 = vadd.f32 %v6556, %v6585
  %v6601 = vadd.f32 %v6557, %v6585
  %v6602 = vadd.f32 %v6558, %v6585
  %v6603 = vadd.f32 %v6559, %v6585
  %v6604 = vadd.f32 %v6560, %v6585
  %v6605 = vadd.f32 %v6561, %v6585
  %v6606 = vadd.f32 %v6562, %v6585
  %v6607 = vadd.f32 %v6563, %v6585
  %v6608 = vadd.f32 %v6564, %v6590
  %v6609 = vadd.f32 %v6565, %v6590
  %v6610 = vadd.f32 %v6566, %v6590
  %v6611 = vadd.f32 %v6567, %v6590
  %v6612 = vadd.f32 %v6568, %v6590
  %v6613 = vadd.f32 %v6569, %v6590
  %v6614 = vadd.f32 %v6570, %v6590
  %v6615 = vadd.f32 %v6571, %v6590
  %v6616 = vadd.f32 %v6572, %v6590
  %v6617 = vadd.f32 %v6573, %v6590
  %v6618 = vadd.f32 %v6574, %v6590
  %v6619 = vadd.f32 %v6575, %v6590
  %v6620 = vadd.f32 %v6576, %v6590
  %v6621 = vadd.f32 %v6577, %v6590
  %v6622 = vadd.f32 %v6578, %v6590
  %v6623 = vadd.f32 %v6579, %v6590
  %6656 = vrot.lane.b32.xlu0 %v6592, 127
  %v6657 = vpop.permute.xlu0 %6656
  %6658 = vrot.lane.b32.xlu0 %v6593, 127
  %v6659 = vpop.permute.xlu0 %6658
  %6660 = vrot.lane.b32.xlu0 %v6594, 127
  %v6661 = vpop.permute.xlu0 %6660
  %6662 = vrot.lane.b32.xlu0 %v6595, 127
  %v6663 = vpop.permute.xlu0 %6662
  %6664 = vrot.lane.b32.xlu0 %v6596, 127
  %v6665 = vpop.permute.xlu0 %6664
  %6666 = vrot.lane.b32.xlu0 %v6597, 127
  %v6667 = vpop.permute.xlu0 %6666
  %6668 = vrot.lane.b32.xlu0 %v6598, 127
  %v6669 = vpop.permute.xlu0 %6668
  %6670 = vrot.lane.b32.xlu0 %v6599, 127
  %v6671 = vpop.permute.xlu0 %6670
  %6672 = vrot.lane.b32.xlu0 %v6600, 127
  %v6673 = vpop.permute.xlu0 %6672
  %6674 = vrot.lane.b32.xlu0 %v6601, 127
  %v6675 = vpop.permute.xlu0 %6674
  %6676 = vrot.lane.b32.xlu0 %v6602, 127
  %v6677 = vpop.permute.xlu0 %6676
  %6678 = vrot.lane.b32.xlu0 %v6603, 127
  %v6679 = vpop.permute.xlu0 %6678
  %6680 = vrot.lane.b32.xlu0 %v6604, 127
  %v6681 = vpop.permute.xlu0 %6680
  %6682 = vrot.lane.b32.xlu0 %v6605, 127
  %v6683 = vpop.permute.xlu0 %6682
  %6684 = vrot.lane.b32.xlu0 %v6606, 127
  %v6685 = vpop.permute.xlu0 %6684
  %6686 = vrot.lane.b32.xlu0 %v6607, 127
  %v6687 = vpop.permute.xlu0 %6686
  %6688 = vrot.lane.b32.xlu0 %v6608, 127
  %v6689 = vpop.permute.xlu0 %6688
  %6690 = vrot.lane.b32.xlu0 %v6609, 127
  %v6691 = vpop.permute.xlu0 %6690
  %6692 = vrot.lane.b32.xlu0 %v6610, 127
  %v6693 = vpop.permute.xlu0 %6692
  %6694 = vrot.lane.b32.xlu0 %v6611, 127
  %v6695 = vpop.permute.xlu0 %6694
  %6696 = vrot.lane.b32.xlu0 %v6612, 127
  %v6697 = vpop.permute.xlu0 %6696
  %6698 = vrot.lane.b32.xlu0 %v6613, 127
  %v6699 = vpop.permute.xlu0 %6698
  %6700 = vrot.lane.b32.xlu0 %v6614, 127
  %v6701 = vpop.permute.xlu0 %6700
  %6702 = vrot.lane.b32.xlu0 %v6615, 127
  %v6703 = vpop.permute.xlu0 %6702
  %6704 = vrot.lane.b32.xlu0 %v6616, 127
  %v6705 = vpop.permute.xlu0 %6704
  %6706 = vrot.lane.b32.xlu0 %v6617, 127
  %v6707 = vpop.permute.xlu0 %6706
  %6708 = vrot.lane.b32.xlu0 %v6618, 127
  %v6709 = vpop.permute.xlu0 %6708
  %6710 = vrot.lane.b32.xlu0 %v6619, 127
  %v6711 = vpop.permute.xlu0 %6710
  %6712 = vrot.lane.b32.xlu0 %v6620, 127
  %v6713 = vpop.permute.xlu0 %6712
  %6714 = vrot.lane.b32.xlu0 %v6621, 127
  %v6715 = vpop.permute.xlu0 %6714
  %6716 = vrot.lane.b32.xlu0 %v6622, 127
  %v6717 = vpop.permute.xlu0 %6716
  %6718 = vrot.lane.b32.xlu0 %v6623, 127
  %v6719 = vpop.permute.xlu0 %6718
  %v6720 = vsel %vm1124, %v6657, %v6659
  %v6721 = vsel %vm1124, %v6659, %v6661
  %v6722 = vsel %vm1124, %v6661, %v6663
  %v6723 = vsel %vm1124, %v6663, %v6665
  %v6724 = vsel %vm1124, %v6665, %v6667
  %v6725 = vsel %vm1124, %v6667, %v6669
  %v6726 = vsel %vm1124, %v6669, %v6671
  %v6727 = vsel %vm1124, %v6671, %v6673
  %v6728 = vsel %vm1124, %v6673, %v6675
  %v6729 = vsel %vm1124, %v6675, %v6677
  %v6730 = vsel %vm1124, %v6677, %v6679
  %v6731 = vsel %vm1124, %v6679, %v6681
  %v6732 = vsel %vm1124, %v6681, %v6683
  %v6733 = vsel %vm1124, %v6683, %v6685
  %v6734 = vsel %vm1124, %v6685, %v6687
  %v6735 = vsel %vm1124, %v6689, %v6691
  %v6736 = vsel %vm1124, %v6691, %v6693
  %v6737 = vsel %vm1124, %v6693, %v6695
  %v6738 = vsel %vm1124, %v6695, %v6697
  %v6739 = vsel %vm1124, %v6697, %v6699
  %v6740 = vsel %vm1124, %v6699, %v6701
  %v6741 = vsel %vm1124, %v6701, %v6703
  %v6742 = vsel %vm1124, %v6703, %v6705
  %v6743 = vsel %vm1124, %v6705, %v6707
  %v6744 = vsel %vm1124, %v6707, %v6709
  %v6745 = vsel %vm1124, %v6709, %v6711
  %v6746 = vsel %vm1124, %v6711, %v6713
  %v6747 = vsel %vm1124, %v6713, %v6715
  %v6748 = vsel %vm1124, %v6715, %v6717
  %v6749 = vsel %vm1124, %v6717, %v6719
  %v6784 = vsel %vm1124, %v6687, %v6657
  %v6785 = vsel %vm1124, %v6719, %v6689
  %v6786 = vmax.f32 %v6592, %v6720
  %v6787 = vmax.f32 %v6593, %v6721
  %v6788 = vmax.f32 %v6594, %v6722
  %v6789 = vmax.f32 %v6595, %v6723
  %v6790 = vmax.f32 %v6596, %v6724
  %v6791 = vmax.f32 %v6597, %v6725
  %v6792 = vmax.f32 %v6598, %v6726
  %v6793 = vmax.f32 %v6599, %v6727
  %v6794 = vmax.f32 %v6600, %v6728
  %v6795 = vmax.f32 %v6601, %v6729
  %v6796 = vmax.f32 %v6602, %v6730
  %v6797 = vmax.f32 %v6603, %v6731
  %v6798 = vmax.f32 %v6604, %v6732
  %v6799 = vmax.f32 %v6605, %v6733
  %v6800 = vmax.f32 %v6606, %v6734
  %v6801 = vmax.f32 %v6607, %v6784
  %v6802 = vmax.f32 %v6608, %v6735
  %v6803 = vmax.f32 %v6609, %v6736
  %v6804 = vmax.f32 %v6610, %v6737
  %v6805 = vmax.f32 %v6611, %v6738
  %v6806 = vmax.f32 %v6612, %v6739
  %v6807 = vmax.f32 %v6613, %v6740
  %v6808 = vmax.f32 %v6614, %v6741
  %v6809 = vmax.f32 %v6615, %v6742
  %v6810 = vmax.f32 %v6616, %v6743
  %v6811 = vmax.f32 %v6617, %v6744
  %v6812 = vmax.f32 %v6618, %v6745
  %v6813 = vmax.f32 %v6619, %v6746
  %v6814 = vmax.f32 %v6620, %v6747
  %v6815 = vmax.f32 %v6621, %v6748
  %v6816 = vmax.f32 %v6622, %v6749
  %v6817 = vmax.f32 %v6623, %v6785
  %6850 = vrot.lane.b32.xlu0 %v6786, 126
  %v6851 = vpop.permute.xlu0 %6850
  %6852 = vrot.lane.b32.xlu0 %v6787, 126
  %v6853 = vpop.permute.xlu0 %6852
  %6854 = vrot.lane.b32.xlu0 %v6788, 126
  %v6855 = vpop.permute.xlu0 %6854
  %6856 = vrot.lane.b32.xlu0 %v6789, 126
  %v6857 = vpop.permute.xlu0 %6856
  %6858 = vrot.lane.b32.xlu0 %v6790, 126
  %v6859 = vpop.permute.xlu0 %6858
  %6860 = vrot.lane.b32.xlu0 %v6791, 126
  %v6861 = vpop.permute.xlu0 %6860
  %6862 = vrot.lane.b32.xlu0 %v6792, 126
  %v6863 = vpop.permute.xlu0 %6862
  %6864 = vrot.lane.b32.xlu0 %v6793, 126
  %v6865 = vpop.permute.xlu0 %6864
  %6866 = vrot.lane.b32.xlu0 %v6794, 126
  %v6867 = vpop.permute.xlu0 %6866
  %6868 = vrot.lane.b32.xlu0 %v6795, 126
  %v6869 = vpop.permute.xlu0 %6868
  %6870 = vrot.lane.b32.xlu0 %v6796, 126
  %v6871 = vpop.permute.xlu0 %6870
  %6872 = vrot.lane.b32.xlu0 %v6797, 126
  %v6873 = vpop.permute.xlu0 %6872
  %6874 = vrot.lane.b32.xlu0 %v6798, 126
  %v6875 = vpop.permute.xlu0 %6874
  %6876 = vrot.lane.b32.xlu0 %v6799, 126
  %v6877 = vpop.permute.xlu0 %6876
  %6878 = vrot.lane.b32.xlu0 %v6800, 126
  %v6879 = vpop.permute.xlu0 %6878
  %6880 = vrot.lane.b32.xlu0 %v6801, 126
  %v6881 = vpop.permute.xlu0 %6880
  %6882 = vrot.lane.b32.xlu0 %v6802, 126
  %v6883 = vpop.permute.xlu0 %6882
  %6884 = vrot.lane.b32.xlu0 %v6803, 126
  %v6885 = vpop.permute.xlu0 %6884
  %6886 = vrot.lane.b32.xlu0 %v6804, 126
  %v6887 = vpop.permute.xlu0 %6886
  %6888 = vrot.lane.b32.xlu0 %v6805, 126
  %v6889 = vpop.permute.xlu0 %6888
  %6890 = vrot.lane.b32.xlu0 %v6806, 126
  %v6891 = vpop.permute.xlu0 %6890
  %6892 = vrot.lane.b32.xlu0 %v6807, 126
  %v6893 = vpop.permute.xlu0 %6892
  %6894 = vrot.lane.b32.xlu0 %v6808, 126
  %v6895 = vpop.permute.xlu0 %6894
  %6896 = vrot.lane.b32.xlu0 %v6809, 126
  %v6897 = vpop.permute.xlu0 %6896
  %6898 = vrot.lane.b32.xlu0 %v6810, 126
  %v6899 = vpop.permute.xlu0 %6898
  %6900 = vrot.lane.b32.xlu0 %v6811, 126
  %v6901 = vpop.permute.xlu0 %6900
  %6902 = vrot.lane.b32.xlu0 %v6812, 126
  %v6903 = vpop.permute.xlu0 %6902
  %6904 = vrot.lane.b32.xlu0 %v6813, 126
  %v6905 = vpop.permute.xlu0 %6904
  %6906 = vrot.lane.b32.xlu0 %v6814, 126
  %v6907 = vpop.permute.xlu0 %6906
  %6908 = vrot.lane.b32.xlu0 %v6815, 126
  %v6909 = vpop.permute.xlu0 %6908
  %6910 = vrot.lane.b32.xlu0 %v6816, 126
  %v6911 = vpop.permute.xlu0 %6910
  %6912 = vrot.lane.b32.xlu0 %v6817, 126
  %v6913 = vpop.permute.xlu0 %6912
  %v6914 = vsel %vm1176, %v6851, %v6853
  %v6915 = vsel %vm1176, %v6853, %v6855
  %v6916 = vsel %vm1176, %v6855, %v6857
  %v6917 = vsel %vm1176, %v6857, %v6859
  %v6918 = vsel %vm1176, %v6859, %v6861
  %v6919 = vsel %vm1176, %v6861, %v6863
  %v6920 = vsel %vm1176, %v6863, %v6865
  %v6921 = vsel %vm1176, %v6865, %v6867
  %v6922 = vsel %vm1176, %v6867, %v6869
  %v6923 = vsel %vm1176, %v6869, %v6871
  %v6924 = vsel %vm1176, %v6871, %v6873
  %v6925 = vsel %vm1176, %v6873, %v6875
  %v6926 = vsel %vm1176, %v6875, %v6877
  %v6927 = vsel %vm1176, %v6877, %v6879
  %v6928 = vsel %vm1176, %v6879, %v6881
  %v6929 = vsel %vm1176, %v6883, %v6885
  %v6930 = vsel %vm1176, %v6885, %v6887
  %v6931 = vsel %vm1176, %v6887, %v6889
  %v6932 = vsel %vm1176, %v6889, %v6891
  %v6933 = vsel %vm1176, %v6891, %v6893
  %v6934 = vsel %vm1176, %v6893, %v6895
  %v6935 = vsel %vm1176, %v6895, %v6897
  %v6936 = vsel %vm1176, %v6897, %v6899
  %v6937 = vsel %vm1176, %v6899, %v6901
  %v6938 = vsel %vm1176, %v6901, %v6903
  %v6939 = vsel %vm1176, %v6903, %v6905
  %v6940 = vsel %vm1176, %v6905, %v6907
  %v6941 = vsel %vm1176, %v6907, %v6909
  %v6942 = vsel %vm1176, %v6909, %v6911
  %v6943 = vsel %vm1176, %v6911, %v6913
  %v6978 = vsel %vm1176, %v6881, %v6851
  %v6979 = vsel %vm1176, %v6913, %v6883
  %v6980 = vmax.f32 %v6786, %v6914
  %v6981 = vmax.f32 %v6787, %v6915
  %v6982 = vmax.f32 %v6788, %v6916
  %v6983 = vmax.f32 %v6789, %v6917
  %v6984 = vmax.f32 %v6790, %v6918
  %v6985 = vmax.f32 %v6791, %v6919
  %v6986 = vmax.f32 %v6792, %v6920
  %v6987 = vmax.f32 %v6793, %v6921
  %v6988 = vmax.f32 %v6794, %v6922
  %v6989 = vmax.f32 %v6795, %v6923
  %v6990 = vmax.f32 %v6796, %v6924
  %v6991 = vmax.f32 %v6797, %v6925
  %v6992 = vmax.f32 %v6798, %v6926
  %v6993 = vmax.f32 %v6799, %v6927
  %v6994 = vmax.f32 %v6800, %v6928
  %v6995 = vmax.f32 %v6801, %v6978
  %v6996 = vmax.f32 %v6802, %v6929
  %v6997 = vmax.f32 %v6803, %v6930
  %v6998 = vmax.f32 %v6804, %v6931
  %v6999 = vmax.f32 %v6805, %v6932
  %v7000 = vmax.f32 %v6806, %v6933
  %v7001 = vmax.f32 %v6807, %v6934
  %v7002 = vmax.f32 %v6808, %v6935
  %v7003 = vmax.f32 %v6809, %v6936
  %v7004 = vmax.f32 %v6810, %v6937
  %v7005 = vmax.f32 %v6811, %v6938
  %v7006 = vmax.f32 %v6812, %v6939
  %v7007 = vmax.f32 %v6813, %v6940
  %v7008 = vmax.f32 %v6814, %v6941
  %v7009 = vmax.f32 %v6815, %v6942
  %v7010 = vmax.f32 %v6816, %v6943
  %v7011 = vmax.f32 %v6817, %v6979
  %7044 = vrot.lane.b32.xlu0 %v6980, 124
  %v7045 = vpop.permute.xlu0 %7044
  %7046 = vrot.lane.b32.xlu0 %v6981, 124
  %v7047 = vpop.permute.xlu0 %7046
  %7048 = vrot.lane.b32.xlu0 %v6982, 124
  %v7049 = vpop.permute.xlu0 %7048
  %7050 = vrot.lane.b32.xlu0 %v6983, 124
  %v7051 = vpop.permute.xlu0 %7050
  %7052 = vrot.lane.b32.xlu0 %v6984, 124
  %v7053 = vpop.permute.xlu0 %7052
  %7054 = vrot.lane.b32.xlu0 %v6985, 124
  %v7055 = vpop.permute.xlu0 %7054
  %7056 = vrot.lane.b32.xlu0 %v6986, 124
  %v7057 = vpop.permute.xlu0 %7056
  %7058 = vrot.lane.b32.xlu0 %v6987, 124
  %v7059 = vpop.permute.xlu0 %7058
  %7060 = vrot.lane.b32.xlu0 %v6988, 124
  %v7061 = vpop.permute.xlu0 %7060
  %7062 = vrot.lane.b32.xlu0 %v6989, 124
  %v7063 = vpop.permute.xlu0 %7062
  %7064 = vrot.lane.b32.xlu0 %v6990, 124
  %v7065 = vpop.permute.xlu0 %7064
  %7066 = vrot.lane.b32.xlu0 %v6991, 124
  %v7067 = vpop.permute.xlu0 %7066
  %7068 = vrot.lane.b32.xlu0 %v6992, 124
  %v7069 = vpop.permute.xlu0 %7068
  %7070 = vrot.lane.b32.xlu0 %v6993, 124
  %v7071 = vpop.permute.xlu0 %7070
  %7072 = vrot.lane.b32.xlu0 %v6994, 124
  %v7073 = vpop.permute.xlu0 %7072
  %7074 = vrot.lane.b32.xlu0 %v6995, 124
  %v7075 = vpop.permute.xlu0 %7074
  %7076 = vrot.lane.b32.xlu0 %v6996, 124
  %v7077 = vpop.permute.xlu0 %7076
  %7078 = vrot.lane.b32.xlu0 %v6997, 124
  %v7079 = vpop.permute.xlu0 %7078
  %7080 = vrot.lane.b32.xlu0 %v6998, 124
  %v7081 = vpop.permute.xlu0 %7080
  %7082 = vrot.lane.b32.xlu0 %v6999, 124
  %v7083 = vpop.permute.xlu0 %7082
  %7084 = vrot.lane.b32.xlu0 %v7000, 124
  %v7085 = vpop.permute.xlu0 %7084
  %7086 = vrot.lane.b32.xlu0 %v7001, 124
  %v7087 = vpop.permute.xlu0 %7086
  %7088 = vrot.lane.b32.xlu0 %v7002, 124
  %v7089 = vpop.permute.xlu0 %7088
  %7090 = vrot.lane.b32.xlu0 %v7003, 124
  %v7091 = vpop.permute.xlu0 %7090
  %7092 = vrot.lane.b32.xlu0 %v7004, 124
  %v7093 = vpop.permute.xlu0 %7092
  %7094 = vrot.lane.b32.xlu0 %v7005, 124
  %v7095 = vpop.permute.xlu0 %7094
  %7096 = vrot.lane.b32.xlu0 %v7006, 124
  %v7097 = vpop.permute.xlu0 %7096
  %7098 = vrot.lane.b32.xlu0 %v7007, 124
  %v7099 = vpop.permute.xlu0 %7098
  %7100 = vrot.lane.b32.xlu0 %v7008, 124
  %v7101 = vpop.permute.xlu0 %7100
  %7102 = vrot.lane.b32.xlu0 %v7009, 124
  %v7103 = vpop.permute.xlu0 %7102
  %7104 = vrot.lane.b32.xlu0 %v7010, 124
  %v7105 = vpop.permute.xlu0 %7104
  %7106 = vrot.lane.b32.xlu0 %v7011, 124
  %v7107 = vpop.permute.xlu0 %7106
  %v7108 = vsel %vm2637, %v7045, %v7047
  %v7109 = vsel %vm2637, %v7047, %v7049
  %v7110 = vsel %vm2637, %v7049, %v7051
  %v7111 = vsel %vm2637, %v7051, %v7053
  %v7112 = vsel %vm2637, %v7053, %v7055
  %v7113 = vsel %vm2637, %v7055, %v7057
  %v7114 = vsel %vm2637, %v7057, %v7059
  %v7115 = vsel %vm2637, %v7059, %v7061
  %v7116 = vsel %vm2637, %v7061, %v7063
  %v7117 = vsel %vm2637, %v7063, %v7065
  %v7118 = vsel %vm2637, %v7065, %v7067
  %v7119 = vsel %vm2637, %v7067, %v7069
  %v7120 = vsel %vm2637, %v7069, %v7071
  %v7121 = vsel %vm2637, %v7071, %v7073
  %v7122 = vsel %vm2637, %v7073, %v7075
  %v7123 = vsel %vm2637, %v7077, %v7079
  %v7124 = vsel %vm2637, %v7079, %v7081
  %v7125 = vsel %vm2637, %v7081, %v7083
  %v7126 = vsel %vm2637, %v7083, %v7085
  %v7127 = vsel %vm2637, %v7085, %v7087
  %v7128 = vsel %vm2637, %v7087, %v7089
  %v7129 = vsel %vm2637, %v7089, %v7091
  %v7130 = vsel %vm2637, %v7091, %v7093
  %v7131 = vsel %vm2637, %v7093, %v7095
  %v7132 = vsel %vm2637, %v7095, %v7097
  %v7133 = vsel %vm2637, %v7097, %v7099
  %v7134 = vsel %vm2637, %v7099, %v7101
  %v7135 = vsel %vm2637, %v7101, %v7103
  %v7136 = vsel %vm2637, %v7103, %v7105
  %v7137 = vsel %vm2637, %v7105, %v7107
  %v7172 = vsel %vm2637, %v7075, %v7045
  %v7173 = vsel %vm2637, %v7107, %v7077
  %v7174 = vmax.f32 %v6980, %v7108
  %v7175 = vmax.f32 %v6981, %v7109
  %v7176 = vmax.f32 %v6982, %v7110
  %v7177 = vmax.f32 %v6983, %v7111
  %v7178 = vmax.f32 %v6984, %v7112
  %v7179 = vmax.f32 %v6985, %v7113
  %v7180 = vmax.f32 %v6986, %v7114
  %v7181 = vmax.f32 %v6987, %v7115
  %v7182 = vmax.f32 %v6988, %v7116
  %v7183 = vmax.f32 %v6989, %v7117
  %v7184 = vmax.f32 %v6990, %v7118
  %v7185 = vmax.f32 %v6991, %v7119
  %v7186 = vmax.f32 %v6992, %v7120
  %v7187 = vmax.f32 %v6993, %v7121
  %v7188 = vmax.f32 %v6994, %v7122
  %v7189 = vmax.f32 %v6995, %v7172
  %v7190 = vmax.f32 %v6996, %v7123
  %v7191 = vmax.f32 %v6997, %v7124
  %v7192 = vmax.f32 %v6998, %v7125
  %v7193 = vmax.f32 %v6999, %v7126
  %v7194 = vmax.f32 %v7000, %v7127
  %v7195 = vmax.f32 %v7001, %v7128
  %v7196 = vmax.f32 %v7002, %v7129
  %v7197 = vmax.f32 %v7003, %v7130
  %v7198 = vmax.f32 %v7004, %v7131
  %v7199 = vmax.f32 %v7005, %v7132
  %v7200 = vmax.f32 %v7006, %v7133
  %v7201 = vmax.f32 %v7007, %v7134
  %v7202 = vmax.f32 %v7008, %v7135
  %v7203 = vmax.f32 %v7009, %v7136
  %v7204 = vmax.f32 %v7010, %v7137
  %v7205 = vmax.f32 %v7011, %v7173
  %7206 = vst [vmem:[%s10] sm:$0xff] %v7174
  %7207 = vst [vmem:[%s10 + $0x8] sm:$0xff] %v7175
  %7208 = vst [vmem:[%s10 + $0x10] sm:$0xff] %v7176
  %7209 = vst [vmem:[%s10 + $0x18] sm:$0xff] %v7177
  %7210 = vst [vmem:[%s10 + $0x20] sm:$0xff] %v7178
  %7211 = vst [vmem:[%s10 + $0x28] sm:$0xff] %v7179
  %7212 = vst [vmem:[%s10 + $0x30] sm:$0xff] %v7180
  %7213 = vst [vmem:[%s10 + $0x38] sm:$0xff] %v7181
  %7214 = vst [vmem:[%s10 + $0x40] sm:$0xff] %v7182
  %7215 = vst [vmem:[%s10 + $0x48] sm:$0xff] %v7183
  %7216 = vst [vmem:[%s10 + $0x50] sm:$0xff] %v7184
  %7217 = vst [vmem:[%s10 + $0x58] sm:$0xff] %v7185
  %7218 = vst [vmem:[%s10 + $0x60] sm:$0xff] %v7186
  %7219 = vst [vmem:[%s10 + $0x68] sm:$0xff] %v7187
  %7220 = vst [vmem:[%s10 + $0x70] sm:$0xff] %v7188
  %7221 = vst [vmem:[%s10 + $0x78] sm:$0xff] %v7189
  %7222 = vst [vmem:[%s10 + $0x80] sm:$0xff] %v7190
  %7223 = vst [vmem:[%s10 + $0x88] sm:$0xff] %v7191
  %7224 = vst [vmem:[%s10 + $0x90] sm:$0xff] %v7192
  %7225 = vst [vmem:[%s10 + $0x98] sm:$0xff] %v7193
  %7226 = vst [vmem:[%s10 + $0xa0] sm:$0xff] %v7194
  %7227 = vst [vmem:[%s10 + $0xa8] sm:$0xff] %v7195
  %7228 = vst [vmem:[%s10 + $0xb0] sm:$0xff] %v7196
  %7229 = vst [vmem:[%s10 + $0xb8] sm:$0xff] %v7197
  %7230 = vst [vmem:[%s10 + $0xc0] sm:$0xff] %v7198
  %7231 = vst [vmem:[%s10 + $0xc8] sm:$0xff] %v7199
  %7232 = vst [vmem:[%s10 + $0xd0] sm:$0xff] %v7200
  %7233 = vst [vmem:[%s10 + $0xd8] sm:$0xff] %v7201
  %7234 = vst [vmem:[%s10 + $0xe0] sm:$0xff] %v7202
  %7235 = vst [vmem:[%s10 + $0xe8] sm:$0xff] %v7203
  %7236 = vst [vmem:[%s10 + $0xf0] sm:$0xff] %v7204
  %7237 = vst [vmem:[%s10 + $0xf8] sm:$0xff] %v7205
  // Predicated region
  $region42: #{conv_k_region_forward.1} parent=0 // pred_check
    _
  $region43: #{conv_k_region_forward.1} parent=0 // pred_check_branch
    %7239 = sbr.rel (0) target = $region45
  $region44: #{conv_k_region_forward.1} parent=0 // pred_region
    _
  $region45: #{conv_k_region_forward.1} parent=0 // pred_fallthru
    _
  // Predicated region
  $region46: #{conv_k_region_forward.1} parent=0 // pred_check
    _
  $region47: #{conv_k_region_forward.1} parent=0 // pred_check_branch
    %7241 = sbr.rel (0) target = $region49
  $region48: #{conv_k_region_forward.1} parent=0 // pred_region
    _
  $region49: #{conv_k_region_forward.1} parent=0 // pred_fallthru
    _

</llo_original>
